<compile_context>
chip_gen: v6e
topology: v6e:2x2x1
jax: 0.10.0
libtpu: 0.0.40
codegen_flags: <defaults>
</compile_context>

<pallas_src>
import math

import jax
import jax.numpy as jnp
from jax.experimental import pallas as pl
from jax.experimental.pallas import tpu as pltpu

# --------------------------------------------------------------------------
# Hyper-parameters mirroring ParamModel defaults (scale_output='abm-covid')
# --------------------------------------------------------------------------
RNN_OUT = 40                 # EmbedAttenSeq default rnn_out
GRU_HIDDEN = RNN_OUT // 2    # bidirectional=True -> 20 per direction
HIDDEN_DIM = 50              # ParamModel hidden_dim (emb_model dim_out)
OUT_DIM = 3                  # len(MIN_VAL_PARAMS['abm-covid'])
MIN_VALS = jnp.array([1.0, 0.001, 0.01], dtype=jnp.float32)
MAX_VALS = jnp.array([8.0, 0.02, 1.0], dtype=jnp.float32)

_VMEM = pltpu.MemorySpace.VMEM


def _vmem_specs(n):
    return [pl.BlockSpec(memory_space=_VMEM) for _ in range(n)]


# --------------------------------------------------------------------------
# Single fused kernel: 2x bidirectional GRU -> attention+sum -> MLP head
# --------------------------------------------------------------------------
def fused_param_model_kernel(
        seq_ref, meta_ref, fwd_ref, rev_ref, abias_ref, sel_ref,
        wih0_ref, bih0_ref, whh0_ref, bhhn0_ref,
        wih1_ref, bih1_ref, whh1_ref, bhhn1_ref,
        wvqk_ref, bvqk_ref,
        wox_ref, wom_ref, bo_ref, w1_ref, b1_ref, wm_ref, bm_ref,
        minv_ref, maxv_ref,
        out_ref,
        h1_sc, h2_sc):
    TB = seq_ref.shape[0]
    B = meta_ref.shape[0]
    T = TB // B
    H = GRU_HIDDEN
    R = 2 * H                                # bidirectional feature width (=RNN_OUT)

    # 1.0 on "forward-direction" lanes of the packed gate layout [r_f r_b z_f z_b n_f n_b]
    fwd = jnp.broadcast_to(fwd_ref[...], (TB, 6 * H))
    rev = rev_ref[...]                       # (T*B, T*B) time-reverse permutation

    def bidir_gru_layer(x_flat, wih_ref_, bih_ref_, whh_ref_, bhhn_ref_, out_sc):
        wih, bih, whh = wih_ref_[...], bih_ref_[...], whh_ref_[...]
        # Hoisted input projection: ONE matmul for all timesteps and BOTH directions.
        # bih already contains b_ih for all gates plus b_hh for the r/z gates (folded at pack
        # time), so no per-step bias add is needed for those gates.
        gi = jnp.dot(x_flat, wih, preferred_element_type=jnp.float32) + bih     # (T*B, 6H)
        gi_rev = jnp.dot(rev, gi, preferred_element_type=jnp.float32)           # rows time-reversed
        # Forward-direction lanes take gi (time t), backward lanes take gi_rev (time T-1-t).
        # Done once over (T*B, 6H) instead of per recurrence step.
        gsel = gi_rev + fwd * (gi - gi_rev)
        bhhn = jnp.broadcast_to(bhhn_ref_[...], (B, R))   # n-gate b_hh, broadcast hoisted
        hc = jnp.zeros((B, R), dtype=jnp.float32)         # [h_fwd | h_bwd]
        for t in range(T):                                 # fully unrolled (T static)
            # single recurrent matmul for both directions (block-diagonal W_hh)
            gh = jnp.dot(hc, whh, preferred_element_type=jnp.float32)           # (B, 6H)
            g = gsel[t * B:(t + 1) * B, :]
            # torch.nn.GRU gate math (gate order r, z, n), both directions at once
            r = jax.nn.sigmoid(g[:, 0:R] + gh[:, 0:R])
            z = jax.nn.sigmoid(g[:, R:2 * R] + gh[:, R:2 * R])
            n = jnp.tanh(g[:, 2 * R:3 * R] + r * (gh[:, 2 * R:3 * R] + bhhn))
            hc = (1.0 - z) * n + z * hc
            # lane-dense (T*B, 2H) output kept in VMEM, torch concat order [fwd, bwd]
            out_sc[t * B:(t + 1) * B, 0:H] = hc[:, 0:H]                          # fwd state @ t
            out_sc[(T - 1 - t) * B:(T - t) * B, H:R] = hc[:, H:R]                # bwd state @ T-1-t

    # ---- two bidirectional GRU layers (intermediates never leave VMEM) ----
    bidir_gru_layer(seq_ref[...], wih0_ref, bih0_ref, whh0_ref, bhhn0_ref, h1_sc)
    bidir_gru_layer(h1_sc[...], wih1_ref, bih1_ref, whh1_ref, bhhn1_ref, h2_sc)

    # ---- TransformerAttn + sum over time, all batches at once via block-diag masking ----
    proj = jnp.dot(h2_sc[...], wvqk_ref[...],
                   preferred_element_type=jnp.float32) + bvqk_ref[...]          # (T*B, 3R)
    v, q, k = proj[:, 0:R], proj[:, R:2 * R], proj[:, 2 * R:3 * R]
    logits = jnp.dot(v, q.T, preferred_element_type=jnp.float32) * (1.0 / math.sqrt(R))
    logits = logits + abias_ref[...]                     # -1e30 on cross-batch pairs
    logits = logits - jnp.max(logits, axis=-1, keepdims=True)
    w = jnp.exp(logits)
    w = w * pl.reciprocal(jnp.sum(w, axis=-1, keepdims=True), approx=True)      # EUP slot
    # fold the per-batch sum over time into the weight matrix BEFORE the value matmul:
    # sum_t softmax(...) @ K  ==  (sel @ W) @ K
    wsum = jnp.dot(sel_ref[...], w, preferred_element_type=jnp.float32)         # (B, T*B)
    latent = jnp.dot(wsum, k, preferred_element_type=jnp.float32)               # (B, R)

    # ---- head: out_layer (Tanh) -> layer1 (ReLU) -> meanfc -> bounded sigmoid ----
    x_emb = jnp.tanh(jnp.dot(latent, wox_ref[...], preferred_element_type=jnp.float32)
                     + jnp.dot(meta_ref[...], wom_ref[...], preferred_element_type=jnp.float32)
                     + bo_ref[...])                                             # (B, HIDDEN_DIM)
    ro = jnp.maximum(jnp.dot(x_emb, w1_ref[...], preferred_element_type=jnp.float32)
                     + b1_ref[...], 0.0)                                        # (B, 20)
    o = jnp.dot(ro, wm_ref[...], preferred_element_type=jnp.float32) + bm_ref[...]
    minv, maxv = minv_ref[...], maxv_ref[...]
    out_ref[...] = minv + (maxv - minv) * jax.nn.sigmoid(o)


# --------------------------------------------------------------------------
# Wrapper: pack inputs, build masks, launch the fused kernel
# --------------------------------------------------------------------------
@jax.jit
def param_model_forward(params, x, meta):
    x = x.astype(jnp.float32)
    meta = meta.astype(jnp.float32)
    B, T, D = x.shape
    H, R = GRU_HIDDEN, RNN_OUT

    # ParamModel does x.transpose(1, 0); flatten time-major so the kernel only ever
    # needs contiguous static 2-D slices (row = t*B + b).
    seq_flat = jnp.transpose(x, (1, 0, 2)).reshape(T * B, D)

    # forward/backward lane-select mask for the packed gate layout [r_f r_b z_f z_b n_f n_b]
    lane = jnp.arange(6 * H)
    fwd_mask = (((lane // H) % 2) == 0).astype(jnp.float32).reshape(1, 6 * H)

    # time-reverse permutation over the flattened (t, b) row ordering
    row = jnp.arange(T * B)
    t_idx, b_idx = row // B, row % B
    rev_col = (T - 1 - t_idx) * B + b_idx
    rev = (rev_col[:, None] == row[None, :]).astype(jnp.float32)                # (T*B, T*B)

    # block-diagonal attention bias (keeps the per-sample softmax inside one (T*B,T*B) matrix)
    # and the per-batch time-sum selector.
    row_b = row % B
    attn_bias = jnp.where(row_b[:, None] == row_b[None, :], 0.0, -1e30).astype(jnp.float32)
    sel = (row_b[None, :] == jnp.arange(B)[:, None]).astype(jnp.float32)        # (B, T*B)

    inputs = (seq_flat, meta, fwd_mask, rev, attn_bias, sel,
              *params['gru0'], *params['gru1'], *params['attn'], *params['head'])

    return pl.pallas_call(
        fused_param_model_kernel,
        out_shape=jax.ShapeDtypeStruct((B, OUT_DIM), jnp.float32),
        in_specs=_vmem_specs(len(inputs)),
        out_specs=pl.BlockSpec(memory_space=_VMEM),
        scratch_shapes=[
            pltpu.VMEM((T * B, R), jnp.float32),   # GRU layer-0 output, lane-dense [fwd|bwd]
            pltpu.VMEM((T * B, R), jnp.float32),   # GRU layer-1 output
        ],
    )(*inputs)


# --------------------------------------------------------------------------
# Deterministic parameter construction (torch-shaped) + repacking for the kernel
# --------------------------------------------------------------------------
def init_raw_params(key, x_dim, meta_dim):
    keys = iter(jax.random.split(key, 64))

    def rnd(shape, scale=0.1):
        return (scale * jax.random.normal(next(keys), shape)).astype(jnp.float32)

    H, R = GRU_HIDDEN, RNN_OUT

    def gru_dir(in_dim):
        # torch.nn.GRU per-direction shapes, gate order (r, z, n)
        return dict(w_ih=rnd((3 * H, in_dim)), w_hh=rnd((3 * H, H)),
                    b_ih=rnd((3 * H,)), b_hh=rnd((3 * H,)))

    return {
        'gru': [dict(f=gru_dir(x_dim), b=gru_dir(x_dim)),
                dict(f=gru_dir(R), b=gru_dir(R))],
        'attn': dict(v=(rnd((R, R)), rnd((R,))),
                     q=(rnd((R, R)), rnd((R,))),
                     k=(rnd((R, R)), rnd((R,)))),
        'out_layer': (rnd((HIDDEN_DIM, R + meta_dim)), rnd((HIDDEN_DIM,))),
        'layer1': (rnd((20, HIDDEN_DIM)), rnd((20,))),
        # CUSTOM_INIT: meanfc.bias = 1.0 (broadcast to all outputs)
        'meanfc': (rnd((OUT_DIM, 20)), jnp.full((OUT_DIM,), 1.0, jnp.float32)),
    }


def pack_params(raw):
    H, R = GRU_HIDDEN, RNN_OUT
    G = 6 * H

    def pack_gru_layer(pf, pb):
        def gate(w, g):                      # gate block g of a (3H, *) torch weight
            return w[g * H:(g + 1) * H, :]

        def seg(b, g):                       # gate segment g of a (3H,) torch bias
            return b[g * H:(g + 1) * H]

        # input weights, lane layout [r_f r_b z_f z_b n_f n_b], pre-transposed
        wih = jnp.concatenate(
            [gate(pf['w_ih'], 0).T, gate(pb['w_ih'], 0).T,
             gate(pf['w_ih'], 1).T, gate(pb['w_ih'], 1).T,
             gate(pf['w_ih'], 2).T, gate(pb['w_ih'], 2).T], axis=1)              # (Din, 6H)

        # bias: r/z lanes get b_ih + b_hh folded (both are outside the r* term in torch GRU);
        # n lanes get b_ih only.  The n-gate b_hh stays separate (used inside r * (...)).
        bih = jnp.concatenate(
            [seg(pf['b_ih'], 0) + seg(pf['b_hh'], 0), seg(pb['b_ih'], 0) + seg(pb['b_hh'], 0),
             seg(pf['b_ih'], 1) + seg(pf['b_hh'], 1), seg(pb['b_ih'], 1) + seg(pb['b_hh'], 1),
             seg(pf['b_ih'], 2), seg(pb['b_ih'], 2)]).reshape(1, G)
        bhhn = jnp.concatenate([seg(pf['b_hh'], 2), seg(pb['b_hh'], 2)]).reshape(1, R)

        # block-diagonal recurrent weights: rows 0:H act on h_fwd, rows H:2H on h_bwd
        whh = jnp.zeros((R, G), jnp.float32)
        for g in range(3):
            whh = whh.at[0:H, (2 * g) * H:(2 * g + 1) * H].set(gate(pf['w_hh'], g).T)
            whh = whh.at[H:2 * H, (2 * g + 1) * H:(2 * g + 2) * H].set(gate(pb['w_hh'], g).T)
        return (wih, bih, whh, bhhn)

    wv, bv = raw['attn']['v']
    wq, bq = raw['attn']['q']
    wk, bk = raw['attn']['k']
    wvqk = jnp.concatenate([wv.T, wq.T, wk.T], axis=1)           # (R, 3R)
    bvqk = jnp.concatenate([bv, bq, bk]).reshape(1, 3 * R)

    w_out, b_out = raw['out_layer']
    w1, b1 = raw['layer1']
    wm, bm = raw['meanfc']
    head = (w_out[:, :R].T, w_out[:, R:].T, b_out.reshape(1, HIDDEN_DIM),
            w1.T, b1.reshape(1, 20), wm.T, bm.reshape(1, OUT_DIM),
            MIN_VALS.reshape(1, OUT_DIM), MAX_VALS.reshape(1, OUT_DIM))

    return {'gru0': pack_gru_layer(raw['gru'][0]['f'], raw['gru'][0]['b']),
            'gru1': pack_gru_layer(raw['gru'][1]['f'], raw['gru'][1]['b']),
            'attn': (wvqk, bvqk),
            'head': head}


# --------------------------------------------------------------------------
# Pure-JAX reference with PyTorch semantics (validation only)
# --------------------------------------------------------------------------
def reference_forward(raw, x, meta):
    H, R = GRU_HIDDEN, RNN_OUT
    with jax.default_matmul_precision("float32"):
        seq = jnp.transpose(x.astype(jnp.float32), (1, 0, 2))    # (T, B, D)
        T, B, _ = seq.shape

        def run_dir(s, p, reverse):
            h = jnp.zeros((B, H), jnp.float32)
            outs = [None] * T
            order = range(T - 1, -1, -1) if reverse else range(T)
            for t in order:
                gi = s[t] @ p['w_ih'].T + p['b_ih']
                gh = h @ p['w_hh'].T + p['b_hh']
                r = jax.nn.sigmoid(gi[:, 0:H] + gh[:, 0:H])
                z = jax.nn.sigmoid(gi[:, H:2 * H] + gh[:, H:2 * H])
                n = jnp.tanh(gi[:, 2 * H:3 * H] + r * gh[:, 2 * H:3 * H])
                h = (1.0 - z) * n + z * h
                outs[t] = h
            return jnp.stack(outs, axis=0)

        h = seq
        for layer in range(2):
            of = run_dir(h, raw['gru'][layer]['f'], reverse=False)
            ob = run_dir(h, raw['gru'][layer]['b'], reverse=True)
            h = jnp.concatenate([of, ob], axis=-1)               # (T, B, 2H)

        wv, bv = raw['attn']['v']
        wq, bq = raw['attn']['q']
        wk, bk = raw['attn']['k']
        s = jnp.transpose(h, (1, 0, 2))                          # (B, T, R)
        value = s @ wv.T + bv
        query = s @ wq.T + bq
        keys = s @ wk.T + bk
        wts = jax.nn.softmax(jnp.einsum('btr,bsr->bts', value, query) / math.sqrt(R), axis=-1)
        latent = jnp.einsum('bts,bsr->btr', wts, keys).sum(axis=1)   # (B, R)

        w_out, b_out = raw['out_layer']
        x_emb = jnp.tanh(jnp.concatenate([latent, meta.astype(jnp.float32)], axis=1)
                         @ w_out.T + b_out)
        w1, b1 = raw['layer1']
        ro = jax.nn.relu(x_emb @ w1.T + b1)
        wm, bm = raw['meanfc']
        o = ro @ wm.T + bm
        return MIN_VALS + (MAX_VALS - MIN_VALS) * jax.nn.sigmoid(o)


# --------------------------------------------------------------------------
if __name__ == "__main__":
    B, T, D, M = 2, 8, 4, 4   # batch, seq_len, X_train_dim, metas_train_dim
    key = jax.random.PRNGKey(0)
    kx, km, kp = jax.random.split(key, 3)
    x = jax.random.normal(kx, (B, T, D), dtype=jnp.float32)
    meta = jax.random.normal(km, (B, M), dtype=jnp.float32)

    raw = init_raw_params(kp, D, M)
    params = pack_params(raw)

    out = param_model_forward(params, x, meta)
    out = jax.block_until_ready(out)

    assert out.shape == (B, OUT_DIM)
    assert bool(jnp.all(jnp.isfinite(out)))
    lo, hi = MIN_VALS.reshape(1, -1), MAX_VALS.reshape(1, -1)
    assert bool(jnp.all((out >= lo) & (out <= hi)))

    ref = reference_forward(raw, x, meta)
    assert bool(jnp.allclose(out, ref, rtol=2e-3, atol=2e-3)), (out, ref)

    print("KERNEL_OK")
</pallas_src>

<mosaic_0001>
module attributes {stable_mosaic.version = 11 : i64} {
  func.func @fused_param_model_kernel(%arg0: memref<16x4xf32, #tpu.memory_space<vmem>>, %arg1: memref<2x4xf32, #tpu.memory_space<vmem>>, %arg2: memref<1x120xf32, #tpu.memory_space<vmem>>, %arg3: memref<16x16xf32, #tpu.memory_space<vmem>>, %arg4: memref<16x16xf32, #tpu.memory_space<vmem>>, %arg5: memref<2x16xf32, #tpu.memory_space<vmem>>, %arg6: memref<4x120xf32, #tpu.memory_space<vmem>>, %arg7: memref<1x120xf32, #tpu.memory_space<vmem>>, %arg8: memref<40x120xf32, #tpu.memory_space<vmem>>, %arg9: memref<1x40xf32, #tpu.memory_space<vmem>>, %arg10: memref<40x120xf32, #tpu.memory_space<vmem>>, %arg11: memref<1x120xf32, #tpu.memory_space<vmem>>, %arg12: memref<40x120xf32, #tpu.memory_space<vmem>>, %arg13: memref<1x40xf32, #tpu.memory_space<vmem>>, %arg14: memref<40x120xf32, #tpu.memory_space<vmem>>, %arg15: memref<1x120xf32, #tpu.memory_space<vmem>>, %arg16: memref<40x50xf32, #tpu.memory_space<vmem>>, %arg17: memref<4x50xf32, #tpu.memory_space<vmem>>, %arg18: memref<1x50xf32, #tpu.memory_space<vmem>>, %arg19: memref<50x20xf32, #tpu.memory_space<vmem>>, %arg20: memref<1x20xf32, #tpu.memory_space<vmem>>, %arg21: memref<20x3xf32, #tpu.memory_space<vmem>>, %arg22: memref<1x3xf32, #tpu.memory_space<vmem>>, %arg23: memref<1x3xf32, #tpu.memory_space<vmem>>, %arg24: memref<1x3xf32, #tpu.memory_space<vmem>>, %arg25: memref<2x3xf32, #tpu.memory_space<vmem>>, %arg26: memref<16x40xf32, #tpu.memory_space<vmem>>, %arg27: memref<16x40xf32, #tpu.memory_space<vmem>>) attributes {dimension_semantics = [], scalar_prefetch = 0 : i64, scratch_operands = 2 : i64, tpu.core_type = #tpu.core_type<tc>} {
    %c0 = arith.constant 0 : index
    %c0_0 = arith.constant 0 : index
    %0 = vector.load %arg2[%c0, %c0_0] : memref<1x120xf32, #tpu.memory_space<vmem>>, vector<1x120xf32>
    %1 = vector.shape_cast %0 : vector<1x120xf32> to vector<1x120xf32>
    %2 = vector.broadcast %1 : vector<1x120xf32> to vector<16x120xf32>
    %c0_1 = arith.constant 0 : index
    %c0_2 = arith.constant 0 : index
    %3 = vector.load %arg3[%c0_1, %c0_2] : memref<16x16xf32, #tpu.memory_space<vmem>>, vector<16x16xf32>
    %c0_3 = arith.constant 0 : index
    %c0_4 = arith.constant 0 : index
    %4 = vector.load %arg0[%c0_3, %c0_4] : memref<16x4xf32, #tpu.memory_space<vmem>>, vector<16x4xf32>
    %c0_5 = arith.constant 0 : index
    %c0_6 = arith.constant 0 : index
    %5 = vector.load %arg6[%c0_5, %c0_6] : memref<4x120xf32, #tpu.memory_space<vmem>>, vector<4x120xf32>
    %c0_7 = arith.constant 0 : index
    %c0_8 = arith.constant 0 : index
    %6 = vector.load %arg7[%c0_7, %c0_8] : memref<1x120xf32, #tpu.memory_space<vmem>>, vector<1x120xf32>
    %c0_9 = arith.constant 0 : index
    %c0_10 = arith.constant 0 : index
    %7 = vector.load %arg8[%c0_9, %c0_10] : memref<40x120xf32, #tpu.memory_space<vmem>>, vector<40x120xf32>
    %cst = arith.constant dense<0.000000e+00> : vector<16x120xf32>
    %8 = tpu.matmul %4, %5, %cst {dimension_numbers = #tpu.dot_dimension_numbers<[1], [0], [0], [1], [0, 0, 1, 1], [], []>} : vector<16x4xf32>, vector<4x120xf32>, vector<16x120xf32> -> vector<16x120xf32>
    %9 = vector.broadcast %6 : vector<1x120xf32> to vector<16x120xf32>
    %10 = arith.addf %8, %9 : vector<16x120xf32>
    %cst_11 = arith.constant dense<0.000000e+00> : vector<16x120xf32>
    %11 = tpu.matmul %3, %10, %cst_11 {dimension_numbers = #tpu.dot_dimension_numbers<[1], [0], [0], [1], [0, 0, 1, 1], [], []>} : vector<16x16xf32>, vector<16x120xf32>, vector<16x120xf32> -> vector<16x120xf32>
    %12 = arith.subf %10, %11 : vector<16x120xf32>
    %13 = arith.mulf %2, %12 : vector<16x120xf32>
    %14 = arith.addf %11, %13 : vector<16x120xf32>
    %c0_12 = arith.constant 0 : index
    %c0_13 = arith.constant 0 : index
    %15 = vector.load %arg9[%c0_12, %c0_13] : memref<1x40xf32, #tpu.memory_space<vmem>>, vector<1x40xf32>
    %16 = vector.shape_cast %15 : vector<1x40xf32> to vector<1x40xf32>
    %17 = vector.broadcast %16 : vector<1x40xf32> to vector<2x40xf32>
    %cst_14 = arith.constant 0.000000e+00 : f32
    %18 = vector.broadcast %cst_14 : f32 to vector<2x40xf32>
    %cst_15 = arith.constant dense<0.000000e+00> : vector<2x120xf32>
    %19 = tpu.matmul %18, %7, %cst_15 {dimension_numbers = #tpu.dot_dimension_numbers<[1], [0], [0], [1], [0, 0, 1, 1], [], []>} : vector<2x40xf32>, vector<40x120xf32>, vector<2x120xf32> -> vector<2x120xf32>
    %20 = vector.extract_strided_slice %14 {offsets = [0, 0], sizes = [2, 120], strides = [1, 1]} : vector<16x120xf32> to vector<2x120xf32>
    %21 = vector.extract_strided_slice %20 {offsets = [0, 0], sizes = [2, 40], strides = [1, 1]} : vector<2x120xf32> to vector<2x40xf32>
    %22 = vector.extract_strided_slice %19 {offsets = [0, 0], sizes = [2, 40], strides = [1, 1]} : vector<2x120xf32> to vector<2x40xf32>
    %23 = arith.addf %21, %22 : vector<2x40xf32>
    %24 = arith.negf %23 : vector<2x40xf32>
    %25 = math.exp %24 : vector<2x40xf32>
    %cst_16 = arith.constant 1.000000e+00 : f32
    %26 = vector.broadcast %cst_16 : f32 to vector<2x40xf32>
    %27 = arith.addf %26, %25 : vector<2x40xf32>
    %28 = arith.divf %26, %27 : vector<2x40xf32>
    %29 = vector.extract_strided_slice %20 {offsets = [0, 40], sizes = [2, 40], strides = [1, 1]} : vector<2x120xf32> to vector<2x40xf32>
    %30 = vector.extract_strided_slice %19 {offsets = [0, 40], sizes = [2, 40], strides = [1, 1]} : vector<2x120xf32> to vector<2x40xf32>
    %31 = arith.addf %29, %30 : vector<2x40xf32>
    %32 = arith.negf %31 : vector<2x40xf32>
    %33 = math.exp %32 : vector<2x40xf32>
    %cst_17 = arith.constant 1.000000e+00 : f32
    %34 = vector.broadcast %cst_17 : f32 to vector<2x40xf32>
    %35 = arith.addf %34, %33 : vector<2x40xf32>
    %36 = arith.divf %34, %35 : vector<2x40xf32>
    %37 = vector.extract_strided_slice %20 {offsets = [0, 80], sizes = [2, 40], strides = [1, 1]} : vector<2x120xf32> to vector<2x40xf32>
    %38 = vector.extract_strided_slice %19 {offsets = [0, 80], sizes = [2, 40], strides = [1, 1]} : vector<2x120xf32> to vector<2x40xf32>
    %39 = arith.addf %38, %17 : vector<2x40xf32>
    %40 = arith.mulf %28, %39 : vector<2x40xf32>
    %41 = arith.addf %37, %40 : vector<2x40xf32>
    %42 = math.tanh %41 : vector<2x40xf32>
    %cst_18 = arith.constant 1.000000e+00 : f32
    %43 = vector.broadcast %cst_18 : f32 to vector<2x40xf32>
    %44 = arith.subf %43, %36 : vector<2x40xf32>
    %45 = arith.mulf %44, %42 : vector<2x40xf32>
    %46 = arith.mulf %36, %18 : vector<2x40xf32>
    %47 = arith.addf %45, %46 : vector<2x40xf32>
    %48 = vector.extract_strided_slice %47 {offsets = [0, 0], sizes = [2, 20], strides = [1, 1]} : vector<2x40xf32> to vector<2x20xf32>
    %c0_19 = arith.constant 0 : index
    %c0_20 = arith.constant 0 : index
    %49 = vector.load %arg26[%c0_19, %c0_20] : memref<16x40xf32, #tpu.memory_space<vmem>>, vector<2x20xf32>
    tpu.vector_store %arg26[%c0_19, %c0_20], %48 {strides = array<i32>} : memref<16x40xf32, #tpu.memory_space<vmem>>, vector<2x20xf32>,
    %50 = vector.extract_strided_slice %47 {offsets = [0, 20], sizes = [2, 20], strides = [1, 1]} : vector<2x40xf32> to vector<2x20xf32>
    %c14 = arith.constant 14 : index
    %c20 = arith.constant 20 : index
    %51 = vector.load %arg26[%c14, %c20] : memref<16x40xf32, #tpu.memory_space<vmem>>, vector<2x20xf32>
    tpu.vector_store %arg26[%c14, %c20], %50 {strides = array<i32>} : memref<16x40xf32, #tpu.memory_space<vmem>>, vector<2x20xf32>,
    %cst_21 = arith.constant dense<0.000000e+00> : vector<2x120xf32>
    %52 = tpu.matmul %47, %7, %cst_21 {dimension_numbers = #tpu.dot_dimension_numbers<[1], [0], [0], [1], [0, 0, 1, 1], [], []>} : vector<2x40xf32>, vector<40x120xf32>, vector<2x120xf32> -> vector<2x120xf32>
    %53 = vector.extract_strided_slice %14 {offsets = [2, 0], sizes = [2, 120], strides = [1, 1]} : vector<16x120xf32> to vector<2x120xf32>
    %54 = vector.extract_strided_slice %53 {offsets = [0, 0], sizes = [2, 40], strides = [1, 1]} : vector<2x120xf32> to vector<2x40xf32>
    %55 = vector.extract_strided_slice %52 {offsets = [0, 0], sizes = [2, 40], strides = [1, 1]} : vector<2x120xf32> to vector<2x40xf32>
    %56 = arith.addf %54, %55 : vector<2x40xf32>
    %57 = arith.negf %56 : vector<2x40xf32>
    %58 = math.exp %57 : vector<2x40xf32>
    %cst_22 = arith.constant 1.000000e+00 : f32
    %59 = vector.broadcast %cst_22 : f32 to vector<2x40xf32>
    %60 = arith.addf %59, %58 : vector<2x40xf32>
    %61 = arith.divf %59, %60 : vector<2x40xf32>
    %62 = vector.extract_strided_slice %53 {offsets = [0, 40], sizes = [2, 40], strides = [1, 1]} : vector<2x120xf32> to vector<2x40xf32>
    %63 = vector.extract_strided_slice %52 {offsets = [0, 40], sizes = [2, 40], strides = [1, 1]} : vector<2x120xf32> to vector<2x40xf32>
    %64 = arith.addf %62, %63 : vector<2x40xf32>
    %65 = arith.negf %64 : vector<2x40xf32>
    %66 = math.exp %65 : vector<2x40xf32>
    %cst_23 = arith.constant 1.000000e+00 : f32
    %67 = vector.broadcast %cst_23 : f32 to vector<2x40xf32>
    %68 = arith.addf %67, %66 : vector<2x40xf32>
    %69 = arith.divf %67, %68 : vector<2x40xf32>
    %70 = vector.extract_strided_slice %53 {offsets = [0, 80], sizes = [2, 40], strides = [1, 1]} : vector<2x120xf32> to vector<2x40xf32>
    %71 = vector.extract_strided_slice %52 {offsets = [0, 80], sizes = [2, 40], strides = [1, 1]} : vector<2x120xf32> to vector<2x40xf32>
    %72 = arith.addf %71, %17 : vector<2x40xf32>
    %73 = arith.mulf %61, %72 : vector<2x40xf32>
    %74 = arith.addf %70, %73 : vector<2x40xf32>
    %75 = math.tanh %74 : vector<2x40xf32>
    %cst_24 = arith.constant 1.000000e+00 : f32
    %76 = vector.broadcast %cst_24 : f32 to vector<2x40xf32>
    %77 = arith.subf %76, %69 : vector<2x40xf32>
    %78 = arith.mulf %77, %75 : vector<2x40xf32>
    %79 = arith.mulf %69, %47 : vector<2x40xf32>
    %80 = arith.addf %78, %79 : vector<2x40xf32>
    %81 = vector.extract_strided_slice %80 {offsets = [0, 0], sizes = [2, 20], strides = [1, 1]} : vector<2x40xf32> to vector<2x20xf32>
    %c2 = arith.constant 2 : index
    %c0_25 = arith.constant 0 : index
    %82 = vector.load %arg26[%c2, %c0_25] : memref<16x40xf32, #tpu.memory_space<vmem>>, vector<2x20xf32>
    tpu.vector_store %arg26[%c2, %c0_25], %81 {strides = array<i32>} : memref<16x40xf32, #tpu.memory_space<vmem>>, vector<2x20xf32>,
    %83 = vector.extract_strided_slice %80 {offsets = [0, 20], sizes = [2, 20], strides = [1, 1]} : vector<2x40xf32> to vector<2x20xf32>
    %c12 = arith.constant 12 : index
    %c20_26 = arith.constant 20 : index
    %84 = vector.load %arg26[%c12, %c20_26] : memref<16x40xf32, #tpu.memory_space<vmem>>, vector<2x20xf32>
    tpu.vector_store %arg26[%c12, %c20_26], %83 {strides = array<i32>} : memref<16x40xf32, #tpu.memory_space<vmem>>, vector<2x20xf32>,
    %cst_27 = arith.constant dense<0.000000e+00> : vector<2x120xf32>
    %85 = tpu.matmul %80, %7, %cst_27 {dimension_numbers = #tpu.dot_dimension_numbers<[1], [0], [0], [1], [0, 0, 1, 1], [], []>} : vector<2x40xf32>, vector<40x120xf32>, vector<2x120xf32> -> vector<2x120xf32>
    %86 = vector.extract_strided_slice %14 {offsets = [4, 0], sizes = [2, 120], strides = [1, 1]} : vector<16x120xf32> to vector<2x120xf32>
    %87 = vector.extract_strided_slice %86 {offsets = [0, 0], sizes = [2, 40], strides = [1, 1]} : vector<2x120xf32> to vector<2x40xf32>
    %88 = vector.extract_strided_slice %85 {offsets = [0, 0], sizes = [2, 40], strides = [1, 1]} : vector<2x120xf32> to vector<2x40xf32>
    %89 = arith.addf %87, %88 : vector<2x40xf32>
    %90 = arith.negf %89 : vector<2x40xf32>
    %91 = math.exp %90 : vector<2x40xf32>
    %cst_28 = arith.constant 1.000000e+00 : f32
    %92 = vector.broadcast %cst_28 : f32 to vector<2x40xf32>
    %93 = arith.addf %92, %91 : vector<2x40xf32>
    %94 = arith.divf %92, %93 : vector<2x40xf32>
    %95 = vector.extract_strided_slice %86 {offsets = [0, 40], sizes = [2, 40], strides = [1, 1]} : vector<2x120xf32> to vector<2x40xf32>
    %96 = vector.extract_strided_slice %85 {offsets = [0, 40], sizes = [2, 40], strides = [1, 1]} : vector<2x120xf32> to vector<2x40xf32>
    %97 = arith.addf %95, %96 : vector<2x40xf32>
    %98 = arith.negf %97 : vector<2x40xf32>
    %99 = math.exp %98 : vector<2x40xf32>
    %cst_29 = arith.constant 1.000000e+00 : f32
    %100 = vector.broadcast %cst_29 : f32 to vector<2x40xf32>
    %101 = arith.addf %100, %99 : vector<2x40xf32>
    %102 = arith.divf %100, %101 : vector<2x40xf32>
    %103 = vector.extract_strided_slice %86 {offsets = [0, 80], sizes = [2, 40], strides = [1, 1]} : vector<2x120xf32> to vector<2x40xf32>
    %104 = vector.extract_strided_slice %85 {offsets = [0, 80], sizes = [2, 40], strides = [1, 1]} : vector<2x120xf32> to vector<2x40xf32>
    %105 = arith.addf %104, %17 : vector<2x40xf32>
    %106 = arith.mulf %94, %105 : vector<2x40xf32>
    %107 = arith.addf %103, %106 : vector<2x40xf32>
    %108 = math.tanh %107 : vector<2x40xf32>
    %cst_30 = arith.constant 1.000000e+00 : f32
    %109 = vector.broadcast %cst_30 : f32 to vector<2x40xf32>
    %110 = arith.subf %109, %102 : vector<2x40xf32>
    %111 = arith.mulf %110, %108 : vector<2x40xf32>
    %112 = arith.mulf %102, %80 : vector<2x40xf32>
    %113 = arith.addf %111, %112 : vector<2x40xf32>
    %114 = vector.extract_strided_slice %113 {offsets = [0, 0], sizes = [2, 20], strides = [1, 1]} : vector<2x40xf32> to vector<2x20xf32>
    %c4 = arith.constant 4 : index
    %c0_31 = arith.constant 0 : index
    %115 = vector.load %arg26[%c4, %c0_31] : memref<16x40xf32, #tpu.memory_space<vmem>>, vector<2x20xf32>
    tpu.vector_store %arg26[%c4, %c0_31], %114 {strides = array<i32>} : memref<16x40xf32, #tpu.memory_space<vmem>>, vector<2x20xf32>,
    %116 = vector.extract_strided_slice %113 {offsets = [0, 20], sizes = [2, 20], strides = [1, 1]} : vector<2x40xf32> to vector<2x20xf32>
    %c10 = arith.constant 10 : index
    %c20_32 = arith.constant 20 : index
    %117 = vector.load %arg26[%c10, %c20_32] : memref<16x40xf32, #tpu.memory_space<vmem>>, vector<2x20xf32>
    tpu.vector_store %arg26[%c10, %c20_32], %116 {strides = array<i32>} : memref<16x40xf32, #tpu.memory_space<vmem>>, vector<2x20xf32>,
    %cst_33 = arith.constant dense<0.000000e+00> : vector<2x120xf32>
    %118 = tpu.matmul %113, %7, %cst_33 {dimension_numbers = #tpu.dot_dimension_numbers<[1], [0], [0], [1], [0, 0, 1, 1], [], []>} : vector<2x40xf32>, vector<40x120xf32>, vector<2x120xf32> -> vector<2x120xf32>
    %119 = vector.extract_strided_slice %14 {offsets = [6, 0], sizes = [2, 120], strides = [1, 1]} : vector<16x120xf32> to vector<2x120xf32>
    %120 = vector.extract_strided_slice %119 {offsets = [0, 0], sizes = [2, 40], strides = [1, 1]} : vector<2x120xf32> to vector<2x40xf32>
    %121 = vector.extract_strided_slice %118 {offsets = [0, 0], sizes = [2, 40], strides = [1, 1]} : vector<2x120xf32> to vector<2x40xf32>
    %122 = arith.addf %120, %121 : vector<2x40xf32>
    %123 = arith.negf %122 : vector<2x40xf32>
    %124 = math.exp %123 : vector<2x40xf32>
    %cst_34 = arith.constant 1.000000e+00 : f32
    %125 = vector.broadcast %cst_34 : f32 to vector<2x40xf32>
    %126 = arith.addf %125, %124 : vector<2x40xf32>
    %127 = arith.divf %125, %126 : vector<2x40xf32>
    %128 = vector.extract_strided_slice %119 {offsets = [0, 40], sizes = [2, 40], strides = [1, 1]} : vector<2x120xf32> to vector<2x40xf32>
    %129 = vector.extract_strided_slice %118 {offsets = [0, 40], sizes = [2, 40], strides = [1, 1]} : vector<2x120xf32> to vector<2x40xf32>
    %130 = arith.addf %128, %129 : vector<2x40xf32>
    %131 = arith.negf %130 : vector<2x40xf32>
    %132 = math.exp %131 : vector<2x40xf32>
    %cst_35 = arith.constant 1.000000e+00 : f32
    %133 = vector.broadcast %cst_35 : f32 to vector<2x40xf32>
    %134 = arith.addf %133, %132 : vector<2x40xf32>
    %135 = arith.divf %133, %134 : vector<2x40xf32>
    %136 = vector.extract_strided_slice %119 {offsets = [0, 80], sizes = [2, 40], strides = [1, 1]} : vector<2x120xf32> to vector<2x40xf32>
    %137 = vector.extract_strided_slice %118 {offsets = [0, 80], sizes = [2, 40], strides = [1, 1]} : vector<2x120xf32> to vector<2x40xf32>
    %138 = arith.addf %137, %17 : vector<2x40xf32>
    %139 = arith.mulf %127, %138 : vector<2x40xf32>
    %140 = arith.addf %136, %139 : vector<2x40xf32>
    %141 = math.tanh %140 : vector<2x40xf32>
    %cst_36 = arith.constant 1.000000e+00 : f32
    %142 = vector.broadcast %cst_36 : f32 to vector<2x40xf32>
    %143 = arith.subf %142, %135 : vector<2x40xf32>
    %144 = arith.mulf %143, %141 : vector<2x40xf32>
    %145 = arith.mulf %135, %113 : vector<2x40xf32>
    %146 = arith.addf %144, %145 : vector<2x40xf32>
    %147 = vector.extract_strided_slice %146 {offsets = [0, 0], sizes = [2, 20], strides = [1, 1]} : vector<2x40xf32> to vector<2x20xf32>
    %c6 = arith.constant 6 : index
    %c0_37 = arith.constant 0 : index
    %148 = vector.load %arg26[%c6, %c0_37] : memref<16x40xf32, #tpu.memory_space<vmem>>, vector<2x20xf32>
    tpu.vector_store %arg26[%c6, %c0_37], %147 {strides = array<i32>} : memref<16x40xf32, #tpu.memory_space<vmem>>, vector<2x20xf32>,
    %149 = vector.extract_strided_slice %146 {offsets = [0, 20], sizes = [2, 20], strides = [1, 1]} : vector<2x40xf32> to vector<2x20xf32>
    %c8 = arith.constant 8 : index
    %c20_38 = arith.constant 20 : index
    %150 = vector.load %arg26[%c8, %c20_38] : memref<16x40xf32, #tpu.memory_space<vmem>>, vector<2x20xf32>
    tpu.vector_store %arg26[%c8, %c20_38], %149 {strides = array<i32>} : memref<16x40xf32, #tpu.memory_space<vmem>>, vector<2x20xf32>,
    %cst_39 = arith.constant dense<0.000000e+00> : vector<2x120xf32>
    %151 = tpu.matmul %146, %7, %cst_39 {dimension_numbers = #tpu.dot_dimension_numbers<[1], [0], [0], [1], [0, 0, 1, 1], [], []>} : vector<2x40xf32>, vector<40x120xf32>, vector<2x120xf32> -> vector<2x120xf32>
    %152 = vector.extract_strided_slice %14 {offsets = [8, 0], sizes = [2, 120], strides = [1, 1]} : vector<16x120xf32> to vector<2x120xf32>
    %153 = vector.extract_strided_slice %152 {offsets = [0, 0], sizes = [2, 40], strides = [1, 1]} : vector<2x120xf32> to vector<2x40xf32>
    %154 = vector.extract_strided_slice %151 {offsets = [0, 0], sizes = [2, 40], strides = [1, 1]} : vector<2x120xf32> to vector<2x40xf32>
    %155 = arith.addf %153, %154 : vector<2x40xf32>
    %156 = arith.negf %155 : vector<2x40xf32>
    %157 = math.exp %156 : vector<2x40xf32>
    %cst_40 = arith.constant 1.000000e+00 : f32
    %158 = vector.broadcast %cst_40 : f32 to vector<2x40xf32>
    %159 = arith.addf %158, %157 : vector<2x40xf32>
    %160 = arith.divf %158, %159 : vector<2x40xf32>
    %161 = vector.extract_strided_slice %152 {offsets = [0, 40], sizes = [2, 40], strides = [1, 1]} : vector<2x120xf32> to vector<2x40xf32>
    %162 = vector.extract_strided_slice %151 {offsets = [0, 40], sizes = [2, 40], strides = [1, 1]} : vector<2x120xf32> to vector<2x40xf32>
    %163 = arith.addf %161, %162 : vector<2x40xf32>
    %164 = arith.negf %163 : vector<2x40xf32>
    %165 = math.exp %164 : vector<2x40xf32>
    %cst_41 = arith.constant 1.000000e+00 : f32
    %166 = vector.broadcast %cst_41 : f32 to vector<2x40xf32>
    %167 = arith.addf %166, %165 : vector<2x40xf32>
    %168 = arith.divf %166, %167 : vector<2x40xf32>
    %169 = vector.extract_strided_slice %152 {offsets = [0, 80], sizes = [2, 40], strides = [1, 1]} : vector<2x120xf32> to vector<2x40xf32>
    %170 = vector.extract_strided_slice %151 {offsets = [0, 80], sizes = [2, 40], strides = [1, 1]} : vector<2x120xf32> to vector<2x40xf32>
    %171 = arith.addf %170, %17 : vector<2x40xf32>
    %172 = arith.mulf %160, %171 : vector<2x40xf32>
    %173 = arith.addf %169, %172 : vector<2x40xf32>
    %174 = math.tanh %173 : vector<2x40xf32>
    %cst_42 = arith.constant 1.000000e+00 : f32
    %175 = vector.broadcast %cst_42 : f32 to vector<2x40xf32>
    %176 = arith.subf %175, %168 : vector<2x40xf32>
    %177 = arith.mulf %176, %174 : vector<2x40xf32>
    %178 = arith.mulf %168, %146 : vector<2x40xf32>
    %179 = arith.addf %177, %178 : vector<2x40xf32>
    %180 = vector.extract_strided_slice %179 {offsets = [0, 0], sizes = [2, 20], strides = [1, 1]} : vector<2x40xf32> to vector<2x20xf32>
    %c8_43 = arith.constant 8 : index
    %c0_44 = arith.constant 0 : index
    %181 = vector.load %arg26[%c8_43, %c0_44] : memref<16x40xf32, #tpu.memory_space<vmem>>, vector<2x20xf32>
    tpu.vector_store %arg26[%c8_43, %c0_44], %180 {strides = array<i32>} : memref<16x40xf32, #tpu.memory_space<vmem>>, vector<2x20xf32>,
    %182 = vector.extract_strided_slice %179 {offsets = [0, 20], sizes = [2, 20], strides = [1, 1]} : vector<2x40xf32> to vector<2x20xf32>
    %c6_45 = arith.constant 6 : index
    %c20_46 = arith.constant 20 : index
    %183 = vector.load %arg26[%c6_45, %c20_46] : memref<16x40xf32, #tpu.memory_space<vmem>>, vector<2x20xf32>
    tpu.vector_store %arg26[%c6_45, %c20_46], %182 {strides = array<i32>} : memref<16x40xf32, #tpu.memory_space<vmem>>, vector<2x20xf32>,
    %cst_47 = arith.constant dense<0.000000e+00> : vector<2x120xf32>
    %184 = tpu.matmul %179, %7, %cst_47 {dimension_numbers = #tpu.dot_dimension_numbers<[1], [0], [0], [1], [0, 0, 1, 1], [], []>} : vector<2x40xf32>, vector<40x120xf32>, vector<2x120xf32> -> vector<2x120xf32>
    %185 = vector.extract_strided_slice %14 {offsets = [10, 0], sizes = [2, 120], strides = [1, 1]} : vector<16x120xf32> to vector<2x120xf32>
    %186 = vector.extract_strided_slice %185 {offsets = [0, 0], sizes = [2, 40], strides = [1, 1]} : vector<2x120xf32> to vector<2x40xf32>
    %187 = vector.extract_strided_slice %184 {offsets = [0, 0], sizes = [2, 40], strides = [1, 1]} : vector<2x120xf32> to vector<2x40xf32>
    %188 = arith.addf %186, %187 : vector<2x40xf32>
    %189 = arith.negf %188 : vector<2x40xf32>
    %190 = math.exp %189 : vector<2x40xf32>
    %cst_48 = arith.constant 1.000000e+00 : f32
    %191 = vector.broadcast %cst_48 : f32 to vector<2x40xf32>
    %192 = arith.addf %191, %190 : vector<2x40xf32>
    %193 = arith.divf %191, %192 : vector<2x40xf32>
    %194 = vector.extract_strided_slice %185 {offsets = [0, 40], sizes = [2, 40], strides = [1, 1]} : vector<2x120xf32> to vector<2x40xf32>
    %195 = vector.extract_strided_slice %184 {offsets = [0, 40], sizes = [2, 40], strides = [1, 1]} : vector<2x120xf32> to vector<2x40xf32>
    %196 = arith.addf %194, %195 : vector<2x40xf32>
    %197 = arith.negf %196 : vector<2x40xf32>
    %198 = math.exp %197 : vector<2x40xf32>
    %cst_49 = arith.constant 1.000000e+00 : f32
    %199 = vector.broadcast %cst_49 : f32 to vector<2x40xf32>
    %200 = arith.addf %199, %198 : vector<2x40xf32>
    %201 = arith.divf %199, %200 : vector<2x40xf32>
    %202 = vector.extract_strided_slice %185 {offsets = [0, 80], sizes = [2, 40], strides = [1, 1]} : vector<2x120xf32> to vector<2x40xf32>
    %203 = vector.extract_strided_slice %184 {offsets = [0, 80], sizes = [2, 40], strides = [1, 1]} : vector<2x120xf32> to vector<2x40xf32>
    %204 = arith.addf %203, %17 : vector<2x40xf32>
    %205 = arith.mulf %193, %204 : vector<2x40xf32>
    %206 = arith.addf %202, %205 : vector<2x40xf32>
    %207 = math.tanh %206 : vector<2x40xf32>
    %cst_50 = arith.constant 1.000000e+00 : f32
    %208 = vector.broadcast %cst_50 : f32 to vector<2x40xf32>
    %209 = arith.subf %208, %201 : vector<2x40xf32>
    %210 = arith.mulf %209, %207 : vector<2x40xf32>
    %211 = arith.mulf %201, %179 : vector<2x40xf32>
    %212 = arith.addf %210, %211 : vector<2x40xf32>
    %213 = vector.extract_strided_slice %212 {offsets = [0, 0], sizes = [2, 20], strides = [1, 1]} : vector<2x40xf32> to vector<2x20xf32>
    %c10_51 = arith.constant 10 : index
    %c0_52 = arith.constant 0 : index
    %214 = vector.load %arg26[%c10_51, %c0_52] : memref<16x40xf32, #tpu.memory_space<vmem>>, vector<2x20xf32>
    tpu.vector_store %arg26[%c10_51, %c0_52], %213 {strides = array<i32>} : memref<16x40xf32, #tpu.memory_space<vmem>>, vector<2x20xf32>,
    %215 = vector.extract_strided_slice %212 {offsets = [0, 20], sizes = [2, 20], strides = [1, 1]} : vector<2x40xf32> to vector<2x20xf32>
    %c4_53 = arith.constant 4 : index
    %c20_54 = arith.constant 20 : index
    %216 = vector.load %arg26[%c4_53, %c20_54] : memref<16x40xf32, #tpu.memory_space<vmem>>, vector<2x20xf32>
    tpu.vector_store %arg26[%c4_53, %c20_54], %215 {strides = array<i32>} : memref<16x40xf32, #tpu.memory_space<vmem>>, vector<2x20xf32>,
    %cst_55 = arith.constant dense<0.000000e+00> : vector<2x120xf32>
    %217 = tpu.matmul %212, %7, %cst_55 {dimension_numbers = #tpu.dot_dimension_numbers<[1], [0], [0], [1], [0, 0, 1, 1], [], []>} : vector<2x40xf32>, vector<40x120xf32>, vector<2x120xf32> -> vector<2x120xf32>
    %218 = vector.extract_strided_slice %14 {offsets = [12, 0], sizes = [2, 120], strides = [1, 1]} : vector<16x120xf32> to vector<2x120xf32>
    %219 = vector.extract_strided_slice %218 {offsets = [0, 0], sizes = [2, 40], strides = [1, 1]} : vector<2x120xf32> to vector<2x40xf32>
    %220 = vector.extract_strided_slice %217 {offsets = [0, 0], sizes = [2, 40], strides = [1, 1]} : vector<2x120xf32> to vector<2x40xf32>
    %221 = arith.addf %219, %220 : vector<2x40xf32>
    %222 = arith.negf %221 : vector<2x40xf32>
    %223 = math.exp %222 : vector<2x40xf32>
    %cst_56 = arith.constant 1.000000e+00 : f32
    %224 = vector.broadcast %cst_56 : f32 to vector<2x40xf32>
    %225 = arith.addf %224, %223 : vector<2x40xf32>
    %226 = arith.divf %224, %225 : vector<2x40xf32>
    %227 = vector.extract_strided_slice %218 {offsets = [0, 40], sizes = [2, 40], strides = [1, 1]} : vector<2x120xf32> to vector<2x40xf32>
    %228 = vector.extract_strided_slice %217 {offsets = [0, 40], sizes = [2, 40], strides = [1, 1]} : vector<2x120xf32> to vector<2x40xf32>
    %229 = arith.addf %227, %228 : vector<2x40xf32>
    %230 = arith.negf %229 : vector<2x40xf32>
    %231 = math.exp %230 : vector<2x40xf32>
    %cst_57 = arith.constant 1.000000e+00 : f32
    %232 = vector.broadcast %cst_57 : f32 to vector<2x40xf32>
    %233 = arith.addf %232, %231 : vector<2x40xf32>
    %234 = arith.divf %232, %233 : vector<2x40xf32>
    %235 = vector.extract_strided_slice %218 {offsets = [0, 80], sizes = [2, 40], strides = [1, 1]} : vector<2x120xf32> to vector<2x40xf32>
    %236 = vector.extract_strided_slice %217 {offsets = [0, 80], sizes = [2, 40], strides = [1, 1]} : vector<2x120xf32> to vector<2x40xf32>
    %237 = arith.addf %236, %17 : vector<2x40xf32>
    %238 = arith.mulf %226, %237 : vector<2x40xf32>
    %239 = arith.addf %235, %238 : vector<2x40xf32>
    %240 = math.tanh %239 : vector<2x40xf32>
    %cst_58 = arith.constant 1.000000e+00 : f32
    %241 = vector.broadcast %cst_58 : f32 to vector<2x40xf32>
    %242 = arith.subf %241, %234 : vector<2x40xf32>
    %243 = arith.mulf %242, %240 : vector<2x40xf32>
    %244 = arith.mulf %234, %212 : vector<2x40xf32>
    %245 = arith.addf %243, %244 : vector<2x40xf32>
    %246 = vector.extract_strided_slice %245 {offsets = [0, 0], sizes = [2, 20], strides = [1, 1]} : vector<2x40xf32> to vector<2x20xf32>
    %c12_59 = arith.constant 12 : index
    %c0_60 = arith.constant 0 : index
    %247 = vector.load %arg26[%c12_59, %c0_60] : memref<16x40xf32, #tpu.memory_space<vmem>>, vector<2x20xf32>
    tpu.vector_store %arg26[%c12_59, %c0_60], %246 {strides = array<i32>} : memref<16x40xf32, #tpu.memory_space<vmem>>, vector<2x20xf32>,
    %248 = vector.extract_strided_slice %245 {offsets = [0, 20], sizes = [2, 20], strides = [1, 1]} : vector<2x40xf32> to vector<2x20xf32>
    %c2_61 = arith.constant 2 : index
    %c20_62 = arith.constant 20 : index
    %249 = vector.load %arg26[%c2_61, %c20_62] : memref<16x40xf32, #tpu.memory_space<vmem>>, vector<2x20xf32>
    tpu.vector_store %arg26[%c2_61, %c20_62], %248 {strides = array<i32>} : memref<16x40xf32, #tpu.memory_space<vmem>>, vector<2x20xf32>,
    %cst_63 = arith.constant dense<0.000000e+00> : vector<2x120xf32>
    %250 = tpu.matmul %245, %7, %cst_63 {dimension_numbers = #tpu.dot_dimension_numbers<[1], [0], [0], [1], [0, 0, 1, 1], [], []>} : vector<2x40xf32>, vector<40x120xf32>, vector<2x120xf32> -> vector<2x120xf32>
    %251 = vector.extract_strided_slice %14 {offsets = [14, 0], sizes = [2, 120], strides = [1, 1]} : vector<16x120xf32> to vector<2x120xf32>
    %252 = vector.extract_strided_slice %251 {offsets = [0, 0], sizes = [2, 40], strides = [1, 1]} : vector<2x120xf32> to vector<2x40xf32>
    %253 = vector.extract_strided_slice %250 {offsets = [0, 0], sizes = [2, 40], strides = [1, 1]} : vector<2x120xf32> to vector<2x40xf32>
    %254 = arith.addf %252, %253 : vector<2x40xf32>
    %255 = arith.negf %254 : vector<2x40xf32>
    %256 = math.exp %255 : vector<2x40xf32>
    %cst_64 = arith.constant 1.000000e+00 : f32
    %257 = vector.broadcast %cst_64 : f32 to vector<2x40xf32>
    %258 = arith.addf %257, %256 : vector<2x40xf32>
    %259 = arith.divf %257, %258 : vector<2x40xf32>
    %260 = vector.extract_strided_slice %251 {offsets = [0, 40], sizes = [2, 40], strides = [1, 1]} : vector<2x120xf32> to vector<2x40xf32>
    %261 = vector.extract_strided_slice %250 {offsets = [0, 40], sizes = [2, 40], strides = [1, 1]} : vector<2x120xf32> to vector<2x40xf32>
    %262 = arith.addf %260, %261 : vector<2x40xf32>
    %263 = arith.negf %262 : vector<2x40xf32>
    %264 = math.exp %263 : vector<2x40xf32>
    %cst_65 = arith.constant 1.000000e+00 : f32
    %265 = vector.broadcast %cst_65 : f32 to vector<2x40xf32>
    %266 = arith.addf %265, %264 : vector<2x40xf32>
    %267 = arith.divf %265, %266 : vector<2x40xf32>
    %268 = vector.extract_strided_slice %251 {offsets = [0, 80], sizes = [2, 40], strides = [1, 1]} : vector<2x120xf32> to vector<2x40xf32>
    %269 = vector.extract_strided_slice %250 {offsets = [0, 80], sizes = [2, 40], strides = [1, 1]} : vector<2x120xf32> to vector<2x40xf32>
    %270 = arith.addf %269, %17 : vector<2x40xf32>
    %271 = arith.mulf %259, %270 : vector<2x40xf32>
    %272 = arith.addf %268, %271 : vector<2x40xf32>
    %273 = math.tanh %272 : vector<2x40xf32>
    %cst_66 = arith.constant 1.000000e+00 : f32
    %274 = vector.broadcast %cst_66 : f32 to vector<2x40xf32>
    %275 = arith.subf %274, %267 : vector<2x40xf32>
    %276 = arith.mulf %275, %273 : vector<2x40xf32>
    %277 = arith.mulf %267, %245 : vector<2x40xf32>
    %278 = arith.addf %276, %277 : vector<2x40xf32>
    %279 = vector.extract_strided_slice %278 {offsets = [0, 0], sizes = [2, 20], strides = [1, 1]} : vector<2x40xf32> to vector<2x20xf32>
    %c14_67 = arith.constant 14 : index
    %c0_68 = arith.constant 0 : index
    %280 = vector.load %arg26[%c14_67, %c0_68] : memref<16x40xf32, #tpu.memory_space<vmem>>, vector<2x20xf32>
    tpu.vector_store %arg26[%c14_67, %c0_68], %279 {strides = array<i32>} : memref<16x40xf32, #tpu.memory_space<vmem>>, vector<2x20xf32>,
    %281 = vector.extract_strided_slice %278 {offsets = [0, 20], sizes = [2, 20], strides = [1, 1]} : vector<2x40xf32> to vector<2x20xf32>
    %c0_69 = arith.constant 0 : index
    %c20_70 = arith.constant 20 : index
    %282 = vector.load %arg26[%c0_69, %c20_70] : memref<16x40xf32, #tpu.memory_space<vmem>>, vector<2x20xf32>
    tpu.vector_store %arg26[%c0_69, %c20_70], %281 {strides = array<i32>} : memref<16x40xf32, #tpu.memory_space<vmem>>, vector<2x20xf32>,
    %c0_71 = arith.constant 0 : index
    %c0_72 = arith.constant 0 : index
    %283 = vector.load %arg26[%c0_71, %c0_72] : memref<16x40xf32, #tpu.memory_space<vmem>>, vector<16x40xf32>
    %c0_73 = arith.constant 0 : index
    %c0_74 = arith.constant 0 : index
    %284 = vector.load %arg10[%c0_73, %c0_74] : memref<40x120xf32, #tpu.memory_space<vmem>>, vector<40x120xf32>
    %c0_75 = arith.constant 0 : index
    %c0_76 = arith.constant 0 : index
    %285 = vector.load %arg11[%c0_75, %c0_76] : memref<1x120xf32, #tpu.memory_space<vmem>>, vector<1x120xf32>
    %c0_77 = arith.constant 0 : index
    %c0_78 = arith.constant 0 : index
    %286 = vector.load %arg12[%c0_77, %c0_78] : memref<40x120xf32, #tpu.memory_space<vmem>>, vector<40x120xf32>
    %cst_79 = arith.constant dense<0.000000e+00> : vector<16x120xf32>
    %287 = tpu.matmul %283, %284, %cst_79 {dimension_numbers = #tpu.dot_dimension_numbers<[1], [0], [0], [1], [0, 0, 1, 1], [], []>} : vector<16x40xf32>, vector<40x120xf32>, vector<16x120xf32> -> vector<16x120xf32>
    %288 = vector.broadcast %285 : vector<1x120xf32> to vector<16x120xf32>
    %289 = arith.addf %287, %288 : vector<16x120xf32>
    %cst_80 = arith.constant dense<0.000000e+00> : vector<16x120xf32>
    %290 = tpu.matmul %3, %289, %cst_80 {dimension_numbers = #tpu.dot_dimension_numbers<[1], [0], [0], [1], [0, 0, 1, 1], [], []>} : vector<16x16xf32>, vector<16x120xf32>, vector<16x120xf32> -> vector<16x120xf32>
    %291 = arith.subf %289, %290 : vector<16x120xf32>
    %292 = arith.mulf %2, %291 : vector<16x120xf32>
    %293 = arith.addf %290, %292 : vector<16x120xf32>
    %c0_81 = arith.constant 0 : index
    %c0_82 = arith.constant 0 : index
    %294 = vector.load %arg13[%c0_81, %c0_82] : memref<1x40xf32, #tpu.memory_space<vmem>>, vector<1x40xf32>
    %295 = vector.shape_cast %294 : vector<1x40xf32> to vector<1x40xf32>
    %296 = vector.broadcast %295 : vector<1x40xf32> to vector<2x40xf32>
    %cst_83 = arith.constant 0.000000e+00 : f32
    %297 = vector.broadcast %cst_83 : f32 to vector<2x40xf32>
    %cst_84 = arith.constant dense<0.000000e+00> : vector<2x120xf32>
    %298 = tpu.matmul %297, %286, %cst_84 {dimension_numbers = #tpu.dot_dimension_numbers<[1], [0], [0], [1], [0, 0, 1, 1], [], []>} : vector<2x40xf32>, vector<40x120xf32>, vector<2x120xf32> -> vector<2x120xf32>
    %299 = vector.extract_strided_slice %293 {offsets = [0, 0], sizes = [2, 120], strides = [1, 1]} : vector<16x120xf32> to vector<2x120xf32>
    %300 = vector.extract_strided_slice %299 {offsets = [0, 0], sizes = [2, 40], strides = [1, 1]} : vector<2x120xf32> to vector<2x40xf32>
    %301 = vector.extract_strided_slice %298 {offsets = [0, 0], sizes = [2, 40], strides = [1, 1]} : vector<2x120xf32> to vector<2x40xf32>
    %302 = arith.addf %300, %301 : vector<2x40xf32>
    %303 = arith.negf %302 : vector<2x40xf32>
    %304 = math.exp %303 : vector<2x40xf32>
    %cst_85 = arith.constant 1.000000e+00 : f32
    %305 = vector.broadcast %cst_85 : f32 to vector<2x40xf32>
    %306 = arith.addf %305, %304 : vector<2x40xf32>
    %307 = arith.divf %305, %306 : vector<2x40xf32>
    %308 = vector.extract_strided_slice %299 {offsets = [0, 40], sizes = [2, 40], strides = [1, 1]} : vector<2x120xf32> to vector<2x40xf32>
    %309 = vector.extract_strided_slice %298 {offsets = [0, 40], sizes = [2, 40], strides = [1, 1]} : vector<2x120xf32> to vector<2x40xf32>
    %310 = arith.addf %308, %309 : vector<2x40xf32>
    %311 = arith.negf %310 : vector<2x40xf32>
    %312 = math.exp %311 : vector<2x40xf32>
    %cst_86 = arith.constant 1.000000e+00 : f32
    %313 = vector.broadcast %cst_86 : f32 to vector<2x40xf32>
    %314 = arith.addf %313, %312 : vector<2x40xf32>
    %315 = arith.divf %313, %314 : vector<2x40xf32>
    %316 = vector.extract_strided_slice %299 {offsets = [0, 80], sizes = [2, 40], strides = [1, 1]} : vector<2x120xf32> to vector<2x40xf32>
    %317 = vector.extract_strided_slice %298 {offsets = [0, 80], sizes = [2, 40], strides = [1, 1]} : vector<2x120xf32> to vector<2x40xf32>
    %318 = arith.addf %317, %296 : vector<2x40xf32>
    %319 = arith.mulf %307, %318 : vector<2x40xf32>
    %320 = arith.addf %316, %319 : vector<2x40xf32>
    %321 = math.tanh %320 : vector<2x40xf32>
    %cst_87 = arith.constant 1.000000e+00 : f32
    %322 = vector.broadcast %cst_87 : f32 to vector<2x40xf32>
    %323 = arith.subf %322, %315 : vector<2x40xf32>
    %324 = arith.mulf %323, %321 : vector<2x40xf32>
    %325 = arith.mulf %315, %297 : vector<2x40xf32>
    %326 = arith.addf %324, %325 : vector<2x40xf32>
    %327 = vector.extract_strided_slice %326 {offsets = [0, 0], sizes = [2, 20], strides = [1, 1]} : vector<2x40xf32> to vector<2x20xf32>
    %c0_88 = arith.constant 0 : index
    %c0_89 = arith.constant 0 : index
    %328 = vector.load %arg27[%c0_88, %c0_89] : memref<16x40xf32, #tpu.memory_space<vmem>>, vector<2x20xf32>
    tpu.vector_store %arg27[%c0_88, %c0_89], %327 {strides = array<i32>} : memref<16x40xf32, #tpu.memory_space<vmem>>, vector<2x20xf32>,
    %329 = vector.extract_strided_slice %326 {offsets = [0, 20], sizes = [2, 20], strides = [1, 1]} : vector<2x40xf32> to vector<2x20xf32>
    %c14_90 = arith.constant 14 : index
    %c20_91 = arith.constant 20 : index
    %330 = vector.load %arg27[%c14_90, %c20_91] : memref<16x40xf32, #tpu.memory_space<vmem>>, vector<2x20xf32>
    tpu.vector_store %arg27[%c14_90, %c20_91], %329 {strides = array<i32>} : memref<16x40xf32, #tpu.memory_space<vmem>>, vector<2x20xf32>,
    %cst_92 = arith.constant dense<0.000000e+00> : vector<2x120xf32>
    %331 = tpu.matmul %326, %286, %cst_92 {dimension_numbers = #tpu.dot_dimension_numbers<[1], [0], [0], [1], [0, 0, 1, 1], [], []>} : vector<2x40xf32>, vector<40x120xf32>, vector<2x120xf32> -> vector<2x120xf32>
    %332 = vector.extract_strided_slice %293 {offsets = [2, 0], sizes = [2, 120], strides = [1, 1]} : vector<16x120xf32> to vector<2x120xf32>
    %333 = vector.extract_strided_slice %332 {offsets = [0, 0], sizes = [2, 40], strides = [1, 1]} : vector<2x120xf32> to vector<2x40xf32>
    %334 = vector.extract_strided_slice %331 {offsets = [0, 0], sizes = [2, 40], strides = [1, 1]} : vector<2x120xf32> to vector<2x40xf32>
    %335 = arith.addf %333, %334 : vector<2x40xf32>
    %336 = arith.negf %335 : vector<2x40xf32>
    %337 = math.exp %336 : vector<2x40xf32>
    %cst_93 = arith.constant 1.000000e+00 : f32
    %338 = vector.broadcast %cst_93 : f32 to vector<2x40xf32>
    %339 = arith.addf %338, %337 : vector<2x40xf32>
    %340 = arith.divf %338, %339 : vector<2x40xf32>
    %341 = vector.extract_strided_slice %332 {offsets = [0, 40], sizes = [2, 40], strides = [1, 1]} : vector<2x120xf32> to vector<2x40xf32>
    %342 = vector.extract_strided_slice %331 {offsets = [0, 40], sizes = [2, 40], strides = [1, 1]} : vector<2x120xf32> to vector<2x40xf32>
    %343 = arith.addf %341, %342 : vector<2x40xf32>
    %344 = arith.negf %343 : vector<2x40xf32>
    %345 = math.exp %344 : vector<2x40xf32>
    %cst_94 = arith.constant 1.000000e+00 : f32
    %346 = vector.broadcast %cst_94 : f32 to vector<2x40xf32>
    %347 = arith.addf %346, %345 : vector<2x40xf32>
    %348 = arith.divf %346, %347 : vector<2x40xf32>
    %349 = vector.extract_strided_slice %332 {offsets = [0, 80], sizes = [2, 40], strides = [1, 1]} : vector<2x120xf32> to vector<2x40xf32>
    %350 = vector.extract_strided_slice %331 {offsets = [0, 80], sizes = [2, 40], strides = [1, 1]} : vector<2x120xf32> to vector<2x40xf32>
    %351 = arith.addf %350, %296 : vector<2x40xf32>
    %352 = arith.mulf %340, %351 : vector<2x40xf32>
    %353 = arith.addf %349, %352 : vector<2x40xf32>
    %354 = math.tanh %353 : vector<2x40xf32>
    %cst_95 = arith.constant 1.000000e+00 : f32
    %355 = vector.broadcast %cst_95 : f32 to vector<2x40xf32>
    %356 = arith.subf %355, %348 : vector<2x40xf32>
    %357 = arith.mulf %356, %354 : vector<2x40xf32>
    %358 = arith.mulf %348, %326 : vector<2x40xf32>
    %359 = arith.addf %357, %358 : vector<2x40xf32>
    %360 = vector.extract_strided_slice %359 {offsets = [0, 0], sizes = [2, 20], strides = [1, 1]} : vector<2x40xf32> to vector<2x20xf32>
    %c2_96 = arith.constant 2 : index
    %c0_97 = arith.constant 0 : index
    %361 = vector.load %arg27[%c2_96, %c0_97] : memref<16x40xf32, #tpu.memory_space<vmem>>, vector<2x20xf32>
    tpu.vector_store %arg27[%c2_96, %c0_97], %360 {strides = array<i32>} : memref<16x40xf32, #tpu.memory_space<vmem>>, vector<2x20xf32>,
    %362 = vector.extract_strided_slice %359 {offsets = [0, 20], sizes = [2, 20], strides = [1, 1]} : vector<2x40xf32> to vector<2x20xf32>
    %c12_98 = arith.constant 12 : index
    %c20_99 = arith.constant 20 : index
    %363 = vector.load %arg27[%c12_98, %c20_99] : memref<16x40xf32, #tpu.memory_space<vmem>>, vector<2x20xf32>
    tpu.vector_store %arg27[%c12_98, %c20_99], %362 {strides = array<i32>} : memref<16x40xf32, #tpu.memory_space<vmem>>, vector<2x20xf32>,
    %cst_100 = arith.constant dense<0.000000e+00> : vector<2x120xf32>
    %364 = tpu.matmul %359, %286, %cst_100 {dimension_numbers = #tpu.dot_dimension_numbers<[1], [0], [0], [1], [0, 0, 1, 1], [], []>} : vector<2x40xf32>, vector<40x120xf32>, vector<2x120xf32> -> vector<2x120xf32>
    %365 = vector.extract_strided_slice %293 {offsets = [4, 0], sizes = [2, 120], strides = [1, 1]} : vector<16x120xf32> to vector<2x120xf32>
    %366 = vector.extract_strided_slice %365 {offsets = [0, 0], sizes = [2, 40], strides = [1, 1]} : vector<2x120xf32> to vector<2x40xf32>
    %367 = vector.extract_strided_slice %364 {offsets = [0, 0], sizes = [2, 40], strides = [1, 1]} : vector<2x120xf32> to vector<2x40xf32>
    %368 = arith.addf %366, %367 : vector<2x40xf32>
    %369 = arith.negf %368 : vector<2x40xf32>
    %370 = math.exp %369 : vector<2x40xf32>
    %cst_101 = arith.constant 1.000000e+00 : f32
    %371 = vector.broadcast %cst_101 : f32 to vector<2x40xf32>
    %372 = arith.addf %371, %370 : vector<2x40xf32>
    %373 = arith.divf %371, %372 : vector<2x40xf32>
    %374 = vector.extract_strided_slice %365 {offsets = [0, 40], sizes = [2, 40], strides = [1, 1]} : vector<2x120xf32> to vector<2x40xf32>
    %375 = vector.extract_strided_slice %364 {offsets = [0, 40], sizes = [2, 40], strides = [1, 1]} : vector<2x120xf32> to vector<2x40xf32>
    %376 = arith.addf %374, %375 : vector<2x40xf32>
    %377 = arith.negf %376 : vector<2x40xf32>
    %378 = math.exp %377 : vector<2x40xf32>
    %cst_102 = arith.constant 1.000000e+00 : f32
    %379 = vector.broadcast %cst_102 : f32 to vector<2x40xf32>
    %380 = arith.addf %379, %378 : vector<2x40xf32>
    %381 = arith.divf %379, %380 : vector<2x40xf32>
    %382 = vector.extract_strided_slice %365 {offsets = [0, 80], sizes = [2, 40], strides = [1, 1]} : vector<2x120xf32> to vector<2x40xf32>
    %383 = vector.extract_strided_slice %364 {offsets = [0, 80], sizes = [2, 40], strides = [1, 1]} : vector<2x120xf32> to vector<2x40xf32>
    %384 = arith.addf %383, %296 : vector<2x40xf32>
    %385 = arith.mulf %373, %384 : vector<2x40xf32>
    %386 = arith.addf %382, %385 : vector<2x40xf32>
    %387 = math.tanh %386 : vector<2x40xf32>
    %cst_103 = arith.constant 1.000000e+00 : f32
    %388 = vector.broadcast %cst_103 : f32 to vector<2x40xf32>
    %389 = arith.subf %388, %381 : vector<2x40xf32>
    %390 = arith.mulf %389, %387 : vector<2x40xf32>
    %391 = arith.mulf %381, %359 : vector<2x40xf32>
    %392 = arith.addf %390, %391 : vector<2x40xf32>
    %393 = vector.extract_strided_slice %392 {offsets = [0, 0], sizes = [2, 20], strides = [1, 1]} : vector<2x40xf32> to vector<2x20xf32>
    %c4_104 = arith.constant 4 : index
    %c0_105 = arith.constant 0 : index
    %394 = vector.load %arg27[%c4_104, %c0_105] : memref<16x40xf32, #tpu.memory_space<vmem>>, vector<2x20xf32>
    tpu.vector_store %arg27[%c4_104, %c0_105], %393 {strides = array<i32>} : memref<16x40xf32, #tpu.memory_space<vmem>>, vector<2x20xf32>,
    %395 = vector.extract_strided_slice %392 {offsets = [0, 20], sizes = [2, 20], strides = [1, 1]} : vector<2x40xf32> to vector<2x20xf32>
    %c10_106 = arith.constant 10 : index
    %c20_107 = arith.constant 20 : index
    %396 = vector.load %arg27[%c10_106, %c20_107] : memref<16x40xf32, #tpu.memory_space<vmem>>, vector<2x20xf32>
    tpu.vector_store %arg27[%c10_106, %c20_107], %395 {strides = array<i32>} : memref<16x40xf32, #tpu.memory_space<vmem>>, vector<2x20xf32>,
    %cst_108 = arith.constant dense<0.000000e+00> : vector<2x120xf32>
    %397 = tpu.matmul %392, %286, %cst_108 {dimension_numbers = #tpu.dot_dimension_numbers<[1], [0], [0], [1], [0, 0, 1, 1], [], []>} : vector<2x40xf32>, vector<40x120xf32>, vector<2x120xf32> -> vector<2x120xf32>
    %398 = vector.extract_strided_slice %293 {offsets = [6, 0], sizes = [2, 120], strides = [1, 1]} : vector<16x120xf32> to vector<2x120xf32>
    %399 = vector.extract_strided_slice %398 {offsets = [0, 0], sizes = [2, 40], strides = [1, 1]} : vector<2x120xf32> to vector<2x40xf32>
    %400 = vector.extract_strided_slice %397 {offsets = [0, 0], sizes = [2, 40], strides = [1, 1]} : vector<2x120xf32> to vector<2x40xf32>
    %401 = arith.addf %399, %400 : vector<2x40xf32>
    %402 = arith.negf %401 : vector<2x40xf32>
    %403 = math.exp %402 : vector<2x40xf32>
    %cst_109 = arith.constant 1.000000e+00 : f32
    %404 = vector.broadcast %cst_109 : f32 to vector<2x40xf32>
    %405 = arith.addf %404, %403 : vector<2x40xf32>
    %406 = arith.divf %404, %405 : vector<2x40xf32>
    %407 = vector.extract_strided_slice %398 {offsets = [0, 40], sizes = [2, 40], strides = [1, 1]} : vector<2x120xf32> to vector<2x40xf32>
    %408 = vector.extract_strided_slice %397 {offsets = [0, 40], sizes = [2, 40], strides = [1, 1]} : vector<2x120xf32> to vector<2x40xf32>
    %409 = arith.addf %407, %408 : vector<2x40xf32>
    %410 = arith.negf %409 : vector<2x40xf32>
    %411 = math.exp %410 : vector<2x40xf32>
    %cst_110 = arith.constant 1.000000e+00 : f32
    %412 = vector.broadcast %cst_110 : f32 to vector<2x40xf32>
    %413 = arith.addf %412, %411 : vector<2x40xf32>
    %414 = arith.divf %412, %413 : vector<2x40xf32>
    %415 = vector.extract_strided_slice %398 {offsets = [0, 80], sizes = [2, 40], strides = [1, 1]} : vector<2x120xf32> to vector<2x40xf32>
    %416 = vector.extract_strided_slice %397 {offsets = [0, 80], sizes = [2, 40], strides = [1, 1]} : vector<2x120xf32> to vector<2x40xf32>
    %417 = arith.addf %416, %296 : vector<2x40xf32>
    %418 = arith.mulf %406, %417 : vector<2x40xf32>
    %419 = arith.addf %415, %418 : vector<2x40xf32>
    %420 = math.tanh %419 : vector<2x40xf32>
    %cst_111 = arith.constant 1.000000e+00 : f32
    %421 = vector.broadcast %cst_111 : f32 to vector<2x40xf32>
    %422 = arith.subf %421, %414 : vector<2x40xf32>
    %423 = arith.mulf %422, %420 : vector<2x40xf32>
    %424 = arith.mulf %414, %392 : vector<2x40xf32>
    %425 = arith.addf %423, %424 : vector<2x40xf32>
    %426 = vector.extract_strided_slice %425 {offsets = [0, 0], sizes = [2, 20], strides = [1, 1]} : vector<2x40xf32> to vector<2x20xf32>
    %c6_112 = arith.constant 6 : index
    %c0_113 = arith.constant 0 : index
    %427 = vector.load %arg27[%c6_112, %c0_113] : memref<16x40xf32, #tpu.memory_space<vmem>>, vector<2x20xf32>
    tpu.vector_store %arg27[%c6_112, %c0_113], %426 {strides = array<i32>} : memref<16x40xf32, #tpu.memory_space<vmem>>, vector<2x20xf32>,
    %428 = vector.extract_strided_slice %425 {offsets = [0, 20], sizes = [2, 20], strides = [1, 1]} : vector<2x40xf32> to vector<2x20xf32>
    %c8_114 = arith.constant 8 : index
    %c20_115 = arith.constant 20 : index
    %429 = vector.load %arg27[%c8_114, %c20_115] : memref<16x40xf32, #tpu.memory_space<vmem>>, vector<2x20xf32>
    tpu.vector_store %arg27[%c8_114, %c20_115], %428 {strides = array<i32>} : memref<16x40xf32, #tpu.memory_space<vmem>>, vector<2x20xf32>,
    %cst_116 = arith.constant dense<0.000000e+00> : vector<2x120xf32>
    %430 = tpu.matmul %425, %286, %cst_116 {dimension_numbers = #tpu.dot_dimension_numbers<[1], [0], [0], [1], [0, 0, 1, 1], [], []>} : vector<2x40xf32>, vector<40x120xf32>, vector<2x120xf32> -> vector<2x120xf32>
    %431 = vector.extract_strided_slice %293 {offsets = [8, 0], sizes = [2, 120], strides = [1, 1]} : vector<16x120xf32> to vector<2x120xf32>
    %432 = vector.extract_strided_slice %431 {offsets = [0, 0], sizes = [2, 40], strides = [1, 1]} : vector<2x120xf32> to vector<2x40xf32>
    %433 = vector.extract_strided_slice %430 {offsets = [0, 0], sizes = [2, 40], strides = [1, 1]} : vector<2x120xf32> to vector<2x40xf32>
    %434 = arith.addf %432, %433 : vector<2x40xf32>
    %435 = arith.negf %434 : vector<2x40xf32>
    %436 = math.exp %435 : vector<2x40xf32>
    %cst_117 = arith.constant 1.000000e+00 : f32
    %437 = vector.broadcast %cst_117 : f32 to vector<2x40xf32>
    %438 = arith.addf %437, %436 : vector<2x40xf32>
    %439 = arith.divf %437, %438 : vector<2x40xf32>
    %440 = vector.extract_strided_slice %431 {offsets = [0, 40], sizes = [2, 40], strides = [1, 1]} : vector<2x120xf32> to vector<2x40xf32>
    %441 = vector.extract_strided_slice %430 {offsets = [0, 40], sizes = [2, 40], strides = [1, 1]} : vector<2x120xf32> to vector<2x40xf32>
    %442 = arith.addf %440, %441 : vector<2x40xf32>
    %443 = arith.negf %442 : vector<2x40xf32>
    %444 = math.exp %443 : vector<2x40xf32>
    %cst_118 = arith.constant 1.000000e+00 : f32
    %445 = vector.broadcast %cst_118 : f32 to vector<2x40xf32>
    %446 = arith.addf %445, %444 : vector<2x40xf32>
    %447 = arith.divf %445, %446 : vector<2x40xf32>
    %448 = vector.extract_strided_slice %431 {offsets = [0, 80], sizes = [2, 40], strides = [1, 1]} : vector<2x120xf32> to vector<2x40xf32>
    %449 = vector.extract_strided_slice %430 {offsets = [0, 80], sizes = [2, 40], strides = [1, 1]} : vector<2x120xf32> to vector<2x40xf32>
    %450 = arith.addf %449, %296 : vector<2x40xf32>
    %451 = arith.mulf %439, %450 : vector<2x40xf32>
    %452 = arith.addf %448, %451 : vector<2x40xf32>
    %453 = math.tanh %452 : vector<2x40xf32>
    %cst_119 = arith.constant 1.000000e+00 : f32
    %454 = vector.broadcast %cst_119 : f32 to vector<2x40xf32>
    %455 = arith.subf %454, %447 : vector<2x40xf32>
    %456 = arith.mulf %455, %453 : vector<2x40xf32>
    %457 = arith.mulf %447, %425 : vector<2x40xf32>
    %458 = arith.addf %456, %457 : vector<2x40xf32>
    %459 = vector.extract_strided_slice %458 {offsets = [0, 0], sizes = [2, 20], strides = [1, 1]} : vector<2x40xf32> to vector<2x20xf32>
    %c8_120 = arith.constant 8 : index
    %c0_121 = arith.constant 0 : index
    %460 = vector.load %arg27[%c8_120, %c0_121] : memref<16x40xf32, #tpu.memory_space<vmem>>, vector<2x20xf32>
    tpu.vector_store %arg27[%c8_120, %c0_121], %459 {strides = array<i32>} : memref<16x40xf32, #tpu.memory_space<vmem>>, vector<2x20xf32>,
    %461 = vector.extract_strided_slice %458 {offsets = [0, 20], sizes = [2, 20], strides = [1, 1]} : vector<2x40xf32> to vector<2x20xf32>
    %c6_122 = arith.constant 6 : index
    %c20_123 = arith.constant 20 : index
    %462 = vector.load %arg27[%c6_122, %c20_123] : memref<16x40xf32, #tpu.memory_space<vmem>>, vector<2x20xf32>
    tpu.vector_store %arg27[%c6_122, %c20_123], %461 {strides = array<i32>} : memref<16x40xf32, #tpu.memory_space<vmem>>, vector<2x20xf32>,
    %cst_124 = arith.constant dense<0.000000e+00> : vector<2x120xf32>
    %463 = tpu.matmul %458, %286, %cst_124 {dimension_numbers = #tpu.dot_dimension_numbers<[1], [0], [0], [1], [0, 0, 1, 1], [], []>} : vector<2x40xf32>, vector<40x120xf32>, vector<2x120xf32> -> vector<2x120xf32>
    %464 = vector.extract_strided_slice %293 {offsets = [10, 0], sizes = [2, 120], strides = [1, 1]} : vector<16x120xf32> to vector<2x120xf32>
    %465 = vector.extract_strided_slice %464 {offsets = [0, 0], sizes = [2, 40], strides = [1, 1]} : vector<2x120xf32> to vector<2x40xf32>
    %466 = vector.extract_strided_slice %463 {offsets = [0, 0], sizes = [2, 40], strides = [1, 1]} : vector<2x120xf32> to vector<2x40xf32>
    %467 = arith.addf %465, %466 : vector<2x40xf32>
    %468 = arith.negf %467 : vector<2x40xf32>
    %469 = math.exp %468 : vector<2x40xf32>
    %cst_125 = arith.constant 1.000000e+00 : f32
    %470 = vector.broadcast %cst_125 : f32 to vector<2x40xf32>
    %471 = arith.addf %470, %469 : vector<2x40xf32>
    %472 = arith.divf %470, %471 : vector<2x40xf32>
    %473 = vector.extract_strided_slice %464 {offsets = [0, 40], sizes = [2, 40], strides = [1, 1]} : vector<2x120xf32> to vector<2x40xf32>
    %474 = vector.extract_strided_slice %463 {offsets = [0, 40], sizes = [2, 40], strides = [1, 1]} : vector<2x120xf32> to vector<2x40xf32>
    %475 = arith.addf %473, %474 : vector<2x40xf32>
    %476 = arith.negf %475 : vector<2x40xf32>
    %477 = math.exp %476 : vector<2x40xf32>
    %cst_126 = arith.constant 1.000000e+00 : f32
    %478 = vector.broadcast %cst_126 : f32 to vector<2x40xf32>
    %479 = arith.addf %478, %477 : vector<2x40xf32>
    %480 = arith.divf %478, %479 : vector<2x40xf32>
    %481 = vector.extract_strided_slice %464 {offsets = [0, 80], sizes = [2, 40], strides = [1, 1]} : vector<2x120xf32> to vector<2x40xf32>
    %482 = vector.extract_strided_slice %463 {offsets = [0, 80], sizes = [2, 40], strides = [1, 1]} : vector<2x120xf32> to vector<2x40xf32>
    %483 = arith.addf %482, %296 : vector<2x40xf32>
    %484 = arith.mulf %472, %483 : vector<2x40xf32>
    %485 = arith.addf %481, %484 : vector<2x40xf32>
    %486 = math.tanh %485 : vector<2x40xf32>
    %cst_127 = arith.constant 1.000000e+00 : f32
    %487 = vector.broadcast %cst_127 : f32 to vector<2x40xf32>
    %488 = arith.subf %487, %480 : vector<2x40xf32>
    %489 = arith.mulf %488, %486 : vector<2x40xf32>
    %490 = arith.mulf %480, %458 : vector<2x40xf32>
    %491 = arith.addf %489, %490 : vector<2x40xf32>
    %492 = vector.extract_strided_slice %491 {offsets = [0, 0], sizes = [2, 20], strides = [1, 1]} : vector<2x40xf32> to vector<2x20xf32>
    %c10_128 = arith.constant 10 : index
    %c0_129 = arith.constant 0 : index
    %493 = vector.load %arg27[%c10_128, %c0_129] : memref<16x40xf32, #tpu.memory_space<vmem>>, vector<2x20xf32>
    tpu.vector_store %arg27[%c10_128, %c0_129], %492 {strides = array<i32>} : memref<16x40xf32, #tpu.memory_space<vmem>>, vector<2x20xf32>,
    %494 = vector.extract_strided_slice %491 {offsets = [0, 20], sizes = [2, 20], strides = [1, 1]} : vector<2x40xf32> to vector<2x20xf32>
    %c4_130 = arith.constant 4 : index
    %c20_131 = arith.constant 20 : index
    %495 = vector.load %arg27[%c4_130, %c20_131] : memref<16x40xf32, #tpu.memory_space<vmem>>, vector<2x20xf32>
    tpu.vector_store %arg27[%c4_130, %c20_131], %494 {strides = array<i32>} : memref<16x40xf32, #tpu.memory_space<vmem>>, vector<2x20xf32>,
    %cst_132 = arith.constant dense<0.000000e+00> : vector<2x120xf32>
    %496 = tpu.matmul %491, %286, %cst_132 {dimension_numbers = #tpu.dot_dimension_numbers<[1], [0], [0], [1], [0, 0, 1, 1], [], []>} : vector<2x40xf32>, vector<40x120xf32>, vector<2x120xf32> -> vector<2x120xf32>
    %497 = vector.extract_strided_slice %293 {offsets = [12, 0], sizes = [2, 120], strides = [1, 1]} : vector<16x120xf32> to vector<2x120xf32>
    %498 = vector.extract_strided_slice %497 {offsets = [0, 0], sizes = [2, 40], strides = [1, 1]} : vector<2x120xf32> to vector<2x40xf32>
    %499 = vector.extract_strided_slice %496 {offsets = [0, 0], sizes = [2, 40], strides = [1, 1]} : vector<2x120xf32> to vector<2x40xf32>
    %500 = arith.addf %498, %499 : vector<2x40xf32>
    %501 = arith.negf %500 : vector<2x40xf32>
    %502 = math.exp %501 : vector<2x40xf32>
    %cst_133 = arith.constant 1.000000e+00 : f32
    %503 = vector.broadcast %cst_133 : f32 to vector<2x40xf32>
    %504 = arith.addf %503, %502 : vector<2x40xf32>
    %505 = arith.divf %503, %504 : vector<2x40xf32>
    %506 = vector.extract_strided_slice %497 {offsets = [0, 40], sizes = [2, 40], strides = [1, 1]} : vector<2x120xf32> to vector<2x40xf32>
    %507 = vector.extract_strided_slice %496 {offsets = [0, 40], sizes = [2, 40], strides = [1, 1]} : vector<2x120xf32> to vector<2x40xf32>
    %508 = arith.addf %506, %507 : vector<2x40xf32>
    %509 = arith.negf %508 : vector<2x40xf32>
    %510 = math.exp %509 : vector<2x40xf32>
    %cst_134 = arith.constant 1.000000e+00 : f32
    %511 = vector.broadcast %cst_134 : f32 to vector<2x40xf32>
    %512 = arith.addf %511, %510 : vector<2x40xf32>
    %513 = arith.divf %511, %512 : vector<2x40xf32>
    %514 = vector.extract_strided_slice %497 {offsets = [0, 80], sizes = [2, 40], strides = [1, 1]} : vector<2x120xf32> to vector<2x40xf32>
    %515 = vector.extract_strided_slice %496 {offsets = [0, 80], sizes = [2, 40], strides = [1, 1]} : vector<2x120xf32> to vector<2x40xf32>
    %516 = arith.addf %515, %296 : vector<2x40xf32>
    %517 = arith.mulf %505, %516 : vector<2x40xf32>
    %518 = arith.addf %514, %517 : vector<2x40xf32>
    %519 = math.tanh %518 : vector<2x40xf32>
    %cst_135 = arith.constant 1.000000e+00 : f32
    %520 = vector.broadcast %cst_135 : f32 to vector<2x40xf32>
    %521 = arith.subf %520, %513 : vector<2x40xf32>
    %522 = arith.mulf %521, %519 : vector<2x40xf32>
    %523 = arith.mulf %513, %491 : vector<2x40xf32>
    %524 = arith.addf %522, %523 : vector<2x40xf32>
    %525 = vector.extract_strided_slice %524 {offsets = [0, 0], sizes = [2, 20], strides = [1, 1]} : vector<2x40xf32> to vector<2x20xf32>
    %c12_136 = arith.constant 12 : index
    %c0_137 = arith.constant 0 : index
    %526 = vector.load %arg27[%c12_136, %c0_137] : memref<16x40xf32, #tpu.memory_space<vmem>>, vector<2x20xf32>
    tpu.vector_store %arg27[%c12_136, %c0_137], %525 {strides = array<i32>} : memref<16x40xf32, #tpu.memory_space<vmem>>, vector<2x20xf32>,
    %527 = vector.extract_strided_slice %524 {offsets = [0, 20], sizes = [2, 20], strides = [1, 1]} : vector<2x40xf32> to vector<2x20xf32>
    %c2_138 = arith.constant 2 : index
    %c20_139 = arith.constant 20 : index
    %528 = vector.load %arg27[%c2_138, %c20_139] : memref<16x40xf32, #tpu.memory_space<vmem>>, vector<2x20xf32>
    tpu.vector_store %arg27[%c2_138, %c20_139], %527 {strides = array<i32>} : memref<16x40xf32, #tpu.memory_space<vmem>>, vector<2x20xf32>,
    %cst_140 = arith.constant dense<0.000000e+00> : vector<2x120xf32>
    %529 = tpu.matmul %524, %286, %cst_140 {dimension_numbers = #tpu.dot_dimension_numbers<[1], [0], [0], [1], [0, 0, 1, 1], [], []>} : vector<2x40xf32>, vector<40x120xf32>, vector<2x120xf32> -> vector<2x120xf32>
    %530 = vector.extract_strided_slice %293 {offsets = [14, 0], sizes = [2, 120], strides = [1, 1]} : vector<16x120xf32> to vector<2x120xf32>
    %531 = vector.extract_strided_slice %530 {offsets = [0, 0], sizes = [2, 40], strides = [1, 1]} : vector<2x120xf32> to vector<2x40xf32>
    %532 = vector.extract_strided_slice %529 {offsets = [0, 0], sizes = [2, 40], strides = [1, 1]} : vector<2x120xf32> to vector<2x40xf32>
    %533 = arith.addf %531, %532 : vector<2x40xf32>
    %534 = arith.negf %533 : vector<2x40xf32>
    %535 = math.exp %534 : vector<2x40xf32>
    %cst_141 = arith.constant 1.000000e+00 : f32
    %536 = vector.broadcast %cst_141 : f32 to vector<2x40xf32>
    %537 = arith.addf %536, %535 : vector<2x40xf32>
    %538 = arith.divf %536, %537 : vector<2x40xf32>
    %539 = vector.extract_strided_slice %530 {offsets = [0, 40], sizes = [2, 40], strides = [1, 1]} : vector<2x120xf32> to vector<2x40xf32>
    %540 = vector.extract_strided_slice %529 {offsets = [0, 40], sizes = [2, 40], strides = [1, 1]} : vector<2x120xf32> to vector<2x40xf32>
    %541 = arith.addf %539, %540 : vector<2x40xf32>
    %542 = arith.negf %541 : vector<2x40xf32>
    %543 = math.exp %542 : vector<2x40xf32>
    %cst_142 = arith.constant 1.000000e+00 : f32
    %544 = vector.broadcast %cst_142 : f32 to vector<2x40xf32>
    %545 = arith.addf %544, %543 : vector<2x40xf32>
    %546 = arith.divf %544, %545 : vector<2x40xf32>
    %547 = vector.extract_strided_slice %530 {offsets = [0, 80], sizes = [2, 40], strides = [1, 1]} : vector<2x120xf32> to vector<2x40xf32>
    %548 = vector.extract_strided_slice %529 {offsets = [0, 80], sizes = [2, 40], strides = [1, 1]} : vector<2x120xf32> to vector<2x40xf32>
    %549 = arith.addf %548, %296 : vector<2x40xf32>
    %550 = arith.mulf %538, %549 : vector<2x40xf32>
    %551 = arith.addf %547, %550 : vector<2x40xf32>
    %552 = math.tanh %551 : vector<2x40xf32>
    %cst_143 = arith.constant 1.000000e+00 : f32
    %553 = vector.broadcast %cst_143 : f32 to vector<2x40xf32>
    %554 = arith.subf %553, %546 : vector<2x40xf32>
    %555 = arith.mulf %554, %552 : vector<2x40xf32>
    %556 = arith.mulf %546, %524 : vector<2x40xf32>
    %557 = arith.addf %555, %556 : vector<2x40xf32>
    %558 = vector.extract_strided_slice %557 {offsets = [0, 0], sizes = [2, 20], strides = [1, 1]} : vector<2x40xf32> to vector<2x20xf32>
    %c14_144 = arith.constant 14 : index
    %c0_145 = arith.constant 0 : index
    %559 = vector.load %arg27[%c14_144, %c0_145] : memref<16x40xf32, #tpu.memory_space<vmem>>, vector<2x20xf32>
    tpu.vector_store %arg27[%c14_144, %c0_145], %558 {strides = array<i32>} : memref<16x40xf32, #tpu.memory_space<vmem>>, vector<2x20xf32>,
    %560 = vector.extract_strided_slice %557 {offsets = [0, 20], sizes = [2, 20], strides = [1, 1]} : vector<2x40xf32> to vector<2x20xf32>
    %c0_146 = arith.constant 0 : index
    %c20_147 = arith.constant 20 : index
    %561 = vector.load %arg27[%c0_146, %c20_147] : memref<16x40xf32, #tpu.memory_space<vmem>>, vector<2x20xf32>
    tpu.vector_store %arg27[%c0_146, %c20_147], %560 {strides = array<i32>} : memref<16x40xf32, #tpu.memory_space<vmem>>, vector<2x20xf32>,
    %c0_148 = arith.constant 0 : index
    %c0_149 = arith.constant 0 : index
    %562 = vector.load %arg27[%c0_148, %c0_149] : memref<16x40xf32, #tpu.memory_space<vmem>>, vector<16x40xf32>
    %c0_150 = arith.constant 0 : index
    %c0_151 = arith.constant 0 : index
    %563 = vector.load %arg14[%c0_150, %c0_151] : memref<40x120xf32, #tpu.memory_space<vmem>>, vector<40x120xf32>
    %cst_152 = arith.constant dense<0.000000e+00> : vector<16x120xf32>
    %564 = tpu.matmul %562, %563, %cst_152 {dimension_numbers = #tpu.dot_dimension_numbers<[1], [0], [0], [1], [0, 0, 1, 1], [], []>} : vector<16x40xf32>, vector<40x120xf32>, vector<16x120xf32> -> vector<16x120xf32>
    %c0_153 = arith.constant 0 : index
    %c0_154 = arith.constant 0 : index
    %565 = vector.load %arg15[%c0_153, %c0_154] : memref<1x120xf32, #tpu.memory_space<vmem>>, vector<1x120xf32>
    %566 = vector.broadcast %565 : vector<1x120xf32> to vector<16x120xf32>
    %567 = arith.addf %564, %566 : vector<16x120xf32>
    %568 = vector.extract_strided_slice %567 {offsets = [0, 0], sizes = [16, 40], strides = [1, 1]} : vector<16x120xf32> to vector<16x40xf32>
    %569 = vector.extract_strided_slice %567 {offsets = [0, 40], sizes = [16, 40], strides = [1, 1]} : vector<16x120xf32> to vector<16x40xf32>
    %570 = vector.extract_strided_slice %567 {offsets = [0, 80], sizes = [16, 40], strides = [1, 1]} : vector<16x120xf32> to vector<16x40xf32>
    %571 = tpu.transpose %569, [1, 0] : vector<16x40xf32> -> vector<40x16xf32>
    %cst_155 = arith.constant dense<0.000000e+00> : vector<16x16xf32>
    %572 = tpu.matmul %568, %571, %cst_155 {dimension_numbers = #tpu.dot_dimension_numbers<[1], [0], [0], [1], [0, 0, 1, 1], [], []>} : vector<16x40xf32>, vector<40x16xf32>, vector<16x16xf32> -> vector<16x16xf32>
    %cst_156 = arith.constant 0.158113882 : f32
    %573 = vector.broadcast %cst_156 : f32 to vector<16x16xf32>
    %574 = arith.mulf %572, %573 : vector<16x16xf32>
    %c0_157 = arith.constant 0 : index
    %c0_158 = arith.constant 0 : index
    %575 = vector.load %arg4[%c0_157, %c0_158] : memref<16x16xf32, #tpu.memory_space<vmem>>, vector<16x16xf32>
    %576 = arith.addf %574, %575 : vector<16x16xf32>
    %cst_159 = arith.constant dense<0xFF800000> : vector<16xf32>
    %577 = vector.multi_reduction <maximumf>, %576, %cst_159 [1] : vector<16x16xf32> to vector<16xf32>
    %578 = vector.shape_cast %577 : vector<16xf32> to vector<16x1xf32>
    %579 = vector.broadcast %578 : vector<16x1xf32> to vector<16x16xf32>
    %580 = arith.subf %576, %579 : vector<16x16xf32>
    %581 = math.exp %580 : vector<16x16xf32>
    %cst_160 = arith.constant dense<0.000000e+00> : vector<16xf32>
    %582 = vector.multi_reduction <add>, %581, %cst_160 [1] : vector<16x16xf32> to vector<16xf32>
    %583 = vector.shape_cast %582 : vector<16xf32> to vector<16x1xf32>
    %584 = tpu.reciprocal %583 {approx = true} : vector<16x1xf32> -> vector<16x1xf32>
    %585 = vector.broadcast %584 : vector<16x1xf32> to vector<16x16xf32>
    %586 = arith.mulf %581, %585 : vector<16x16xf32>
    %c0_161 = arith.constant 0 : index
    %c0_162 = arith.constant 0 : index
    %587 = vector.load %arg5[%c0_161, %c0_162] : memref<2x16xf32, #tpu.memory_space<vmem>>, vector<2x16xf32>
    %cst_163 = arith.constant dense<0.000000e+00> : vector<2x16xf32>
    %588 = tpu.matmul %587, %586, %cst_163 {dimension_numbers = #tpu.dot_dimension_numbers<[1], [0], [0], [1], [0, 0, 1, 1], [], []>} : vector<2x16xf32>, vector<16x16xf32>, vector<2x16xf32> -> vector<2x16xf32>
    %cst_164 = arith.constant dense<0.000000e+00> : vector<2x40xf32>
    %589 = tpu.matmul %588, %570, %cst_164 {dimension_numbers = #tpu.dot_dimension_numbers<[1], [0], [0], [1], [0, 0, 1, 1], [], []>} : vector<2x16xf32>, vector<16x40xf32>, vector<2x40xf32> -> vector<2x40xf32>
    %c0_165 = arith.constant 0 : index
    %c0_166 = arith.constant 0 : index
    %590 = vector.load %arg16[%c0_165, %c0_166] : memref<40x50xf32, #tpu.memory_space<vmem>>, vector<40x50xf32>
    %cst_167 = arith.constant dense<0.000000e+00> : vector<2x50xf32>
    %591 = tpu.matmul %589, %590, %cst_167 {dimension_numbers = #tpu.dot_dimension_numbers<[1], [0], [0], [1], [0, 0, 1, 1], [], []>} : vector<2x40xf32>, vector<40x50xf32>, vector<2x50xf32> -> vector<2x50xf32>
    %c0_168 = arith.constant 0 : index
    %c0_169 = arith.constant 0 : index
    %592 = vector.load %arg1[%c0_168, %c0_169] : memref<2x4xf32, #tpu.memory_space<vmem>>, vector<2x4xf32>
    %c0_170 = arith.constant 0 : index
    %c0_171 = arith.constant 0 : index
    %593 = vector.load %arg17[%c0_170, %c0_171] : memref<4x50xf32, #tpu.memory_space<vmem>>, vector<4x50xf32>
    %cst_172 = arith.constant dense<0.000000e+00> : vector<2x50xf32>
    %594 = tpu.matmul %592, %593, %cst_172 {dimension_numbers = #tpu.dot_dimension_numbers<[1], [0], [0], [1], [0, 0, 1, 1], [], []>} : vector<2x4xf32>, vector<4x50xf32>, vector<2x50xf32> -> vector<2x50xf32>
    %595 = arith.addf %591, %594 : vector<2x50xf32>
    %c0_173 = arith.constant 0 : index
    %c0_174 = arith.constant 0 : index
    %596 = vector.load %arg18[%c0_173, %c0_174] : memref<1x50xf32, #tpu.memory_space<vmem>>, vector<1x50xf32>
    %597 = vector.broadcast %596 : vector<1x50xf32> to vector<2x50xf32>
    %598 = arith.addf %595, %597 : vector<2x50xf32>
    %599 = math.tanh %598 : vector<2x50xf32>
    %c0_175 = arith.constant 0 : index
    %c0_176 = arith.constant 0 : index
    %600 = vector.load %arg19[%c0_175, %c0_176] : memref<50x20xf32, #tpu.memory_space<vmem>>, vector<50x20xf32>
    %cst_177 = arith.constant dense<0.000000e+00> : vector<2x20xf32>
    %601 = tpu.matmul %599, %600, %cst_177 {dimension_numbers = #tpu.dot_dimension_numbers<[1], [0], [0], [1], [0, 0, 1, 1], [], []>} : vector<2x50xf32>, vector<50x20xf32>, vector<2x20xf32> -> vector<2x20xf32>
    %c0_178 = arith.constant 0 : index
    %c0_179 = arith.constant 0 : index
    %602 = vector.load %arg20[%c0_178, %c0_179] : memref<1x20xf32, #tpu.memory_space<vmem>>, vector<1x20xf32>
    %603 = vector.broadcast %602 : vector<1x20xf32> to vector<2x20xf32>
    %604 = arith.addf %601, %603 : vector<2x20xf32>
    %cst_180 = arith.constant 0.000000e+00 : f32
    %605 = vector.broadcast %cst_180 : f32 to vector<2x20xf32>
    %606 = arith.maximumf %604, %605 : vector<2x20xf32>
    %c0_181 = arith.constant 0 : index
    %c0_182 = arith.constant 0 : index
    %607 = vector.load %arg21[%c0_181, %c0_182] : memref<20x3xf32, #tpu.memory_space<vmem>>, vector<20x3xf32>
    %cst_183 = arith.constant dense<0.000000e+00> : vector<2x3xf32>
    %608 = tpu.matmul %606, %607, %cst_183 {dimension_numbers = #tpu.dot_dimension_numbers<[1], [0], [0], [1], [0, 0, 1, 1], [], []>} : vector<2x20xf32>, vector<20x3xf32>, vector<2x3xf32> -> vector<2x3xf32>
    %c0_184 = arith.constant 0 : index
    %c0_185 = arith.constant 0 : index
    %609 = vector.load %arg22[%c0_184, %c0_185] : memref<1x3xf32, #tpu.memory_space<vmem>>, vector<1x3xf32>
    %610 = vector.broadcast %609 : vector<1x3xf32> to vector<2x3xf32>
    %611 = arith.addf %608, %610 : vector<2x3xf32>
    %c0_186 = arith.constant 0 : index
    %c0_187 = arith.constant 0 : index
    %612 = vector.load %arg23[%c0_186, %c0_187] : memref<1x3xf32, #tpu.memory_space<vmem>>, vector<1x3xf32>
    %c0_188 = arith.constant 0 : index
    %c0_189 = arith.constant 0 : index
    %613 = vector.load %arg24[%c0_188, %c0_189] : memref<1x3xf32, #tpu.memory_space<vmem>>, vector<1x3xf32>
    %614 = arith.subf %613, %612 : vector<1x3xf32>
    %615 = arith.negf %611 : vector<2x3xf32>
    %616 = math.exp %615 : vector<2x3xf32>
    %cst_190 = arith.constant 1.000000e+00 : f32
    %617 = vector.broadcast %cst_190 : f32 to vector<2x3xf32>
    %618 = arith.addf %617, %616 : vector<2x3xf32>
    %619 = arith.divf %617, %618 : vector<2x3xf32>
    %620 = vector.broadcast %614 : vector<1x3xf32> to vector<2x3xf32>
    %621 = arith.mulf %620, %619 : vector<2x3xf32>
    %622 = vector.broadcast %612 : vector<1x3xf32> to vector<2x3xf32>
    %623 = arith.addf %622, %621 : vector<2x3xf32>
    %c0_191 = arith.constant 0 : index
    %c0_192 = arith.constant 0 : index
    %624 = vector.load %arg25[%c0_191, %c0_192] : memref<2x3xf32, #tpu.memory_space<vmem>>, vector<2x3xf32>
    tpu.vector_store %arg25[%c0_191, %c0_192], %623 {strides = array<i32>} : memref<2x3xf32, #tpu.memory_space<vmem>>, vector<2x3xf32>,
    return
  }
}

</mosaic_0001>

<llo_original>
// kernel: param_model_forward.1
$region0: #{param_model_forward.1}
  #allocation0 [shape = 'u32[]', space=smem, size = 0x4, offset = 0x4, fixed_abs, tag = 'smem constant byte address 0x4 - core index']
  #allocation1 [shape = 'u32[144,128]{1,0:T(1,128)}', space=vmem, size = 0x12000, scoped, tag = 'internal scratch']
  #allocation2 [shape = 'f32[16,40]{1,0:T(8,128)}', space=vmem, size = 0x2000, scoped, tag = 'scratch operand']
  #allocation3 [shape = 'f32[16,40]{1,0:T(8,128)}', space=vmem, size = 0x2000, scoped, tag = 'scratch operand']
  %s0 = inlined_call_operand.vmem [shape: f32[16,4], index: 0, kind: input, shape index: {}]
  %s1 = inlined_call_operand.vmem [shape: f32[2,4], index: 1, kind: input, shape index: {}]
  %s2 = inlined_call_operand.vmem [shape: f32[1,120], index: 2, kind: input, shape index: {}]
  %s3 = inlined_call_operand.vmem [shape: f32[16,16], index: 3, kind: input, shape index: {}]
  %s4 = inlined_call_operand.vmem [shape: f32[16,16], index: 4, kind: input, shape index: {}]
  %s5 = inlined_call_operand.vmem [shape: f32[2,16], index: 5, kind: input, shape index: {}]
  %s6 = inlined_call_operand.hbm [shape: f32[4,120], index: 6, kind: input, shape index: {}]
  %s7 = inlined_call_operand.hbm [shape: f32[1,120], index: 7, kind: input, shape index: {}]
  %s8 = inlined_call_operand.vmem [shape: f32[40,120], index: 8, kind: input, shape index: {}]
  %s9 = inlined_call_operand.vmem [shape: f32[1,40], index: 9, kind: input, shape index: {}]
  %s10 = inlined_call_operand.vmem [shape: f32[40,120], index: 10, kind: input, shape index: {}]
  %s11 = inlined_call_operand.hbm [shape: f32[1,120], index: 11, kind: input, shape index: {}]
  %s12 = inlined_call_operand.vmem [shape: f32[40,120], index: 12, kind: input, shape index: {}]
  %s13 = inlined_call_operand.hbm [shape: f32[1,40], index: 13, kind: input, shape index: {}]
  %s14 = inlined_call_operand.vmem [shape: f32[40,120], index: 14, kind: input, shape index: {}]
  %s15 = inlined_call_operand.hbm [shape: f32[1,120], index: 15, kind: input, shape index: {}]
  %s16 = inlined_call_operand.hbm [shape: f32[40,50], index: 16, kind: input, shape index: {}]
  %s17 = inlined_call_operand.hbm [shape: f32[4,50], index: 17, kind: input, shape index: {}]
  %s18 = inlined_call_operand.vmem [shape: f32[1,50], index: 18, kind: input, shape index: {}]
  %s19 = inlined_call_operand.vmem [shape: f32[50,20], index: 19, kind: input, shape index: {}]
  %s20 = inlined_call_operand.vmem [shape: f32[1,20], index: 20, kind: input, shape index: {}]
  %s21 = inlined_call_operand.vmem [shape: f32[20,3], index: 21, kind: input, shape index: {}]
  %s22 = inlined_call_operand.vmem [shape: f32[1,3], index: 22, kind: input, shape index: {}]
  %s23 = inlined_call_operand.vmem [shape: f32[1,3], index: 23, kind: input, shape index: {}]
  %s24 = inlined_call_operand.vmem [shape: f32[1,3], index: 24, kind: input, shape index: {}]
  %s25 = inlined_call_operand.hbm [shape: f32[2,3], index: 25, kind: output, shape index: {}]
  %s26 = sld [smem:[#allocation0]]
  $region138: #{param_model_forward.1} parent=0
    _
  %s28 = ssub.s32 1, %s26
  %s29 = scalar_select 0, %s28, %s26
  $region1: #{param_model_forward.1} parent=0
    #allocation4 [shape = 'u8[2048]{0}', space=vmem, size = 0x800, scoped, tag = 'input window, operand 6, single buffered']
    #allocation5 [shape = 's32[1]{0}', space=sflag, size = 0x4, scoped, tag = 'scoped memory for param_model_forward.1']
    #allocation6 [shape = 's32[1]{0}', space=sflag, size = 0x4, scoped, tag = 'scoped memory for param_model_forward.1']
    #allocation7 [shape = 'u8[512]{0}', space=vmem, size = 0x400, scoped, tag = 'input window, operand 7, single buffered']
    #allocation8 [shape = 's32[1]{0}', space=sflag, size = 0x4, scoped, tag = 'scoped memory for param_model_forward.1']
    #allocation9 [shape = 'u8[512]{0}', space=vmem, size = 0x400, scoped, tag = 'input window, operand 11, single buffered']
    #allocation10 [shape = 'u8[512]{0}', space=vmem, size = 0x400, scoped, tag = 'input window, operand 13, single buffered']
    #allocation11 [shape = 's32[1]{0}', space=sflag, size = 0x4, scoped, tag = 'scoped memory for param_model_forward.1']
    #allocation12 [shape = 'u8[512]{0}', space=vmem, size = 0x400, scoped, tag = 'input window, operand 15, single buffered']
    #allocation13 [shape = 'u8[20480]{0}', space=vmem, size = 0x5000, scoped, tag = 'input window, operand 16, single buffered']
    #allocation14 [shape = 's32[1]{0}', space=sflag, size = 0x4, scoped, tag = 'scoped memory for param_model_forward.1']
    #allocation15 [shape = 'u8[2048]{0}', space=vmem, size = 0x800, scoped, tag = 'input window, operand 17, single buffered']
    #allocation16 [shape = 'u8[1024]{0}', space=vmem, size = 0x400, scoped, tag = 'output window, operand 0, single buffered']
    %30 = vsyncpa [#allocation5], 0
    %31 = vsyncpa [#allocation8], 0
    %32 = vsyncpa [#allocation11], 0
    %33 = vsyncpa [#allocation14], 0
    %34 = vsyncpa [#allocation6], 0
    // Predicated region
    $region2: #{param_model_forward.1} parent=1 // pred_check
      _
    $region3: #{param_model_forward.1} parent=1 // pred_check_branch
      %36 = sbr.rel (0) target = $region5
    $region4: #{param_model_forward.1} parent=1 // pred_region
      _
    $region5: #{param_model_forward.1} parent=1 // pred_fallthru
      _
    // Predicated region
    $region6: #{param_model_forward.1} parent=1 // pred_check
      _
    $region7: #{param_model_forward.1} parent=1 // pred_check_branch
      %38 = sbr.rel (0) target = $region9
    $region8: #{param_model_forward.1} parent=1 // pred_region
      _
    $region9: #{param_model_forward.1} parent=1 // pred_fallthru
      _
    // Predicated region
    $region10: #{param_model_forward.1} parent=1 // pred_check
      _
    $region11: #{param_model_forward.1} parent=1 // pred_check_branch
      %40 = sbr.rel (0) target = $region13
    $region12: #{param_model_forward.1} parent=1 // pred_region
      _
    $region13: #{param_model_forward.1} parent=1 // pred_fallthru
      _
    // Predicated region
    $region14: #{param_model_forward.1} parent=1 // pred_check
      _
    $region15: #{param_model_forward.1} parent=1 // pred_check_branch
      %42 = sbr.rel (0) target = $region17
    $region16: #{param_model_forward.1} parent=1 // pred_region
      _
    $region17: #{param_model_forward.1} parent=1 // pred_fallthru
      _
    // Predicated region
    $region18: #{param_model_forward.1} parent=1 // pred_check
      _
    $region19: #{param_model_forward.1} parent=1 // pred_check_branch
      %44 = sbr.rel (0) target = $region21
    $region20: #{param_model_forward.1} parent=1 // pred_region
      _
    $region21: #{param_model_forward.1} parent=1 // pred_fallthru
      _
    // Predicated region
    $region22: #{param_model_forward.1} parent=1 // pred_check
      _
    $region23: #{param_model_forward.1} parent=1 // pred_check_branch
      %46 = sbr.rel (0) target = $region25
    $region24: #{param_model_forward.1} parent=1 // pred_region
      _
    $region25: #{param_model_forward.1} parent=1 // pred_fallthru
      _
    // Predicated region
    $region26: #{param_model_forward.1} parent=1 // pred_check
      _
    $region27: #{param_model_forward.1} parent=1 // pred_check_branch
      %48 = sbr.rel (0) target = $region29
    $region28: #{param_model_forward.1} parent=1 // pred_region
      %s50 = ssub.s32 64, 64
      %51 = vsyncadd [#allocation5], %s50
      %s53 = sshll.u32 [#allocation4], 4
      %s54 = int_to_ptr.vmem [resolvable:$true] %s53
      %56 = dma.hbm_to_vmem [thread:$0]  %s6, 64, %s54, [#allocation5]
    $region29: #{param_model_forward.1} parent=1 // pred_fallthru
      _
    // Predicated region
    $region30: #{param_model_forward.1} parent=1 // pred_check
      _
    $region31: #{param_model_forward.1} parent=1 // pred_check_branch
      %58 = sbr.rel (0) target = $region33
    $region32: #{param_model_forward.1} parent=1 // pred_region
      %s60 = ssub.s32 16, 16
      %61 = vsyncadd [#allocation8], %s60
      %s63 = sshll.u32 [#allocation7], 4
      %s64 = int_to_ptr.vmem [resolvable:$true] %s63
      %66 = dma.hbm_to_vmem [thread:$0]  %s7, 16, %s64, [#allocation8]
    $region33: #{param_model_forward.1} parent=1 // pred_fallthru
      _
    // Predicated region
    $region34: #{param_model_forward.1} parent=1 // pred_check
      _
    $region35: #{param_model_forward.1} parent=1 // pred_check_branch
      %68 = sbr.rel (0) target = $region37
    $region36: #{param_model_forward.1} parent=1 // pred_region
      _
    $region37: #{param_model_forward.1} parent=1 // pred_fallthru
      _
    // Predicated region
    $region38: #{param_model_forward.1} parent=1 // pred_check
      _
    $region39: #{param_model_forward.1} parent=1 // pred_check_branch
      %70 = sbr.rel (0) target = $region41
    $region40: #{param_model_forward.1} parent=1 // pred_region
      _
    $region41: #{param_model_forward.1} parent=1 // pred_fallthru
      _
    // Predicated region
    $region42: #{param_model_forward.1} parent=1 // pred_check
      _
    $region43: #{param_model_forward.1} parent=1 // pred_check_branch
      %72 = sbr.rel (0) target = $region45
    $region44: #{param_model_forward.1} parent=1 // pred_region
      _
    $region45: #{param_model_forward.1} parent=1 // pred_fallthru
      _
    // Predicated region
    $region46: #{param_model_forward.1} parent=1 // pred_check
      _
    $region47: #{param_model_forward.1} parent=1 // pred_check_branch
      %74 = sbr.rel (0) target = $region49
    $region48: #{param_model_forward.1} parent=1 // pred_region
      %s76 = ssub.s32 16, 16
      %77 = vsyncadd [#allocation8], %s76
      %s79 = sshll.u32 [#allocation9], 4
      %s80 = int_to_ptr.vmem [resolvable:$true] %s79
      %82 = dma.hbm_to_vmem [thread:$0]  %s11, 16, %s80, [#allocation8]
    $region49: #{param_model_forward.1} parent=1 // pred_fallthru
      _
    // Predicated region
    $region50: #{param_model_forward.1} parent=1 // pred_check
      _
    $region51: #{param_model_forward.1} parent=1 // pred_check_branch
      %84 = sbr.rel (0) target = $region53
    $region52: #{param_model_forward.1} parent=1 // pred_region
      _
    $region53: #{param_model_forward.1} parent=1 // pred_fallthru
      _
    // Predicated region
    $region54: #{param_model_forward.1} parent=1 // pred_check
      _
    $region55: #{param_model_forward.1} parent=1 // pred_check_branch
      %86 = sbr.rel (0) target = $region57
    $region56: #{param_model_forward.1} parent=1 // pred_region
      %s88 = ssub.s32 16, 16
      %89 = vsyncadd [#allocation11], %s88
      %s91 = sshll.u32 [#allocation10], 4
      %s92 = int_to_ptr.vmem [resolvable:$true] %s91
      %94 = dma.hbm_to_vmem [thread:$0]  %s13, 16, %s92, [#allocation11]
    $region57: #{param_model_forward.1} parent=1 // pred_fallthru
      _
    // Predicated region
    $region58: #{param_model_forward.1} parent=1 // pred_check
      _
    $region59: #{param_model_forward.1} parent=1 // pred_check_branch
      %96 = sbr.rel (0) target = $region61
    $region60: #{param_model_forward.1} parent=1 // pred_region
      _
    $region61: #{param_model_forward.1} parent=1 // pred_fallthru
      _
    // Predicated region
    $region62: #{param_model_forward.1} parent=1 // pred_check
      _
    $region63: #{param_model_forward.1} parent=1 // pred_check_branch
      %98 = sbr.rel (0) target = $region65
    $region64: #{param_model_forward.1} parent=1 // pred_region
      %s100 = ssub.s32 16, 16
      %101 = vsyncadd [#allocation11], %s100
      %s103 = sshll.u32 [#allocation12], 4
      %s104 = int_to_ptr.vmem [resolvable:$true] %s103
      %106 = dma.hbm_to_vmem [thread:$0]  %s15, 16, %s104, [#allocation11]
    $region65: #{param_model_forward.1} parent=1 // pred_fallthru
      _
    // Predicated region
    $region66: #{param_model_forward.1} parent=1 // pred_check
      _
    $region67: #{param_model_forward.1} parent=1 // pred_check_branch
      %108 = sbr.rel (0) target = $region69
    $region68: #{param_model_forward.1} parent=1 // pred_region
      %s110 = ssub.s32 640, 640
      %111 = vsyncadd [#allocation14], %s110
      %s112 = sshll.u32 [#allocation13], 4
      %s113 = int_to_ptr.vmem [resolvable:$true] %s112
      %118 = dma.hbm_to_vmem [thread:$0]  %s16, 640, %s113, [#allocation14], 128, 128, 8
    $region69: #{param_model_forward.1} parent=1 // pred_fallthru
      _
    // Predicated region
    $region70: #{param_model_forward.1} parent=1 // pred_check
      _
    $region71: #{param_model_forward.1} parent=1 // pred_check_branch
      %120 = sbr.rel (0) target = $region73
    $region72: #{param_model_forward.1} parent=1 // pred_region
      %s122 = ssub.s32 64, 64
      %123 = vsyncadd [#allocation14], %s122
      %s125 = sshll.u32 [#allocation15], 4
      %s126 = int_to_ptr.vmem [resolvable:$true] %s125
      %128 = dma.hbm_to_vmem [thread:$0]  %s17, 64, %s126, [#allocation14]
    $region73: #{param_model_forward.1} parent=1 // pred_fallthru
      _
    // Predicated region
    $region74: #{param_model_forward.1} parent=1 // pred_check
      _
    $region75: #{param_model_forward.1} parent=1 // pred_check_branch
      %130 = sbr.rel (0) target = $region77
    $region76: #{param_model_forward.1} parent=1 // pred_region
      _
    $region77: #{param_model_forward.1} parent=1 // pred_fallthru
      _
    // Predicated region
    $region78: #{param_model_forward.1} parent=1 // pred_check
      _
    $region79: #{param_model_forward.1} parent=1 // pred_check_branch
      %132 = sbr.rel (0) target = $region81
    $region80: #{param_model_forward.1} parent=1 // pred_region
      _
    $region81: #{param_model_forward.1} parent=1 // pred_fallthru
      _
    // Predicated region
    $region82: #{param_model_forward.1} parent=1 // pred_check
      _
    $region83: #{param_model_forward.1} parent=1 // pred_check_branch
      %134 = sbr.rel (0) target = $region85
    $region84: #{param_model_forward.1} parent=1 // pred_region
      _
    $region85: #{param_model_forward.1} parent=1 // pred_fallthru
      _
    // Predicated region
    $region86: #{param_model_forward.1} parent=1 // pred_check
      _
    $region87: #{param_model_forward.1} parent=1 // pred_check_branch
      %136 = sbr.rel (0) target = $region89
    $region88: #{param_model_forward.1} parent=1 // pred_region
      _
    $region89: #{param_model_forward.1} parent=1 // pred_fallthru
      _
    // Predicated region
    $region90: #{param_model_forward.1} parent=1 // pred_check
      _
    $region91: #{param_model_forward.1} parent=1 // pred_check_branch
      %138 = sbr.rel (0) target = $region93
    $region92: #{param_model_forward.1} parent=1 // pred_region
      _
    $region93: #{param_model_forward.1} parent=1 // pred_fallthru
      _
    // Predicated region
    $region94: #{param_model_forward.1} parent=1 // pred_check
      _
    $region95: #{param_model_forward.1} parent=1 // pred_check_branch
      %140 = sbr.rel (0) target = $region97
    $region96: #{param_model_forward.1} parent=1 // pred_region
      _
    $region97: #{param_model_forward.1} parent=1 // pred_fallthru
      _
    // Predicated region
    $region98: #{param_model_forward.1} parent=1 // pred_check
      _
    $region99: #{param_model_forward.1} parent=1 // pred_check_branch
      %142 = sbr.rel (0) target = $region101
    $region100: #{param_model_forward.1} parent=1 // pred_region
      _
    $region101: #{param_model_forward.1} parent=1 // pred_fallthru
      _
    // Predicated region
    $region102: #{param_model_forward.1} parent=1 // pred_check
      _
    $region103: #{param_model_forward.1} parent=1 // pred_check_branch
      %144 = sbr.rel (0) target = $region105
    $region104: #{param_model_forward.1} parent=1 // pred_region
      %145 = dma.done [#allocation5], 64
    $region105: #{param_model_forward.1} parent=1 // pred_fallthru
      _
    // Predicated region
    $region106: #{param_model_forward.1} parent=1 // pred_check
      _
    $region107: #{param_model_forward.1} parent=1 // pred_check_branch
      %147 = sbr.rel (0) target = $region109
    $region108: #{param_model_forward.1} parent=1 // pred_region
      %148 = dma.done [#allocation8], 16
    $region109: #{param_model_forward.1} parent=1 // pred_fallthru
      _
    // Predicated region
    $region110: #{param_model_forward.1} parent=1 // pred_check
      _
    $region111: #{param_model_forward.1} parent=1 // pred_check_branch
      %150 = sbr.rel (0) target = $region113
    $region112: #{param_model_forward.1} parent=1 // pred_region
      %151 = dma.done [#allocation8], 16
    $region113: #{param_model_forward.1} parent=1 // pred_fallthru
      _
    // Predicated region
    $region114: #{param_model_forward.1} parent=1 // pred_check
      _
    $region115: #{param_model_forward.1} parent=1 // pred_check_branch
      %153 = sbr.rel (0) target = $region117
    $region116: #{param_model_forward.1} parent=1 // pred_region
      %154 = dma.done [#allocation11], 16
    $region117: #{param_model_forward.1} parent=1 // pred_fallthru
      _
    // Predicated region
    $region118: #{param_model_forward.1} parent=1 // pred_check
      _
    $region119: #{param_model_forward.1} parent=1 // pred_check_branch
      %156 = sbr.rel (0) target = $region121
    $region120: #{param_model_forward.1} parent=1 // pred_region
      %157 = dma.done [#allocation11], 16
    $region121: #{param_model_forward.1} parent=1 // pred_fallthru
      _
    // Predicated region
    $region122: #{param_model_forward.1} parent=1 // pred_check
      _
    $region123: #{param_model_forward.1} parent=1 // pred_check_branch
      %159 = sbr.rel (0) target = $region125
    $region124: #{param_model_forward.1} parent=1 // pred_region
      %160 = dma.done [#allocation14], 640
    $region125: #{param_model_forward.1} parent=1 // pred_fallthru
      _
    // Predicated region
    $region126: #{param_model_forward.1} parent=1 // pred_check
      _
    $region127: #{param_model_forward.1} parent=1 // pred_check_branch
      %162 = sbr.rel (0) target = $region129
    $region128: #{param_model_forward.1} parent=1 // pred_region
      %163 = dma.done [#allocation14], 64
    $region129: #{param_model_forward.1} parent=1 // pred_fallthru
      _
    %v164 = vld [vmem:[%s2] sm:$0x1]
    %v166 = vlaneseq
    %v167 = vshrl.u32 %v166, 7
    %v168 = vsub.s32 0, %v167
    %v169 = vrot.slane %v164, %v168
    %v171 = vld [vmem:[%s3] sm:$0xff]
    %v172 = vld [vmem:[%s3 + $0x8] sm:$0xff]
    %v173 = vld [vmem:[%s0] sm:$0xff]
    %v174 = vld [vmem:[%s0 + $0x8] sm:$0xff]
    %v175 = vld [vmem:[#allocation4] sm:$0xf]
    %v176 = vld [vmem:[#allocation7] sm:$0x1]
    %v177 = vld [vmem:[%s8] sm:$0xff]
    %v178 = vld [vmem:[%s8 + $0x8] sm:$0xff]
    %v179 = vld [vmem:[%s8 + $0x10] sm:$0xff]
    %v180 = vld [vmem:[%s8 + $0x18] sm:$0xff]
    %v181 = vld [vmem:[%s8 + $0x20] sm:$0xff]
    %v183 = vlaneseq
    %v184 = vshrl.u32 %v183, 7
    %v185 = vsub.s32 0, %v184
    %v186 = vrot.slane %v176, %v185
    %vm188 = vcmask 31744
    %v190 = vsel %vm188, %v173, 0
    %v193 = vsel %vm188, %v174, 0
    %vm195 = vcmask 1043456
    %v197 = vsel %vm195, %v175, 0
    %199 = vmatprep.subr.mxu0 0.0
    %200 = vmatpush1.msra.mxu0 0.0
    %201 = vmatprep.subr.mxu0 0.0
    %202 = vmatpush1.msra.mxu0 0.0
    %203 = vmatprep.subr.mxu0 0.0
    %204 = vmatpush1.msra.mxu0 0.0
    %205 = vmatprep.subr.mxu0 0.0
    %206 = vmatpush1.msra.mxu0 0.0
    %207 = vmatprep.subr.mxu0 0.0
    %208 = vmatpush1.msra.mxu0 0.0
    %209 = vmatprep.subr.mxu0 0.0
    %210 = vmatpush1.msra.mxu0 0.0
    %211 = vmatprep.subr.mxu0 0.0
    %212 = vmatpush1.msra.mxu0 0.0
    %213 = vmatprep.subr.mxu0 0.0
    %214 = vmatpush1.msra.mxu0 0.0
    %215 = vmatprep.subr.mxu0 0.0
    %216 = vmatpush1.msra.mxu0 0.0
    %217 = vmatprep.subr.mxu0 0.0
    %218 = vmatpush1.msra.mxu0 0.0
    %219 = vmatprep.subr.mxu0 0.0
    %220 = vmatpush1.msra.mxu0 0.0
    %221 = vmatprep.subr.mxu0 0.0
    %222 = vmatpush1.msra.mxu0 0.0
    %223 = vmatprep.subr.mxu0 0.0
    %224 = vmatpush1.msra.mxu0 0.0
    %225 = vmatprep.subr.mxu0 0.0
    %226 = vmatpush1.msra.mxu0 0.0
    %227 = vmatprep.subr.mxu0 0.0
    %228 = vmatpush1.msra.mxu0 0.0
    %229 = vmatprep.subr.mxu0 0.0
    %230 = vmatpush1.msra.mxu0 %v197
    %231 = vmatprep.subr.mxu0 0.0
    %232 = vmatpush2.msra.mxu0 0.0
    %233 = vmatprep.subr.mxu0 0.0
    %234 = vmatpush2.msra.mxu0 0.0
    %235 = vmatprep.subr.mxu0 0.0
    %236 = vmatpush2.msra.mxu0 0.0
    %237 = vmatprep.subr.mxu0 0.0
    %238 = vmatpush2.msra.mxu0 0.0
    %239 = vmatprep.subr.mxu0 0.0
    %240 = vmatpush2.msra.mxu0 0.0
    %241 = vmatprep.subr.mxu0 0.0
    %242 = vmatpush2.msra.mxu0 0.0
    %243 = vmatprep.subr.mxu0 0.0
    %244 = vmatpush2.msra.mxu0 0.0
    %245 = vmatprep.subr.mxu0 0.0
    %246 = vmatpush2.msra.mxu0 0.0
    %247 = vmatprep.subr.mxu0 0.0
    %248 = vmatpush2.msra.mxu0 0.0
    %249 = vmatprep.subr.mxu0 0.0
    %250 = vmatpush2.msra.mxu0 0.0
    %251 = vmatprep.subr.mxu0 0.0
    %252 = vmatpush2.msra.mxu0 0.0
    %253 = vmatprep.subr.mxu0 0.0
    %254 = vmatpush2.msra.mxu0 0.0
    %255 = vmatprep.subr.mxu0 0.0
    %256 = vmatpush2.msra.mxu0 0.0
    %257 = vmatprep.subr.mxu0 0.0
    %258 = vmatpush2.msra.mxu0 0.0
    %259 = vmatprep.subr.mxu0 0.0
    %260 = vmatpush2.msra.mxu0 0.0
    %261 = vmatprep.subr.mxu0 0.0
    %262 = vmatpush2.msra.mxu0 0.0
    %263 = vmatprep.mubr.f32.mxu0 0.0
    %264 = vmatmul.mubr.f32.gmra.mxu0 %v190
    %v265 = vpop.f32.mrf.mxu0
    %v266 = vadd.f32 %v186, %v265
    %v267 = vpop.f32.mrf.mxu0
    %268 = vmatprep.mubr.f32.mxu0 0.0
    %269 = vmatmul.mubr.f32.gmra.mxu0 %v193
    %v270 = vpop.f32.mrf.mxu0
    %v271 = vadd.f32 %v186, %v270
    %v272 = vpop.f32.mrf.mxu0
    %273 = vdwg.mxu0
    %vm274 = vcmask 130048
    %v276 = vsel %vm274, %v171, 0
    %v279 = vsel %vm274, %v172, 0
    %281 = vmatprep.subr.mxu0 0.0
    %282 = vmatpush1.msra.mxu0 0.0
    %283 = vmatprep.subr.mxu0 0.0
    %284 = vmatpush1.msra.mxu0 0.0
    %285 = vmatprep.subr.mxu0 0.0
    %286 = vmatpush1.msra.mxu0 0.0
    %287 = vmatprep.subr.mxu0 0.0
    %288 = vmatpush1.msra.mxu0 0.0
    %289 = vmatprep.subr.mxu0 0.0
    %290 = vmatpush1.msra.mxu0 0.0
    %291 = vmatprep.subr.mxu0 0.0
    %292 = vmatpush1.msra.mxu0 0.0
    %293 = vmatprep.subr.mxu0 0.0
    %294 = vmatpush1.msra.mxu0 0.0
    %295 = vmatprep.subr.mxu0 0.0
    %296 = vmatpush1.msra.mxu0 0.0
    %297 = vmatprep.subr.mxu0 0.0
    %298 = vmatpush1.msra.mxu0 0.0
    %299 = vmatprep.subr.mxu0 0.0
    %300 = vmatpush1.msra.mxu0 0.0
    %301 = vmatprep.subr.mxu0 0.0
    %302 = vmatpush1.msra.mxu0 0.0
    %303 = vmatprep.subr.mxu0 0.0
    %304 = vmatpush1.msra.mxu0 0.0
    %305 = vmatprep.subr.mxu0 0.0
    %306 = vmatpush1.msra.mxu0 0.0
    %307 = vmatprep.subr.mxu0 0.0
    %308 = vmatpush1.msra.mxu0 0.0
    %309 = vmatprep.subr.mxu0 0.0
    %310 = vmatpush1.msra.mxu0 %v271
    %311 = vmatprep.subr.mxu0 0.0
    %312 = vmatpush1.msra.mxu0 %v266
    %313 = vmatprep.subr.mxu0 0.0
    %314 = vmatpush2.msra.mxu0 0.0
    %315 = vmatprep.subr.mxu0 0.0
    %316 = vmatpush2.msra.mxu0 0.0
    %317 = vmatprep.subr.mxu0 0.0
    %318 = vmatpush2.msra.mxu0 0.0
    %319 = vmatprep.subr.mxu0 0.0
    %320 = vmatpush2.msra.mxu0 0.0
    %321 = vmatprep.subr.mxu0 0.0
    %322 = vmatpush2.msra.mxu0 0.0
    %323 = vmatprep.subr.mxu0 0.0
    %324 = vmatpush2.msra.mxu0 0.0
    %325 = vmatprep.subr.mxu0 0.0
    %326 = vmatpush2.msra.mxu0 0.0
    %327 = vmatprep.subr.mxu0 0.0
    %328 = vmatpush2.msra.mxu0 0.0
    %329 = vmatprep.subr.mxu0 0.0
    %330 = vmatpush2.msra.mxu0 0.0
    %331 = vmatprep.subr.mxu0 0.0
    %332 = vmatpush2.msra.mxu0 0.0
    %333 = vmatprep.subr.mxu0 0.0
    %334 = vmatpush2.msra.mxu0 0.0
    %335 = vmatprep.subr.mxu0 0.0
    %336 = vmatpush2.msra.mxu0 0.0
    %337 = vmatprep.subr.mxu0 0.0
    %338 = vmatpush2.msra.mxu0 0.0
    %339 = vmatprep.subr.mxu0 0.0
    %340 = vmatpush2.msra.mxu0 0.0
    %341 = vmatprep.subr.mxu0 0.0
    %342 = vmatpush2.msra.mxu0 0.0
    %343 = vmatprep.subr.mxu0 0.0
    %344 = vmatpush2.msra.mxu0 0.0
    %345 = vmatprep.mubr.f32.mxu0 0.0
    %346 = vmatmul.mubr.f32.gmra.mxu0 %v276
    %v347 = vpop.f32.mrf.mxu0
    %v348 = vadd.f32 0.0, %v347
    %v349 = vpop.f32.mrf.mxu0
    %350 = vmatprep.mubr.f32.mxu0 0.0
    %351 = vmatmul.mubr.f32.gmra.mxu0 %v279
    %v352 = vpop.f32.mrf.mxu0
    %v353 = vadd.f32 0.0, %v352
    %v354 = vpop.f32.mrf.mxu0
    %355 = vdwg.mxu0
    %v356 = vsub.f32 %v266, %v348
    %v357 = vsub.f32 %v271, %v353
    %v358 = vmul.f32 %v169, %v356
    %v359 = vmul.f32 %v169, %v357
    %v360 = vadd.f32 %v348, %v358
    %v361 = vadd.f32 %v353, %v359
    %v362 = vld [vmem:[%s9] sm:$0x1]
    %v364 = vlaneseq
    %v365 = vshrl.u32 %v364, 7
    %v366 = vsub.s32 0, %v365
    %v367 = vrot.slane %v362, %v366
    %vm368 = vcmask 326656
    %v370 = vsel %vm368, 0.0, 0
    %372 = vmatprep.subr.mxu0 0.0
    %373 = vmatpush1.msra.mxu0 0.0
    %374 = vmatprep.subr.mxu0 0.0
    %375 = vmatpush1.msra.mxu0 0.0
    %376 = vmatprep.subr.mxu0 0.0
    %377 = vmatpush1.msra.mxu0 0.0
    %378 = vmatprep.subr.mxu0 0.0
    %379 = vmatpush1.msra.mxu0 0.0
    %380 = vmatprep.subr.mxu0 0.0
    %381 = vmatpush1.msra.mxu0 0.0
    %382 = vmatprep.subr.mxu0 0.0
    %383 = vmatpush1.msra.mxu0 0.0
    %384 = vmatprep.subr.mxu0 0.0
    %385 = vmatpush1.msra.mxu0 0.0
    %386 = vmatprep.subr.mxu0 0.0
    %387 = vmatpush1.msra.mxu0 0.0
    %388 = vmatprep.subr.mxu0 0.0
    %389 = vmatpush1.msra.mxu0 0.0
    %390 = vmatprep.subr.mxu0 0.0
    %391 = vmatpush1.msra.mxu0 0.0
    %392 = vmatprep.subr.mxu0 0.0
    %393 = vmatpush1.msra.mxu0 0.0
    %394 = vmatprep.subr.mxu0 0.0
    %395 = vmatpush1.msra.mxu0 %v181
    %396 = vmatprep.subr.mxu0 0.0
    %397 = vmatpush1.msra.mxu0 %v180
    %398 = vmatprep.subr.mxu0 0.0
    %399 = vmatpush1.msra.mxu0 %v179
    %400 = vmatprep.subr.mxu0 0.0
    %401 = vmatpush1.msra.mxu0 %v178
    %402 = vmatprep.subr.mxu0 0.0
    %403 = vmatpush1.msra.mxu0 %v177
    %404 = vmatprep.subr.mxu0 0.0
    %405 = vmatpush2.msra.mxu0 0.0
    %406 = vmatprep.subr.mxu0 0.0
    %407 = vmatpush2.msra.mxu0 0.0
    %408 = vmatprep.subr.mxu0 0.0
    %409 = vmatpush2.msra.mxu0 0.0
    %410 = vmatprep.subr.mxu0 0.0
    %411 = vmatpush2.msra.mxu0 0.0
    %412 = vmatprep.subr.mxu0 0.0
    %413 = vmatpush2.msra.mxu0 0.0
    %414 = vmatprep.subr.mxu0 0.0
    %415 = vmatpush2.msra.mxu0 0.0
    %416 = vmatprep.subr.mxu0 0.0
    %417 = vmatpush2.msra.mxu0 0.0
    %418 = vmatprep.subr.mxu0 0.0
    %419 = vmatpush2.msra.mxu0 0.0
    %420 = vmatprep.subr.mxu0 0.0
    %421 = vmatpush2.msra.mxu0 0.0
    %422 = vmatprep.subr.mxu0 0.0
    %423 = vmatpush2.msra.mxu0 0.0
    %424 = vmatprep.subr.mxu0 0.0
    %425 = vmatpush2.msra.mxu0 0.0
    %426 = vmatprep.subr.mxu0 0.0
    %427 = vmatpush2.msra.mxu0 0.0
    %428 = vmatprep.subr.mxu0 0.0
    %429 = vmatpush2.msra.mxu0 0.0
    %430 = vmatprep.subr.mxu0 0.0
    %431 = vmatpush2.msra.mxu0 0.0
    %432 = vmatprep.subr.mxu0 0.0
    %433 = vmatpush2.msra.mxu0 0.0
    %434 = vmatprep.subr.mxu0 0.0
    %435 = vmatpush2.msra.mxu0 0.0
    %436 = vmatprep.mubr.f32.mxu0 0.0
    %437 = vmatmul.mubr.f32.gmra.mxu0 %v370
    %v438 = vpop.f32.mrf.mxu0
    %v439 = vadd.f32 0.0, %v438
    %v440 = vpop.f32.mrf.mxu0
    %441 = vdwg.mxu0
    %v442 = vadd.f32 %v360, %v439
    %v443 = vxor.u32 %v442, 2147483648
    %v444 = vmul.f32 %v443, 1.442695
    %v445 = vpow.pop %v444
    %v446 = vadd.f32 %v445, 1.0
    %v447 = vrcp.pop %v446
    %v448 = vmul.f32 1.0, %v447
    %449 = vrot.lane.b32.xlu0 %v367, 80
    %v450 = vpop.permute.xlu0 %449
    %v452 = vadd.f32 %v439, %v450
    %454 = vrot.lane.b32.xlu0 %v452, 48
    %v455 = vpop.permute.xlu0 %454
    %v457 = vmul.f32 %v448, %v455
    %459 = vrot.lane.b32.xlu0 %v457, 80
    %v460 = vpop.permute.xlu0 %459
    %v462 = vadd.f32 %v360, %v460
    %v463 = vtanh.pop %v462
    %v464 = vsub.f32 1.0, %v448
    %466 = vrot.lane.b32.xlu0 %v463, 88
    %v467 = vpop.permute.xlu0 %466
    %v469 = vmul.f32 %v464, %v467
    %v470 = vmul.f32 %v448, 0.0
    %v471 = vadd.f32 %v469, %v470
    %473 = vrot.lane.b32.xlu0 %v471, 88
    %v474 = vpop.permute.xlu0 %473
    %vm476 = vcmask 156672
    %477 = vst.msk [vmem:[#allocation2] sm:$0x3] %vm476, %v474
    %vm478 = vcmask 320672
    %479 = vst.msk [vmem:[#allocation2 + $0xe] sm:$0x3] %vm478, %v474
    %v480 = vsel %vm368, %v474, 0
    %482 = vmatprep.subr.mxu0 0.0
    %483 = vmatpush1.msra.mxu0 0.0
    %484 = vmatprep.subr.mxu0 0.0
    %485 = vmatpush1.msra.mxu0 0.0
    %486 = vmatprep.subr.mxu0 0.0
    %487 = vmatpush1.msra.mxu0 0.0
    %488 = vmatprep.subr.mxu0 0.0
    %489 = vmatpush1.msra.mxu0 0.0
    %490 = vmatprep.subr.mxu0 0.0
    %491 = vmatpush1.msra.mxu0 0.0
    %492 = vmatprep.subr.mxu0 0.0
    %493 = vmatpush1.msra.mxu0 0.0
    %494 = vmatprep.subr.mxu0 0.0
    %495 = vmatpush1.msra.mxu0 0.0
    %496 = vmatprep.subr.mxu0 0.0
    %497 = vmatpush1.msra.mxu0 0.0
    %498 = vmatprep.subr.mxu0 0.0
    %499 = vmatpush1.msra.mxu0 0.0
    %500 = vmatprep.subr.mxu0 0.0
    %501 = vmatpush1.msra.mxu0 0.0
    %502 = vmatprep.subr.mxu0 0.0
    %503 = vmatpush1.msra.mxu0 0.0
    %504 = vmatprep.subr.mxu0 0.0
    %505 = vmatpush1.msra.mxu0 %v181
    %506 = vmatprep.subr.mxu0 0.0
    %507 = vmatpush1.msra.mxu0 %v180
    %508 = vmatprep.subr.mxu0 0.0
    %509 = vmatpush1.msra.mxu0 %v179
    %510 = vmatprep.subr.mxu0 0.0
    %511 = vmatpush1.msra.mxu0 %v178
    %512 = vmatprep.subr.mxu0 0.0
    %513 = vmatpush1.msra.mxu0 %v177
    %514 = vmatprep.subr.mxu0 0.0
    %515 = vmatpush2.msra.mxu0 0.0
    %516 = vmatprep.subr.mxu0 0.0
    %517 = vmatpush2.msra.mxu0 0.0
    %518 = vmatprep.subr.mxu0 0.0
    %519 = vmatpush2.msra.mxu0 0.0
    %520 = vmatprep.subr.mxu0 0.0
    %521 = vmatpush2.msra.mxu0 0.0
    %522 = vmatprep.subr.mxu0 0.0
    %523 = vmatpush2.msra.mxu0 0.0
    %524 = vmatprep.subr.mxu0 0.0
    %525 = vmatpush2.msra.mxu0 0.0
    %526 = vmatprep.subr.mxu0 0.0
    %527 = vmatpush2.msra.mxu0 0.0
    %528 = vmatprep.subr.mxu0 0.0
    %529 = vmatpush2.msra.mxu0 0.0
    %530 = vmatprep.subr.mxu0 0.0
    %531 = vmatpush2.msra.mxu0 0.0
    %532 = vmatprep.subr.mxu0 0.0
    %533 = vmatpush2.msra.mxu0 0.0
    %534 = vmatprep.subr.mxu0 0.0
    %535 = vmatpush2.msra.mxu0 0.0
    %536 = vmatprep.subr.mxu0 0.0
    %537 = vmatpush2.msra.mxu0 0.0
    %538 = vmatprep.subr.mxu0 0.0
    %539 = vmatpush2.msra.mxu0 0.0
    %540 = vmatprep.subr.mxu0 0.0
    %541 = vmatpush2.msra.mxu0 0.0
    %542 = vmatprep.subr.mxu0 0.0
    %543 = vmatpush2.msra.mxu0 0.0
    %544 = vmatprep.subr.mxu0 0.0
    %545 = vmatpush2.msra.mxu0 0.0
    %546 = vmatprep.mubr.f32.mxu0 0.0
    %547 = vmatmul.mubr.f32.gmra.mxu0 %v480
    %v548 = vpop.f32.mrf.mxu0
    %v549 = vadd.f32 0.0, %v548
    %v550 = vpop.f32.mrf.mxu0
    %551 = vdwg.mxu0
    %v553 = vrot.slane %v549, 6
    %v555 = vadd.f32 %v360, %v553
    %v556 = vxor.u32 %v555, 2147483648
    %v557 = vmul.f32 %v556, 1.442695
    %v558 = vpow.pop %v557
    %v559 = vadd.f32 %v558, 1.0
    %v560 = vrcp.pop %v559
    %v561 = vmul.f32 1.0, %v560
    %v562 = vadd.f32 %v549, %v450
    %v564 = vrot.slane %v562, 6
    %565 = vrot.lane.b32.xlu0 %v564, 48
    %v566 = vpop.permute.xlu0 %565
    %v568 = vmul.f32 %v561, %v566
    %570 = vrot.lane.b32.xlu0 %v568, 80
    %v571 = vpop.permute.xlu0 %570
    %v573 = vadd.f32 %v360, %v571
    %v574 = vtanh.pop %v573
    %v575 = vsub.f32 1.0, %v561
    %577 = vrot.lane.b32.xlu0 %v574, 88
    %v578 = vpop.permute.xlu0 %577
    %v580 = vmul.f32 %v575, %v578
    %v581 = vrot.slane %v471, 6
    %v583 = vmul.f32 %v561, %v581
    %v584 = vadd.f32 %v580, %v583
    %586 = vrot.lane.b32.xlu0 %v584, 88
    %v587 = vpop.permute.xlu0 %586
    %vm589 = vcmask 158722
    %590 = vst.msk [vmem:[#allocation2] sm:$0xc] %vm589, %v587
    %vm591 = vcmask 322722
    %592 = vst.msk [vmem:[#allocation2 + $0xa] sm:$0xc] %vm591, %v587
    %v593 = vrot.slane %v584, 2
    %594 = vrot.lane.b32.xlu0 %v593, 88
    %v595 = vpop.permute.xlu0 %594
    %v596 = vsel %vm368, %v595, 0
    %598 = vmatprep.subr.mxu0 0.0
    %599 = vmatpush1.msra.mxu0 0.0
    %600 = vmatprep.subr.mxu0 0.0
    %601 = vmatpush1.msra.mxu0 0.0
    %602 = vmatprep.subr.mxu0 0.0
    %603 = vmatpush1.msra.mxu0 0.0
    %604 = vmatprep.subr.mxu0 0.0
    %605 = vmatpush1.msra.mxu0 0.0
    %606 = vmatprep.subr.mxu0 0.0
    %607 = vmatpush1.msra.mxu0 0.0
    %608 = vmatprep.subr.mxu0 0.0
    %609 = vmatpush1.msra.mxu0 0.0
    %610 = vmatprep.subr.mxu0 0.0
    %611 = vmatpush1.msra.mxu0 0.0
    %612 = vmatprep.subr.mxu0 0.0
    %613 = vmatpush1.msra.mxu0 0.0
    %614 = vmatprep.subr.mxu0 0.0
    %615 = vmatpush1.msra.mxu0 0.0
    %616 = vmatprep.subr.mxu0 0.0
    %617 = vmatpush1.msra.mxu0 0.0
    %618 = vmatprep.subr.mxu0 0.0
    %619 = vmatpush1.msra.mxu0 0.0
    %620 = vmatprep.subr.mxu0 0.0
    %621 = vmatpush1.msra.mxu0 %v181
    %622 = vmatprep.subr.mxu0 0.0
    %623 = vmatpush1.msra.mxu0 %v180
    %624 = vmatprep.subr.mxu0 0.0
    %625 = vmatpush1.msra.mxu0 %v179
    %626 = vmatprep.subr.mxu0 0.0
    %627 = vmatpush1.msra.mxu0 %v178
    %628 = vmatprep.subr.mxu0 0.0
    %629 = vmatpush1.msra.mxu0 %v177
    %630 = vmatprep.subr.mxu0 0.0
    %631 = vmatpush2.msra.mxu0 0.0
    %632 = vmatprep.subr.mxu0 0.0
    %633 = vmatpush2.msra.mxu0 0.0
    %634 = vmatprep.subr.mxu0 0.0
    %635 = vmatpush2.msra.mxu0 0.0
    %636 = vmatprep.subr.mxu0 0.0
    %637 = vmatpush2.msra.mxu0 0.0
    %638 = vmatprep.subr.mxu0 0.0
    %639 = vmatpush2.msra.mxu0 0.0
    %640 = vmatprep.subr.mxu0 0.0
    %641 = vmatpush2.msra.mxu0 0.0
    %642 = vmatprep.subr.mxu0 0.0
    %643 = vmatpush2.msra.mxu0 0.0
    %644 = vmatprep.subr.mxu0 0.0
    %645 = vmatpush2.msra.mxu0 0.0
    %646 = vmatprep.subr.mxu0 0.0
    %647 = vmatpush2.msra.mxu0 0.0
    %648 = vmatprep.subr.mxu0 0.0
    %649 = vmatpush2.msra.mxu0 0.0
    %650 = vmatprep.subr.mxu0 0.0
    %651 = vmatpush2.msra.mxu0 0.0
    %652 = vmatprep.subr.mxu0 0.0
    %653 = vmatpush2.msra.mxu0 0.0
    %654 = vmatprep.subr.mxu0 0.0
    %655 = vmatpush2.msra.mxu0 0.0
    %656 = vmatprep.subr.mxu0 0.0
    %657 = vmatpush2.msra.mxu0 0.0
    %658 = vmatprep.subr.mxu0 0.0
    %659 = vmatpush2.msra.mxu0 0.0
    %660 = vmatprep.subr.mxu0 0.0
    %661 = vmatpush2.msra.mxu0 0.0
    %662 = vmatprep.mubr.f32.mxu0 0.0
    %663 = vmatmul.mubr.f32.gmra.mxu0 %v596
    %v664 = vpop.f32.mrf.mxu0
    %v665 = vadd.f32 0.0, %v664
    %v666 = vpop.f32.mrf.mxu0
    %667 = vdwg.mxu0
    %v669 = vrot.slane %v665, 4
    %v671 = vadd.f32 %v360, %v669
    %v672 = vxor.u32 %v671, 2147483648
    %v673 = vmul.f32 %v672, 1.442695
    %v674 = vpow.pop %v673
    %v675 = vadd.f32 %v674, 1.0
    %v676 = vrcp.pop %v675
    %v677 = vmul.f32 1.0, %v676
    %v678 = vadd.f32 %v665, %v450
    %v680 = vrot.slane %v678, 4
    %681 = vrot.lane.b32.xlu0 %v680, 48
    %v682 = vpop.permute.xlu0 %681
    %v684 = vmul.f32 %v677, %v682
    %686 = vrot.lane.b32.xlu0 %v684, 80
    %v687 = vpop.permute.xlu0 %686
    %v689 = vadd.f32 %v360, %v687
    %v690 = vtanh.pop %v689
    %v691 = vsub.f32 1.0, %v677
    %693 = vrot.lane.b32.xlu0 %v690, 88
    %v694 = vpop.permute.xlu0 %693
    %v696 = vmul.f32 %v691, %v694
    %v697 = vrot.slane %v584, 6
    %v699 = vmul.f32 %v677, %v697
    %v700 = vadd.f32 %v696, %v699
    %702 = vrot.lane.b32.xlu0 %v700, 88
    %v703 = vpop.permute.xlu0 %702
    %vm705 = vcmask 160772
    %706 = vst.msk [vmem:[#allocation2] sm:$0x30] %vm705, %v703
    %vm707 = vcmask 324772
    %708 = vst.msk [vmem:[#allocation2 + $0x6] sm:$0x30] %vm707, %v703
    %v709 = vrot.slane %v700, 4
    %710 = vrot.lane.b32.xlu0 %v709, 88
    %v711 = vpop.permute.xlu0 %710
    %v712 = vsel %vm368, %v711, 0
    %714 = vmatprep.subr.mxu0 0.0
    %715 = vmatpush1.msra.mxu0 0.0
    %716 = vmatprep.subr.mxu0 0.0
    %717 = vmatpush1.msra.mxu0 0.0
    %718 = vmatprep.subr.mxu0 0.0
    %719 = vmatpush1.msra.mxu0 0.0
    %720 = vmatprep.subr.mxu0 0.0
    %721 = vmatpush1.msra.mxu0 0.0
    %722 = vmatprep.subr.mxu0 0.0
    %723 = vmatpush1.msra.mxu0 0.0
    %724 = vmatprep.subr.mxu0 0.0
    %725 = vmatpush1.msra.mxu0 0.0
    %726 = vmatprep.subr.mxu0 0.0
    %727 = vmatpush1.msra.mxu0 0.0
    %728 = vmatprep.subr.mxu0 0.0
    %729 = vmatpush1.msra.mxu0 0.0
    %730 = vmatprep.subr.mxu0 0.0
    %731 = vmatpush1.msra.mxu0 0.0
    %732 = vmatprep.subr.mxu0 0.0
    %733 = vmatpush1.msra.mxu0 0.0
    %734 = vmatprep.subr.mxu0 0.0
    %735 = vmatpush1.msra.mxu0 0.0
    %736 = vmatprep.subr.mxu0 0.0
    %737 = vmatpush1.msra.mxu0 %v181
    %738 = vmatprep.subr.mxu0 0.0
    %739 = vmatpush1.msra.mxu0 %v180
    %740 = vmatprep.subr.mxu0 0.0
    %741 = vmatpush1.msra.mxu0 %v179
    %742 = vmatprep.subr.mxu0 0.0
    %743 = vmatpush1.msra.mxu0 %v178
    %744 = vmatprep.subr.mxu0 0.0
    %745 = vmatpush1.msra.mxu0 %v177
    %746 = vmatprep.subr.mxu0 0.0
    %747 = vmatpush2.msra.mxu0 0.0
    %748 = vmatprep.subr.mxu0 0.0
    %749 = vmatpush2.msra.mxu0 0.0
    %750 = vmatprep.subr.mxu0 0.0
    %751 = vmatpush2.msra.mxu0 0.0
    %752 = vmatprep.subr.mxu0 0.0
    %753 = vmatpush2.msra.mxu0 0.0
    %754 = vmatprep.subr.mxu0 0.0
    %755 = vmatpush2.msra.mxu0 0.0
    %756 = vmatprep.subr.mxu0 0.0
    %757 = vmatpush2.msra.mxu0 0.0
    %758 = vmatprep.subr.mxu0 0.0
    %759 = vmatpush2.msra.mxu0 0.0
    %760 = vmatprep.subr.mxu0 0.0
    %761 = vmatpush2.msra.mxu0 0.0
    %762 = vmatprep.subr.mxu0 0.0
    %763 = vmatpush2.msra.mxu0 0.0
    %764 = vmatprep.subr.mxu0 0.0
    %765 = vmatpush2.msra.mxu0 0.0
    %766 = vmatprep.subr.mxu0 0.0
    %767 = vmatpush2.msra.mxu0 0.0
    %768 = vmatprep.subr.mxu0 0.0
    %769 = vmatpush2.msra.mxu0 0.0
    %770 = vmatprep.subr.mxu0 0.0
    %771 = vmatpush2.msra.mxu0 0.0
    %772 = vmatprep.subr.mxu0 0.0
    %773 = vmatpush2.msra.mxu0 0.0
    %774 = vmatprep.subr.mxu0 0.0
    %775 = vmatpush2.msra.mxu0 0.0
    %776 = vmatprep.subr.mxu0 0.0
    %777 = vmatpush2.msra.mxu0 0.0
    %778 = vmatprep.mubr.f32.mxu0 0.0
    %779 = vmatmul.mubr.f32.gmra.mxu0 %v712
    %v780 = vpop.f32.mrf.mxu0
    %v781 = vadd.f32 0.0, %v780
    %v782 = vpop.f32.mrf.mxu0
    %783 = vdwg.mxu0
    %v785 = vrot.slane %v781, 2
    %v787 = vadd.f32 %v360, %v785
    %v788 = vxor.u32 %v787, 2147483648
    %v789 = vmul.f32 %v788, 1.442695
    %v790 = vpow.pop %v789
    %v791 = vadd.f32 %v790, 1.0
    %v792 = vrcp.pop %v791
    %v793 = vmul.f32 1.0, %v792
    %v794 = vadd.f32 %v781, %v450
    %v796 = vrot.slane %v794, 2
    %797 = vrot.lane.b32.xlu0 %v796, 48
    %v798 = vpop.permute.xlu0 %797
    %v800 = vmul.f32 %v793, %v798
    %802 = vrot.lane.b32.xlu0 %v800, 80
    %v803 = vpop.permute.xlu0 %802
    %v805 = vadd.f32 %v360, %v803
    %v806 = vtanh.pop %v805
    %v807 = vsub.f32 1.0, %v793
    %809 = vrot.lane.b32.xlu0 %v806, 88
    %v810 = vpop.permute.xlu0 %809
    %v812 = vmul.f32 %v807, %v810
    %v813 = vrot.slane %v700, 6
    %v815 = vmul.f32 %v793, %v813
    %v816 = vadd.f32 %v812, %v815
    %818 = vrot.lane.b32.xlu0 %v816, 88
    %v819 = vpop.permute.xlu0 %818
    %vm821 = vcmask 162822
    %822 = vst.msk [vmem:[#allocation2] sm:$0xc0] %vm821, %v819
    %vm823 = vcmask 326822
    %824 = vst.msk [vmem:[#allocation2 + $0x2] sm:$0xc0] %vm823, %v819
    %v825 = vrot.slane %v816, 6
    %826 = vrot.lane.b32.xlu0 %v825, 88
    %v827 = vpop.permute.xlu0 %826
    %v828 = vsel %vm368, %v827, 0
    %830 = vmatprep.subr.mxu0 0.0
    %831 = vmatpush1.msra.mxu0 0.0
    %832 = vmatprep.subr.mxu0 0.0
    %833 = vmatpush1.msra.mxu0 0.0
    %834 = vmatprep.subr.mxu0 0.0
    %835 = vmatpush1.msra.mxu0 0.0
    %836 = vmatprep.subr.mxu0 0.0
    %837 = vmatpush1.msra.mxu0 0.0
    %838 = vmatprep.subr.mxu0 0.0
    %839 = vmatpush1.msra.mxu0 0.0
    %840 = vmatprep.subr.mxu0 0.0
    %841 = vmatpush1.msra.mxu0 0.0
    %842 = vmatprep.subr.mxu0 0.0
    %843 = vmatpush1.msra.mxu0 0.0
    %844 = vmatprep.subr.mxu0 0.0
    %845 = vmatpush1.msra.mxu0 0.0
    %846 = vmatprep.subr.mxu0 0.0
    %847 = vmatpush1.msra.mxu0 0.0
    %848 = vmatprep.subr.mxu0 0.0
    %849 = vmatpush1.msra.mxu0 0.0
    %850 = vmatprep.subr.mxu0 0.0
    %851 = vmatpush1.msra.mxu0 0.0
    %852 = vmatprep.subr.mxu0 0.0
    %853 = vmatpush1.msra.mxu0 %v181
    %854 = vmatprep.subr.mxu0 0.0
    %855 = vmatpush1.msra.mxu0 %v180
    %856 = vmatprep.subr.mxu0 0.0
    %857 = vmatpush1.msra.mxu0 %v179
    %858 = vmatprep.subr.mxu0 0.0
    %859 = vmatpush1.msra.mxu0 %v178
    %860 = vmatprep.subr.mxu0 0.0
    %861 = vmatpush1.msra.mxu0 %v177
    %862 = vmatprep.subr.mxu0 0.0
    %863 = vmatpush2.msra.mxu0 0.0
    %864 = vmatprep.subr.mxu0 0.0
    %865 = vmatpush2.msra.mxu0 0.0
    %866 = vmatprep.subr.mxu0 0.0
    %867 = vmatpush2.msra.mxu0 0.0
    %868 = vmatprep.subr.mxu0 0.0
    %869 = vmatpush2.msra.mxu0 0.0
    %870 = vmatprep.subr.mxu0 0.0
    %871 = vmatpush2.msra.mxu0 0.0
    %872 = vmatprep.subr.mxu0 0.0
    %873 = vmatpush2.msra.mxu0 0.0
    %874 = vmatprep.subr.mxu0 0.0
    %875 = vmatpush2.msra.mxu0 0.0
    %876 = vmatprep.subr.mxu0 0.0
    %877 = vmatpush2.msra.mxu0 0.0
    %878 = vmatprep.subr.mxu0 0.0
    %879 = vmatpush2.msra.mxu0 0.0
    %880 = vmatprep.subr.mxu0 0.0
    %881 = vmatpush2.msra.mxu0 0.0
    %882 = vmatprep.subr.mxu0 0.0
    %883 = vmatpush2.msra.mxu0 0.0
    %884 = vmatprep.subr.mxu0 0.0
    %885 = vmatpush2.msra.mxu0 0.0
    %886 = vmatprep.subr.mxu0 0.0
    %887 = vmatpush2.msra.mxu0 0.0
    %888 = vmatprep.subr.mxu0 0.0
    %889 = vmatpush2.msra.mxu0 0.0
    %890 = vmatprep.subr.mxu0 0.0
    %891 = vmatpush2.msra.mxu0 0.0
    %892 = vmatprep.subr.mxu0 0.0
    %893 = vmatpush2.msra.mxu0 0.0
    %894 = vmatprep.mubr.f32.mxu0 0.0
    %895 = vmatmul.mubr.f32.gmra.mxu0 %v828
    %v896 = vpop.f32.mrf.mxu0
    %v897 = vadd.f32 0.0, %v896
    %v898 = vpop.f32.mrf.mxu0
    %899 = vdwg.mxu0
    %v900 = vadd.f32 %v361, %v897
    %v901 = vxor.u32 %v900, 2147483648
    %v902 = vmul.f32 %v901, 1.442695
    %v903 = vpow.pop %v902
    %v904 = vadd.f32 %v903, 1.0
    %v905 = vrcp.pop %v904
    %v906 = vmul.f32 1.0, %v905
    %v907 = vadd.f32 %v897, %v450
    %909 = vrot.lane.b32.xlu0 %v907, 48
    %v910 = vpop.permute.xlu0 %909
    %v912 = vmul.f32 %v906, %v910
    %914 = vrot.lane.b32.xlu0 %v912, 80
    %v915 = vpop.permute.xlu0 %914
    %v917 = vadd.f32 %v361, %v915
    %v918 = vtanh.pop %v917
    %v919 = vsub.f32 1.0, %v906
    %921 = vrot.lane.b32.xlu0 %v918, 88
    %v922 = vpop.permute.xlu0 %921
    %v924 = vmul.f32 %v919, %v922
    %v926 = vmul.f32 %v906, %v825
    %v927 = vadd.f32 %v924, %v926
    %929 = vrot.lane.b32.xlu0 %v927, 88
    %v930 = vpop.permute.xlu0 %929
    %932 = vst.msk [vmem:[#allocation2 + $0x8] sm:$0x3] %vm476, %v930
    %933 = vst.msk [vmem:[#allocation2 + $0x6] sm:$0x3] %vm478, %v930
    %v934 = vsel %vm368, %v930, 0
    %936 = vmatprep.subr.mxu0 0.0
    %937 = vmatpush1.msra.mxu0 0.0
    %938 = vmatprep.subr.mxu0 0.0
    %939 = vmatpush1.msra.mxu0 0.0
    %940 = vmatprep.subr.mxu0 0.0
    %941 = vmatpush1.msra.mxu0 0.0
    %942 = vmatprep.subr.mxu0 0.0
    %943 = vmatpush1.msra.mxu0 0.0
    %944 = vmatprep.subr.mxu0 0.0
    %945 = vmatpush1.msra.mxu0 0.0
    %946 = vmatprep.subr.mxu0 0.0
    %947 = vmatpush1.msra.mxu0 0.0
    %948 = vmatprep.subr.mxu0 0.0
    %949 = vmatpush1.msra.mxu0 0.0
    %950 = vmatprep.subr.mxu0 0.0
    %951 = vmatpush1.msra.mxu0 0.0
    %952 = vmatprep.subr.mxu0 0.0
    %953 = vmatpush1.msra.mxu0 0.0
    %954 = vmatprep.subr.mxu0 0.0
    %955 = vmatpush1.msra.mxu0 0.0
    %956 = vmatprep.subr.mxu0 0.0
    %957 = vmatpush1.msra.mxu0 0.0
    %958 = vmatprep.subr.mxu0 0.0
    %959 = vmatpush1.msra.mxu0 %v181
    %960 = vmatprep.subr.mxu0 0.0
    %961 = vmatpush1.msra.mxu0 %v180
    %962 = vmatprep.subr.mxu0 0.0
    %963 = vmatpush1.msra.mxu0 %v179
    %964 = vmatprep.subr.mxu0 0.0
    %965 = vmatpush1.msra.mxu0 %v178
    %966 = vmatprep.subr.mxu0 0.0
    %967 = vmatpush1.msra.mxu0 %v177
    %968 = vmatprep.subr.mxu0 0.0
    %969 = vmatpush2.msra.mxu0 0.0
    %970 = vmatprep.subr.mxu0 0.0
    %971 = vmatpush2.msra.mxu0 0.0
    %972 = vmatprep.subr.mxu0 0.0
    %973 = vmatpush2.msra.mxu0 0.0
    %974 = vmatprep.subr.mxu0 0.0
    %975 = vmatpush2.msra.mxu0 0.0
    %976 = vmatprep.subr.mxu0 0.0
    %977 = vmatpush2.msra.mxu0 0.0
    %978 = vmatprep.subr.mxu0 0.0
    %979 = vmatpush2.msra.mxu0 0.0
    %980 = vmatprep.subr.mxu0 0.0
    %981 = vmatpush2.msra.mxu0 0.0
    %982 = vmatprep.subr.mxu0 0.0
    %983 = vmatpush2.msra.mxu0 0.0
    %984 = vmatprep.subr.mxu0 0.0
    %985 = vmatpush2.msra.mxu0 0.0
    %986 = vmatprep.subr.mxu0 0.0
    %987 = vmatpush2.msra.mxu0 0.0
    %988 = vmatprep.subr.mxu0 0.0
    %989 = vmatpush2.msra.mxu0 0.0
    %990 = vmatprep.subr.mxu0 0.0
    %991 = vmatpush2.msra.mxu0 0.0
    %992 = vmatprep.subr.mxu0 0.0
    %993 = vmatpush2.msra.mxu0 0.0
    %994 = vmatprep.subr.mxu0 0.0
    %995 = vmatpush2.msra.mxu0 0.0
    %996 = vmatprep.subr.mxu0 0.0
    %997 = vmatpush2.msra.mxu0 0.0
    %998 = vmatprep.subr.mxu0 0.0
    %999 = vmatpush2.msra.mxu0 0.0
    %1000 = vmatprep.mubr.f32.mxu0 0.0
    %1001 = vmatmul.mubr.f32.gmra.mxu0 %v934
    %v1002 = vpop.f32.mrf.mxu0
    %v1003 = vadd.f32 0.0, %v1002
    %v1004 = vpop.f32.mrf.mxu0
    %1005 = vdwg.mxu0
    %v1007 = vrot.slane %v1003, 6
    %v1009 = vadd.f32 %v361, %v1007
    %v1010 = vxor.u32 %v1009, 2147483648
    %v1011 = vmul.f32 %v1010, 1.442695
    %v1012 = vpow.pop %v1011
    %v1013 = vadd.f32 %v1012, 1.0
    %v1014 = vrcp.pop %v1013
    %v1015 = vmul.f32 1.0, %v1014
    %v1016 = vadd.f32 %v1003, %v450
    %v1018 = vrot.slane %v1016, 6
    %1019 = vrot.lane.b32.xlu0 %v1018, 48
    %v1020 = vpop.permute.xlu0 %1019
    %v1022 = vmul.f32 %v1015, %v1020
    %1024 = vrot.lane.b32.xlu0 %v1022, 80
    %v1025 = vpop.permute.xlu0 %1024
    %v1027 = vadd.f32 %v361, %v1025
    %v1028 = vtanh.pop %v1027
    %v1029 = vsub.f32 1.0, %v1015
    %1031 = vrot.lane.b32.xlu0 %v1028, 88
    %v1032 = vpop.permute.xlu0 %1031
    %v1034 = vmul.f32 %v1029, %v1032
    %v1035 = vrot.slane %v927, 6
    %v1037 = vmul.f32 %v1015, %v1035
    %v1038 = vadd.f32 %v1034, %v1037
    %1040 = vrot.lane.b32.xlu0 %v1038, 88
    %v1041 = vpop.permute.xlu0 %1040
    %1043 = vst.msk [vmem:[#allocation2 + $0x8] sm:$0xc] %vm589, %v1041
    %1044 = vst.msk [vmem:[#allocation2 + $0x2] sm:$0xc] %vm591, %v1041
    %v1045 = vrot.slane %v1038, 2
    %1046 = vrot.lane.b32.xlu0 %v1045, 88
    %v1047 = vpop.permute.xlu0 %1046
    %v1048 = vsel %vm368, %v1047, 0
    %1050 = vmatprep.subr.mxu0 0.0
    %1051 = vmatpush1.msra.mxu0 0.0
    %1052 = vmatprep.subr.mxu0 0.0
    %1053 = vmatpush1.msra.mxu0 0.0
    %1054 = vmatprep.subr.mxu0 0.0
    %1055 = vmatpush1.msra.mxu0 0.0
    %1056 = vmatprep.subr.mxu0 0.0
    %1057 = vmatpush1.msra.mxu0 0.0
    %1058 = vmatprep.subr.mxu0 0.0
    %1059 = vmatpush1.msra.mxu0 0.0
    %1060 = vmatprep.subr.mxu0 0.0
    %1061 = vmatpush1.msra.mxu0 0.0
    %1062 = vmatprep.subr.mxu0 0.0
    %1063 = vmatpush1.msra.mxu0 0.0
    %1064 = vmatprep.subr.mxu0 0.0
    %1065 = vmatpush1.msra.mxu0 0.0
    %1066 = vmatprep.subr.mxu0 0.0
    %1067 = vmatpush1.msra.mxu0 0.0
    %1068 = vmatprep.subr.mxu0 0.0
    %1069 = vmatpush1.msra.mxu0 0.0
    %1070 = vmatprep.subr.mxu0 0.0
    %1071 = vmatpush1.msra.mxu0 0.0
    %1072 = vmatprep.subr.mxu0 0.0
    %1073 = vmatpush1.msra.mxu0 %v181
    %1074 = vmatprep.subr.mxu0 0.0
    %1075 = vmatpush1.msra.mxu0 %v180
    %1076 = vmatprep.subr.mxu0 0.0
    %1077 = vmatpush1.msra.mxu0 %v179
    %1078 = vmatprep.subr.mxu0 0.0
    %1079 = vmatpush1.msra.mxu0 %v178
    %1080 = vmatprep.subr.mxu0 0.0
    %1081 = vmatpush1.msra.mxu0 %v177
    %1082 = vmatprep.subr.mxu0 0.0
    %1083 = vmatpush2.msra.mxu0 0.0
    %1084 = vmatprep.subr.mxu0 0.0
    %1085 = vmatpush2.msra.mxu0 0.0
    %1086 = vmatprep.subr.mxu0 0.0
    %1087 = vmatpush2.msra.mxu0 0.0
    %1088 = vmatprep.subr.mxu0 0.0
    %1089 = vmatpush2.msra.mxu0 0.0
    %1090 = vmatprep.subr.mxu0 0.0
    %1091 = vmatpush2.msra.mxu0 0.0
    %1092 = vmatprep.subr.mxu0 0.0
    %1093 = vmatpush2.msra.mxu0 0.0
    %1094 = vmatprep.subr.mxu0 0.0
    %1095 = vmatpush2.msra.mxu0 0.0
    %1096 = vmatprep.subr.mxu0 0.0
    %1097 = vmatpush2.msra.mxu0 0.0
    %1098 = vmatprep.subr.mxu0 0.0
    %1099 = vmatpush2.msra.mxu0 0.0
    %1100 = vmatprep.subr.mxu0 0.0
    %1101 = vmatpush2.msra.mxu0 0.0
    %1102 = vmatprep.subr.mxu0 0.0
    %1103 = vmatpush2.msra.mxu0 0.0
    %1104 = vmatprep.subr.mxu0 0.0
    %1105 = vmatpush2.msra.mxu0 0.0
    %1106 = vmatprep.subr.mxu0 0.0
    %1107 = vmatpush2.msra.mxu0 0.0
    %1108 = vmatprep.subr.mxu0 0.0
    %1109 = vmatpush2.msra.mxu0 0.0
    %1110 = vmatprep.subr.mxu0 0.0
    %1111 = vmatpush2.msra.mxu0 0.0
    %1112 = vmatprep.subr.mxu0 0.0
    %1113 = vmatpush2.msra.mxu0 0.0
    %1114 = vmatprep.mubr.f32.mxu0 0.0
    %1115 = vmatmul.mubr.f32.gmra.mxu0 %v1048
    %v1116 = vpop.f32.mrf.mxu0
    %v1117 = vadd.f32 0.0, %v1116
    %v1118 = vpop.f32.mrf.mxu0
    %1119 = vdwg.mxu0
    %v1121 = vrot.slane %v1117, 4
    %v1123 = vadd.f32 %v361, %v1121
    %v1124 = vxor.u32 %v1123, 2147483648
    %v1125 = vmul.f32 %v1124, 1.442695
    %v1126 = vpow.pop %v1125
    %v1127 = vadd.f32 %v1126, 1.0
    %v1128 = vrcp.pop %v1127
    %v1129 = vmul.f32 1.0, %v1128
    %v1130 = vadd.f32 %v1117, %v450
    %v1132 = vrot.slane %v1130, 4
    %1133 = vrot.lane.b32.xlu0 %v1132, 48
    %v1134 = vpop.permute.xlu0 %1133
    %v1136 = vmul.f32 %v1129, %v1134
    %1138 = vrot.lane.b32.xlu0 %v1136, 80
    %v1139 = vpop.permute.xlu0 %1138
    %v1141 = vadd.f32 %v361, %v1139
    %v1142 = vtanh.pop %v1141
    %v1143 = vsub.f32 1.0, %v1129
    %1145 = vrot.lane.b32.xlu0 %v1142, 88
    %v1146 = vpop.permute.xlu0 %1145
    %v1148 = vmul.f32 %v1143, %v1146
    %v1149 = vrot.slane %v1038, 6
    %v1151 = vmul.f32 %v1129, %v1149
    %v1152 = vadd.f32 %v1148, %v1151
    %1154 = vrot.lane.b32.xlu0 %v1152, 88
    %v1155 = vpop.permute.xlu0 %1154
    %1157 = vst.msk [vmem:[#allocation2 + $0x8] sm:$0x30] %vm705, %v1155
    %1158 = vst.msk [vmem:[#allocation2 - $0x2] sm:$0x30] %vm707, %v1155
    %v1159 = vrot.slane %v1152, 4
    %1160 = vrot.lane.b32.xlu0 %v1159, 88
    %v1161 = vpop.permute.xlu0 %1160
    %v1162 = vsel %vm368, %v1161, 0
    %1164 = vmatprep.subr.mxu0 0.0
    %1165 = vmatpush1.msra.mxu0 0.0
    %1166 = vmatprep.subr.mxu0 0.0
    %1167 = vmatpush1.msra.mxu0 0.0
    %1168 = vmatprep.subr.mxu0 0.0
    %1169 = vmatpush1.msra.mxu0 0.0
    %1170 = vmatprep.subr.mxu0 0.0
    %1171 = vmatpush1.msra.mxu0 0.0
    %1172 = vmatprep.subr.mxu0 0.0
    %1173 = vmatpush1.msra.mxu0 0.0
    %1174 = vmatprep.subr.mxu0 0.0
    %1175 = vmatpush1.msra.mxu0 0.0
    %1176 = vmatprep.subr.mxu0 0.0
    %1177 = vmatpush1.msra.mxu0 0.0
    %1178 = vmatprep.subr.mxu0 0.0
    %1179 = vmatpush1.msra.mxu0 0.0
    %1180 = vmatprep.subr.mxu0 0.0
    %1181 = vmatpush1.msra.mxu0 0.0
    %1182 = vmatprep.subr.mxu0 0.0
    %1183 = vmatpush1.msra.mxu0 0.0
    %1184 = vmatprep.subr.mxu0 0.0
    %1185 = vmatpush1.msra.mxu0 0.0
    %1186 = vmatprep.subr.mxu0 0.0
    %1187 = vmatpush1.msra.mxu0 %v181
    %1188 = vmatprep.subr.mxu0 0.0
    %1189 = vmatpush1.msra.mxu0 %v180
    %1190 = vmatprep.subr.mxu0 0.0
    %1191 = vmatpush1.msra.mxu0 %v179
    %1192 = vmatprep.subr.mxu0 0.0
    %1193 = vmatpush1.msra.mxu0 %v178
    %1194 = vmatprep.subr.mxu0 0.0
    %1195 = vmatpush1.msra.mxu0 %v177
    %1196 = vmatprep.subr.mxu0 0.0
    %1197 = vmatpush2.msra.mxu0 0.0
    %1198 = vmatprep.subr.mxu0 0.0
    %1199 = vmatpush2.msra.mxu0 0.0
    %1200 = vmatprep.subr.mxu0 0.0
    %1201 = vmatpush2.msra.mxu0 0.0
    %1202 = vmatprep.subr.mxu0 0.0
    %1203 = vmatpush2.msra.mxu0 0.0
    %1204 = vmatprep.subr.mxu0 0.0
    %1205 = vmatpush2.msra.mxu0 0.0
    %1206 = vmatprep.subr.mxu0 0.0
    %1207 = vmatpush2.msra.mxu0 0.0
    %1208 = vmatprep.subr.mxu0 0.0
    %1209 = vmatpush2.msra.mxu0 0.0
    %1210 = vmatprep.subr.mxu0 0.0
    %1211 = vmatpush2.msra.mxu0 0.0
    %1212 = vmatprep.subr.mxu0 0.0
    %1213 = vmatpush2.msra.mxu0 0.0
    %1214 = vmatprep.subr.mxu0 0.0
    %1215 = vmatpush2.msra.mxu0 0.0
    %1216 = vmatprep.subr.mxu0 0.0
    %1217 = vmatpush2.msra.mxu0 0.0
    %1218 = vmatprep.subr.mxu0 0.0
    %1219 = vmatpush2.msra.mxu0 0.0
    %1220 = vmatprep.subr.mxu0 0.0
    %1221 = vmatpush2.msra.mxu0 0.0
    %1222 = vmatprep.subr.mxu0 0.0
    %1223 = vmatpush2.msra.mxu0 0.0
    %1224 = vmatprep.subr.mxu0 0.0
    %1225 = vmatpush2.msra.mxu0 0.0
    %1226 = vmatprep.subr.mxu0 0.0
    %1227 = vmatpush2.msra.mxu0 0.0
    %1228 = vmatprep.mubr.f32.mxu0 0.0
    %1229 = vmatmul.mubr.f32.gmra.mxu0 %v1162
    %v1230 = vpop.f32.mrf.mxu0
    %v1231 = vadd.f32 0.0, %v1230
    %v1232 = vpop.f32.mrf.mxu0
    %1233 = vdwg.mxu0
    %v1235 = vrot.slane %v1231, 2
    %v1237 = vadd.f32 %v361, %v1235
    %v1238 = vxor.u32 %v1237, 2147483648
    %v1239 = vmul.f32 %v1238, 1.442695
    %v1240 = vpow.pop %v1239
    %v1241 = vadd.f32 %v1240, 1.0
    %v1242 = vrcp.pop %v1241
    %v1243 = vmul.f32 1.0, %v1242
    %v1244 = vadd.f32 %v1231, %v450
    %v1246 = vrot.slane %v1244, 2
    %1247 = vrot.lane.b32.xlu0 %v1246, 48
    %v1248 = vpop.permute.xlu0 %1247
    %v1250 = vmul.f32 %v1243, %v1248
    %1252 = vrot.lane.b32.xlu0 %v1250, 80
    %v1253 = vpop.permute.xlu0 %1252
    %v1255 = vadd.f32 %v361, %v1253
    %v1256 = vtanh.pop %v1255
    %v1257 = vsub.f32 1.0, %v1243
    %1259 = vrot.lane.b32.xlu0 %v1256, 88
    %v1260 = vpop.permute.xlu0 %1259
    %v1262 = vmul.f32 %v1257, %v1260
    %v1263 = vrot.slane %v1152, 6
    %v1265 = vmul.f32 %v1243, %v1263
    %v1266 = vadd.f32 %v1262, %v1265
    %1268 = vrot.lane.b32.xlu0 %v1266, 88
    %v1269 = vpop.permute.xlu0 %1268
    %1271 = vst.msk [vmem:[#allocation2 + $0x8] sm:$0xc0] %vm821, %v1269
    %1272 = vst.msk [vmem:[#allocation2 - $0x6] sm:$0xc0] %vm823, %v1269
    %v1273 = vld [vmem:[#allocation2] sm:$0xff]
    %v1274 = vld [vmem:[#allocation2 + $0x8] sm:$0xff]
    %v1275 = vld [vmem:[%s10] sm:$0xff]
    %v1276 = vld [vmem:[%s10 + $0x8] sm:$0xff]
    %v1277 = vld [vmem:[%s10 + $0x10] sm:$0xff]
    %v1278 = vld [vmem:[%s10 + $0x18] sm:$0xff]
    %v1279 = vld [vmem:[%s10 + $0x20] sm:$0xff]
    %v1280 = vld [vmem:[#allocation9] sm:$0x1]
    %v1281 = vld [vmem:[%s12] sm:$0xff]
    %v1282 = vld [vmem:[%s12 + $0x8] sm:$0xff]
    %v1283 = vld [vmem:[%s12 + $0x10] sm:$0xff]
    %v1284 = vld [vmem:[%s12 + $0x18] sm:$0xff]
    %v1285 = vld [vmem:[%s12 + $0x20] sm:$0xff]
    %v1287 = vlaneseq
    %v1288 = vshrl.u32 %v1287, 7
    %v1289 = vsub.s32 0, %v1288
    %v1290 = vrot.slane %v1280, %v1289
    %v1293 = vsel %vm368, %v1273, 0
    %v1296 = vsel %vm368, %v1274, 0
    %1298 = vmatprep.subr.mxu0 0.0
    %1299 = vmatpush1.msra.mxu0 0.0
    %1300 = vmatprep.subr.mxu0 0.0
    %1301 = vmatpush1.msra.mxu0 0.0
    %1302 = vmatprep.subr.mxu0 0.0
    %1303 = vmatpush1.msra.mxu0 0.0
    %1304 = vmatprep.subr.mxu0 0.0
    %1305 = vmatpush1.msra.mxu0 0.0
    %1306 = vmatprep.subr.mxu0 0.0
    %1307 = vmatpush1.msra.mxu0 0.0
    %1308 = vmatprep.subr.mxu0 0.0
    %1309 = vmatpush1.msra.mxu0 0.0
    %1310 = vmatprep.subr.mxu0 0.0
    %1311 = vmatpush1.msra.mxu0 0.0
    %1312 = vmatprep.subr.mxu0 0.0
    %1313 = vmatpush1.msra.mxu0 0.0
    %1314 = vmatprep.subr.mxu0 0.0
    %1315 = vmatpush1.msra.mxu0 0.0
    %1316 = vmatprep.subr.mxu0 0.0
    %1317 = vmatpush1.msra.mxu0 0.0
    %1318 = vmatprep.subr.mxu0 0.0
    %1319 = vmatpush1.msra.mxu0 0.0
    %1320 = vmatprep.subr.mxu0 0.0
    %1321 = vmatpush1.msra.mxu0 %v1279
    %1322 = vmatprep.subr.mxu0 0.0
    %1323 = vmatpush1.msra.mxu0 %v1278
    %1324 = vmatprep.subr.mxu0 0.0
    %1325 = vmatpush1.msra.mxu0 %v1277
    %1326 = vmatprep.subr.mxu0 0.0
    %1327 = vmatpush1.msra.mxu0 %v1276
    %1328 = vmatprep.subr.mxu0 0.0
    %1329 = vmatpush1.msra.mxu0 %v1275
    %1330 = vmatprep.subr.mxu0 0.0
    %1331 = vmatpush2.msra.mxu0 0.0
    %1332 = vmatprep.subr.mxu0 0.0
    %1333 = vmatpush2.msra.mxu0 0.0
    %1334 = vmatprep.subr.mxu0 0.0
    %1335 = vmatpush2.msra.mxu0 0.0
    %1336 = vmatprep.subr.mxu0 0.0
    %1337 = vmatpush2.msra.mxu0 0.0
    %1338 = vmatprep.subr.mxu0 0.0
    %1339 = vmatpush2.msra.mxu0 0.0
    %1340 = vmatprep.subr.mxu0 0.0
    %1341 = vmatpush2.msra.mxu0 0.0
    %1342 = vmatprep.subr.mxu0 0.0
    %1343 = vmatpush2.msra.mxu0 0.0
    %1344 = vmatprep.subr.mxu0 0.0
    %1345 = vmatpush2.msra.mxu0 0.0
    %1346 = vmatprep.subr.mxu0 0.0
    %1347 = vmatpush2.msra.mxu0 0.0
    %1348 = vmatprep.subr.mxu0 0.0
    %1349 = vmatpush2.msra.mxu0 0.0
    %1350 = vmatprep.subr.mxu0 0.0
    %1351 = vmatpush2.msra.mxu0 0.0
    %1352 = vmatprep.subr.mxu0 0.0
    %1353 = vmatpush2.msra.mxu0 0.0
    %1354 = vmatprep.subr.mxu0 0.0
    %1355 = vmatpush2.msra.mxu0 0.0
    %1356 = vmatprep.subr.mxu0 0.0
    %1357 = vmatpush2.msra.mxu0 0.0
    %1358 = vmatprep.subr.mxu0 0.0
    %1359 = vmatpush2.msra.mxu0 0.0
    %1360 = vmatprep.subr.mxu0 0.0
    %1361 = vmatpush2.msra.mxu0 0.0
    %1362 = vmatprep.mubr.f32.mxu0 0.0
    %1363 = vmatmul.mubr.f32.gmra.mxu0 %v1293
    %v1364 = vpop.f32.mrf.mxu0
    %v1365 = vadd.f32 %v1290, %v1364
    %v1366 = vpop.f32.mrf.mxu0
    %1367 = vmatprep.mubr.f32.mxu0 0.0
    %1368 = vmatmul.mubr.f32.gmra.mxu0 %v1296
    %v1369 = vpop.f32.mrf.mxu0
    %v1370 = vadd.f32 %v1290, %v1369
    %v1371 = vpop.f32.mrf.mxu0
    %1372 = vdwg.mxu0
    %1373 = vmatprep.subr.mxu0 0.0
    %1374 = vmatpush1.msra.mxu0 0.0
    %1375 = vmatprep.subr.mxu0 0.0
    %1376 = vmatpush1.msra.mxu0 0.0
    %1377 = vmatprep.subr.mxu0 0.0
    %1378 = vmatpush1.msra.mxu0 0.0
    %1379 = vmatprep.subr.mxu0 0.0
    %1380 = vmatpush1.msra.mxu0 0.0
    %1381 = vmatprep.subr.mxu0 0.0
    %1382 = vmatpush1.msra.mxu0 0.0
    %1383 = vmatprep.subr.mxu0 0.0
    %1384 = vmatpush1.msra.mxu0 0.0
    %1385 = vmatprep.subr.mxu0 0.0
    %1386 = vmatpush1.msra.mxu0 0.0
    %1387 = vmatprep.subr.mxu0 0.0
    %1388 = vmatpush1.msra.mxu0 0.0
    %1389 = vmatprep.subr.mxu0 0.0
    %1390 = vmatpush1.msra.mxu0 0.0
    %1391 = vmatprep.subr.mxu0 0.0
    %1392 = vmatpush1.msra.mxu0 0.0
    %1393 = vmatprep.subr.mxu0 0.0
    %1394 = vmatpush1.msra.mxu0 0.0
    %1395 = vmatprep.subr.mxu0 0.0
    %1396 = vmatpush1.msra.mxu0 0.0
    %1397 = vmatprep.subr.mxu0 0.0
    %1398 = vmatpush1.msra.mxu0 0.0
    %1399 = vmatprep.subr.mxu0 0.0
    %1400 = vmatpush1.msra.mxu0 0.0
    %1401 = vmatprep.subr.mxu0 0.0
    %1402 = vmatpush1.msra.mxu0 %v1370
    %1403 = vmatprep.subr.mxu0 0.0
    %1404 = vmatpush1.msra.mxu0 %v1365
    %1405 = vmatprep.subr.mxu0 0.0
    %1406 = vmatpush2.msra.mxu0 0.0
    %1407 = vmatprep.subr.mxu0 0.0
    %1408 = vmatpush2.msra.mxu0 0.0
    %1409 = vmatprep.subr.mxu0 0.0
    %1410 = vmatpush2.msra.mxu0 0.0
    %1411 = vmatprep.subr.mxu0 0.0
    %1412 = vmatpush2.msra.mxu0 0.0
    %1413 = vmatprep.subr.mxu0 0.0
    %1414 = vmatpush2.msra.mxu0 0.0
    %1415 = vmatprep.subr.mxu0 0.0
    %1416 = vmatpush2.msra.mxu0 0.0
    %1417 = vmatprep.subr.mxu0 0.0
    %1418 = vmatpush2.msra.mxu0 0.0
    %1419 = vmatprep.subr.mxu0 0.0
    %1420 = vmatpush2.msra.mxu0 0.0
    %1421 = vmatprep.subr.mxu0 0.0
    %1422 = vmatpush2.msra.mxu0 0.0
    %1423 = vmatprep.subr.mxu0 0.0
    %1424 = vmatpush2.msra.mxu0 0.0
    %1425 = vmatprep.subr.mxu0 0.0
    %1426 = vmatpush2.msra.mxu0 0.0
    %1427 = vmatprep.subr.mxu0 0.0
    %1428 = vmatpush2.msra.mxu0 0.0
    %1429 = vmatprep.subr.mxu0 0.0
    %1430 = vmatpush2.msra.mxu0 0.0
    %1431 = vmatprep.subr.mxu0 0.0
    %1432 = vmatpush2.msra.mxu0 0.0
    %1433 = vmatprep.subr.mxu0 0.0
    %1434 = vmatpush2.msra.mxu0 0.0
    %1435 = vmatprep.subr.mxu0 0.0
    %1436 = vmatpush2.msra.mxu0 0.0
    %1437 = vmatprep.mubr.f32.mxu0 0.0
    %1438 = vmatmul.mubr.f32.gmra.mxu0 %v276
    %v1439 = vpop.f32.mrf.mxu0
    %v1440 = vadd.f32 0.0, %v1439
    %v1441 = vpop.f32.mrf.mxu0
    %1442 = vmatprep.mubr.f32.mxu0 0.0
    %1443 = vmatmul.mubr.f32.gmra.mxu0 %v279
    %v1444 = vpop.f32.mrf.mxu0
    %v1445 = vadd.f32 0.0, %v1444
    %v1446 = vpop.f32.mrf.mxu0
    %1447 = vdwg.mxu0
    %v1448 = vsub.f32 %v1365, %v1440
    %v1449 = vsub.f32 %v1370, %v1445
    %v1450 = vmul.f32 %v169, %v1448
    %v1451 = vmul.f32 %v169, %v1449
    %v1452 = vadd.f32 %v1440, %v1450
    %v1453 = vadd.f32 %v1445, %v1451
    %v1454 = vld [vmem:[#allocation10] sm:$0x1]
    %v1456 = vlaneseq
    %v1457 = vshrl.u32 %v1456, 7
    %v1458 = vsub.s32 0, %v1457
    %v1459 = vrot.slane %v1454, %v1458
    %1460 = vmatprep.subr.mxu0 0.0
    %1461 = vmatpush1.msra.mxu0 0.0
    %1462 = vmatprep.subr.mxu0 0.0
    %1463 = vmatpush1.msra.mxu0 0.0
    %1464 = vmatprep.subr.mxu0 0.0
    %1465 = vmatpush1.msra.mxu0 0.0
    %1466 = vmatprep.subr.mxu0 0.0
    %1467 = vmatpush1.msra.mxu0 0.0
    %1468 = vmatprep.subr.mxu0 0.0
    %1469 = vmatpush1.msra.mxu0 0.0
    %1470 = vmatprep.subr.mxu0 0.0
    %1471 = vmatpush1.msra.mxu0 0.0
    %1472 = vmatprep.subr.mxu0 0.0
    %1473 = vmatpush1.msra.mxu0 0.0
    %1474 = vmatprep.subr.mxu0 0.0
    %1475 = vmatpush1.msra.mxu0 0.0
    %1476 = vmatprep.subr.mxu0 0.0
    %1477 = vmatpush1.msra.mxu0 0.0
    %1478 = vmatprep.subr.mxu0 0.0
    %1479 = vmatpush1.msra.mxu0 0.0
    %1480 = vmatprep.subr.mxu0 0.0
    %1481 = vmatpush1.msra.mxu0 0.0
    %1482 = vmatprep.subr.mxu0 0.0
    %1483 = vmatpush1.msra.mxu0 %v1285
    %1484 = vmatprep.subr.mxu0 0.0
    %1485 = vmatpush1.msra.mxu0 %v1284
    %1486 = vmatprep.subr.mxu0 0.0
    %1487 = vmatpush1.msra.mxu0 %v1283
    %1488 = vmatprep.subr.mxu0 0.0
    %1489 = vmatpush1.msra.mxu0 %v1282
    %1490 = vmatprep.subr.mxu0 0.0
    %1491 = vmatpush1.msra.mxu0 %v1281
    %1492 = vmatprep.subr.mxu0 0.0
    %1493 = vmatpush2.msra.mxu0 0.0
    %1494 = vmatprep.subr.mxu0 0.0
    %1495 = vmatpush2.msra.mxu0 0.0
    %1496 = vmatprep.subr.mxu0 0.0
    %1497 = vmatpush2.msra.mxu0 0.0
    %1498 = vmatprep.subr.mxu0 0.0
    %1499 = vmatpush2.msra.mxu0 0.0
    %1500 = vmatprep.subr.mxu0 0.0
    %1501 = vmatpush2.msra.mxu0 0.0
    %1502 = vmatprep.subr.mxu0 0.0
    %1503 = vmatpush2.msra.mxu0 0.0
    %1504 = vmatprep.subr.mxu0 0.0
    %1505 = vmatpush2.msra.mxu0 0.0
    %1506 = vmatprep.subr.mxu0 0.0
    %1507 = vmatpush2.msra.mxu0 0.0
    %1508 = vmatprep.subr.mxu0 0.0
    %1509 = vmatpush2.msra.mxu0 0.0
    %1510 = vmatprep.subr.mxu0 0.0
    %1511 = vmatpush2.msra.mxu0 0.0
    %1512 = vmatprep.subr.mxu0 0.0
    %1513 = vmatpush2.msra.mxu0 0.0
    %1514 = vmatprep.subr.mxu0 0.0
    %1515 = vmatpush2.msra.mxu0 0.0
    %1516 = vmatprep.subr.mxu0 0.0
    %1517 = vmatpush2.msra.mxu0 0.0
    %1518 = vmatprep.subr.mxu0 0.0
    %1519 = vmatpush2.msra.mxu0 0.0
    %1520 = vmatprep.subr.mxu0 0.0
    %1521 = vmatpush2.msra.mxu0 0.0
    %1522 = vmatprep.subr.mxu0 0.0
    %1523 = vmatpush2.msra.mxu0 0.0
    %1524 = vmatprep.mubr.f32.mxu0 0.0
    %1525 = vmatmul.mubr.f32.gmra.mxu0 %v370
    %v1526 = vpop.f32.mrf.mxu0
    %v1527 = vadd.f32 0.0, %v1526
    %v1528 = vpop.f32.mrf.mxu0
    %1529 = vdwg.mxu0
    %v1530 = vadd.f32 %v1452, %v1527
    %v1531 = vxor.u32 %v1530, 2147483648
    %v1532 = vmul.f32 %v1531, 1.442695
    %v1533 = vpow.pop %v1532
    %v1534 = vadd.f32 %v1533, 1.0
    %v1535 = vrcp.pop %v1534
    %v1536 = vmul.f32 1.0, %v1535
    %1537 = vrot.lane.b32.xlu0 %v1459, 80
    %v1538 = vpop.permute.xlu0 %1537
    %v1540 = vadd.f32 %v1527, %v1538
    %1542 = vrot.lane.b32.xlu0 %v1540, 48
    %v1543 = vpop.permute.xlu0 %1542
    %v1545 = vmul.f32 %v1536, %v1543
    %1547 = vrot.lane.b32.xlu0 %v1545, 80
    %v1548 = vpop.permute.xlu0 %1547
    %v1550 = vadd.f32 %v1452, %v1548
    %v1551 = vtanh.pop %v1550
    %v1552 = vsub.f32 1.0, %v1536
    %1554 = vrot.lane.b32.xlu0 %v1551, 88
    %v1555 = vpop.permute.xlu0 %1554
    %v1557 = vmul.f32 %v1552, %v1555
    %v1558 = vmul.f32 %v1536, 0.0
    %v1559 = vadd.f32 %v1557, %v1558
    %1561 = vrot.lane.b32.xlu0 %v1559, 88
    %v1562 = vpop.permute.xlu0 %1561
    %1564 = vst.msk [vmem:[#allocation3] sm:$0x3] %vm476, %v1562
    %1565 = vst.msk [vmem:[#allocation3 + $0xe] sm:$0x3] %vm478, %v1562
    %v1566 = vsel %vm368, %v1562, 0
    %1568 = vmatprep.subr.mxu0 0.0
    %1569 = vmatpush1.msra.mxu0 0.0
    %1570 = vmatprep.subr.mxu0 0.0
    %1571 = vmatpush1.msra.mxu0 0.0
    %1572 = vmatprep.subr.mxu0 0.0
    %1573 = vmatpush1.msra.mxu0 0.0
    %1574 = vmatprep.subr.mxu0 0.0
    %1575 = vmatpush1.msra.mxu0 0.0
    %1576 = vmatprep.subr.mxu0 0.0
    %1577 = vmatpush1.msra.mxu0 0.0
    %1578 = vmatprep.subr.mxu0 0.0
    %1579 = vmatpush1.msra.mxu0 0.0
    %1580 = vmatprep.subr.mxu0 0.0
    %1581 = vmatpush1.msra.mxu0 0.0
    %1582 = vmatprep.subr.mxu0 0.0
    %1583 = vmatpush1.msra.mxu0 0.0
    %1584 = vmatprep.subr.mxu0 0.0
    %1585 = vmatpush1.msra.mxu0 0.0
    %1586 = vmatprep.subr.mxu0 0.0
    %1587 = vmatpush1.msra.mxu0 0.0
    %1588 = vmatprep.subr.mxu0 0.0
    %1589 = vmatpush1.msra.mxu0 0.0
    %1590 = vmatprep.subr.mxu0 0.0
    %1591 = vmatpush1.msra.mxu0 %v1285
    %1592 = vmatprep.subr.mxu0 0.0
    %1593 = vmatpush1.msra.mxu0 %v1284
    %1594 = vmatprep.subr.mxu0 0.0
    %1595 = vmatpush1.msra.mxu0 %v1283
    %1596 = vmatprep.subr.mxu0 0.0
    %1597 = vmatpush1.msra.mxu0 %v1282
    %1598 = vmatprep.subr.mxu0 0.0
    %1599 = vmatpush1.msra.mxu0 %v1281
    %1600 = vmatprep.subr.mxu0 0.0
    %1601 = vmatpush2.msra.mxu0 0.0
    %1602 = vmatprep.subr.mxu0 0.0
    %1603 = vmatpush2.msra.mxu0 0.0
    %1604 = vmatprep.subr.mxu0 0.0
    %1605 = vmatpush2.msra.mxu0 0.0
    %1606 = vmatprep.subr.mxu0 0.0
    %1607 = vmatpush2.msra.mxu0 0.0
    %1608 = vmatprep.subr.mxu0 0.0
    %1609 = vmatpush2.msra.mxu0 0.0
    %1610 = vmatprep.subr.mxu0 0.0
    %1611 = vmatpush2.msra.mxu0 0.0
    %1612 = vmatprep.subr.mxu0 0.0
    %1613 = vmatpush2.msra.mxu0 0.0
    %1614 = vmatprep.subr.mxu0 0.0
    %1615 = vmatpush2.msra.mxu0 0.0
    %1616 = vmatprep.subr.mxu0 0.0
    %1617 = vmatpush2.msra.mxu0 0.0
    %1618 = vmatprep.subr.mxu0 0.0
    %1619 = vmatpush2.msra.mxu0 0.0
    %1620 = vmatprep.subr.mxu0 0.0
    %1621 = vmatpush2.msra.mxu0 0.0
    %1622 = vmatprep.subr.mxu0 0.0
    %1623 = vmatpush2.msra.mxu0 0.0
    %1624 = vmatprep.subr.mxu0 0.0
    %1625 = vmatpush2.msra.mxu0 0.0
    %1626 = vmatprep.subr.mxu0 0.0
    %1627 = vmatpush2.msra.mxu0 0.0
    %1628 = vmatprep.subr.mxu0 0.0
    %1629 = vmatpush2.msra.mxu0 0.0
    %1630 = vmatprep.subr.mxu0 0.0
    %1631 = vmatpush2.msra.mxu0 0.0
    %1632 = vmatprep.mubr.f32.mxu0 0.0
    %1633 = vmatmul.mubr.f32.gmra.mxu0 %v1566
    %v1634 = vpop.f32.mrf.mxu0
    %v1635 = vadd.f32 0.0, %v1634
    %v1636 = vpop.f32.mrf.mxu0
    %1637 = vdwg.mxu0
    %v1639 = vrot.slane %v1635, 6
    %v1641 = vadd.f32 %v1452, %v1639
    %v1642 = vxor.u32 %v1641, 2147483648
    %v1643 = vmul.f32 %v1642, 1.442695
    %v1644 = vpow.pop %v1643
    %v1645 = vadd.f32 %v1644, 1.0
    %v1646 = vrcp.pop %v1645
    %v1647 = vmul.f32 1.0, %v1646
    %v1648 = vadd.f32 %v1635, %v1538
    %v1650 = vrot.slane %v1648, 6
    %1651 = vrot.lane.b32.xlu0 %v1650, 48
    %v1652 = vpop.permute.xlu0 %1651
    %v1654 = vmul.f32 %v1647, %v1652
    %1656 = vrot.lane.b32.xlu0 %v1654, 80
    %v1657 = vpop.permute.xlu0 %1656
    %v1659 = vadd.f32 %v1452, %v1657
    %v1660 = vtanh.pop %v1659
    %v1661 = vsub.f32 1.0, %v1647
    %1663 = vrot.lane.b32.xlu0 %v1660, 88
    %v1664 = vpop.permute.xlu0 %1663
    %v1666 = vmul.f32 %v1661, %v1664
    %v1667 = vrot.slane %v1559, 6
    %v1669 = vmul.f32 %v1647, %v1667
    %v1670 = vadd.f32 %v1666, %v1669
    %1672 = vrot.lane.b32.xlu0 %v1670, 88
    %v1673 = vpop.permute.xlu0 %1672
    %1675 = vst.msk [vmem:[#allocation3] sm:$0xc] %vm589, %v1673
    %1676 = vst.msk [vmem:[#allocation3 + $0xa] sm:$0xc] %vm591, %v1673
    %v1677 = vrot.slane %v1670, 2
    %1678 = vrot.lane.b32.xlu0 %v1677, 88
    %v1679 = vpop.permute.xlu0 %1678
    %v1680 = vsel %vm368, %v1679, 0
    %1682 = vmatprep.subr.mxu0 0.0
    %1683 = vmatpush1.msra.mxu0 0.0
    %1684 = vmatprep.subr.mxu0 0.0
    %1685 = vmatpush1.msra.mxu0 0.0
    %1686 = vmatprep.subr.mxu0 0.0
    %1687 = vmatpush1.msra.mxu0 0.0
    %1688 = vmatprep.subr.mxu0 0.0
    %1689 = vmatpush1.msra.mxu0 0.0
    %1690 = vmatprep.subr.mxu0 0.0
    %1691 = vmatpush1.msra.mxu0 0.0
    %1692 = vmatprep.subr.mxu0 0.0
    %1693 = vmatpush1.msra.mxu0 0.0
    %1694 = vmatprep.subr.mxu0 0.0
    %1695 = vmatpush1.msra.mxu0 0.0
    %1696 = vmatprep.subr.mxu0 0.0
    %1697 = vmatpush1.msra.mxu0 0.0
    %1698 = vmatprep.subr.mxu0 0.0
    %1699 = vmatpush1.msra.mxu0 0.0
    %1700 = vmatprep.subr.mxu0 0.0
    %1701 = vmatpush1.msra.mxu0 0.0
    %1702 = vmatprep.subr.mxu0 0.0
    %1703 = vmatpush1.msra.mxu0 0.0
    %1704 = vmatprep.subr.mxu0 0.0
    %1705 = vmatpush1.msra.mxu0 %v1285
    %1706 = vmatprep.subr.mxu0 0.0
    %1707 = vmatpush1.msra.mxu0 %v1284
    %1708 = vmatprep.subr.mxu0 0.0
    %1709 = vmatpush1.msra.mxu0 %v1283
    %1710 = vmatprep.subr.mxu0 0.0
    %1711 = vmatpush1.msra.mxu0 %v1282
    %1712 = vmatprep.subr.mxu0 0.0
    %1713 = vmatpush1.msra.mxu0 %v1281
    %1714 = vmatprep.subr.mxu0 0.0
    %1715 = vmatpush2.msra.mxu0 0.0
    %1716 = vmatprep.subr.mxu0 0.0
    %1717 = vmatpush2.msra.mxu0 0.0
    %1718 = vmatprep.subr.mxu0 0.0
    %1719 = vmatpush2.msra.mxu0 0.0
    %1720 = vmatprep.subr.mxu0 0.0
    %1721 = vmatpush2.msra.mxu0 0.0
    %1722 = vmatprep.subr.mxu0 0.0
    %1723 = vmatpush2.msra.mxu0 0.0
    %1724 = vmatprep.subr.mxu0 0.0
    %1725 = vmatpush2.msra.mxu0 0.0
    %1726 = vmatprep.subr.mxu0 0.0
    %1727 = vmatpush2.msra.mxu0 0.0
    %1728 = vmatprep.subr.mxu0 0.0
    %1729 = vmatpush2.msra.mxu0 0.0
    %1730 = vmatprep.subr.mxu0 0.0
    %1731 = vmatpush2.msra.mxu0 0.0
    %1732 = vmatprep.subr.mxu0 0.0
    %1733 = vmatpush2.msra.mxu0 0.0
    %1734 = vmatprep.subr.mxu0 0.0
    %1735 = vmatpush2.msra.mxu0 0.0
    %1736 = vmatprep.subr.mxu0 0.0
    %1737 = vmatpush2.msra.mxu0 0.0
    %1738 = vmatprep.subr.mxu0 0.0
    %1739 = vmatpush2.msra.mxu0 0.0
    %1740 = vmatprep.subr.mxu0 0.0
    %1741 = vmatpush2.msra.mxu0 0.0
    %1742 = vmatprep.subr.mxu0 0.0
    %1743 = vmatpush2.msra.mxu0 0.0
    %1744 = vmatprep.subr.mxu0 0.0
    %1745 = vmatpush2.msra.mxu0 0.0
    %1746 = vmatprep.mubr.f32.mxu0 0.0
    %1747 = vmatmul.mubr.f32.gmra.mxu0 %v1680
    %v1748 = vpop.f32.mrf.mxu0
    %v1749 = vadd.f32 0.0, %v1748
    %v1750 = vpop.f32.mrf.mxu0
    %1751 = vdwg.mxu0
    %v1753 = vrot.slane %v1749, 4
    %v1755 = vadd.f32 %v1452, %v1753
    %v1756 = vxor.u32 %v1755, 2147483648
    %v1757 = vmul.f32 %v1756, 1.442695
    %v1758 = vpow.pop %v1757
    %v1759 = vadd.f32 %v1758, 1.0
    %v1760 = vrcp.pop %v1759
    %v1761 = vmul.f32 1.0, %v1760
    %v1762 = vadd.f32 %v1749, %v1538
    %v1764 = vrot.slane %v1762, 4
    %1765 = vrot.lane.b32.xlu0 %v1764, 48
    %v1766 = vpop.permute.xlu0 %1765
    %v1768 = vmul.f32 %v1761, %v1766
    %1770 = vrot.lane.b32.xlu0 %v1768, 80
    %v1771 = vpop.permute.xlu0 %1770
    %v1773 = vadd.f32 %v1452, %v1771
    %v1774 = vtanh.pop %v1773
    %v1775 = vsub.f32 1.0, %v1761
    %1777 = vrot.lane.b32.xlu0 %v1774, 88
    %v1778 = vpop.permute.xlu0 %1777
    %v1780 = vmul.f32 %v1775, %v1778
    %v1781 = vrot.slane %v1670, 6
    %v1783 = vmul.f32 %v1761, %v1781
    %v1784 = vadd.f32 %v1780, %v1783
    %1786 = vrot.lane.b32.xlu0 %v1784, 88
    %v1787 = vpop.permute.xlu0 %1786
    %1789 = vst.msk [vmem:[#allocation3] sm:$0x30] %vm705, %v1787
    %1790 = vst.msk [vmem:[#allocation3 + $0x6] sm:$0x30] %vm707, %v1787
    %v1791 = vrot.slane %v1784, 4
    %1792 = vrot.lane.b32.xlu0 %v1791, 88
    %v1793 = vpop.permute.xlu0 %1792
    %v1794 = vsel %vm368, %v1793, 0
    %1796 = vmatprep.subr.mxu0 0.0
    %1797 = vmatpush1.msra.mxu0 0.0
    %1798 = vmatprep.subr.mxu0 0.0
    %1799 = vmatpush1.msra.mxu0 0.0
    %1800 = vmatprep.subr.mxu0 0.0
    %1801 = vmatpush1.msra.mxu0 0.0
    %1802 = vmatprep.subr.mxu0 0.0
    %1803 = vmatpush1.msra.mxu0 0.0
    %1804 = vmatprep.subr.mxu0 0.0
    %1805 = vmatpush1.msra.mxu0 0.0
    %1806 = vmatprep.subr.mxu0 0.0
    %1807 = vmatpush1.msra.mxu0 0.0
    %1808 = vmatprep.subr.mxu0 0.0
    %1809 = vmatpush1.msra.mxu0 0.0
    %1810 = vmatprep.subr.mxu0 0.0
    %1811 = vmatpush1.msra.mxu0 0.0
    %1812 = vmatprep.subr.mxu0 0.0
    %1813 = vmatpush1.msra.mxu0 0.0
    %1814 = vmatprep.subr.mxu0 0.0
    %1815 = vmatpush1.msra.mxu0 0.0
    %1816 = vmatprep.subr.mxu0 0.0
    %1817 = vmatpush1.msra.mxu0 0.0
    %1818 = vmatprep.subr.mxu0 0.0
    %1819 = vmatpush1.msra.mxu0 %v1285
    %1820 = vmatprep.subr.mxu0 0.0
    %1821 = vmatpush1.msra.mxu0 %v1284
    %1822 = vmatprep.subr.mxu0 0.0
    %1823 = vmatpush1.msra.mxu0 %v1283
    %1824 = vmatprep.subr.mxu0 0.0
    %1825 = vmatpush1.msra.mxu0 %v1282
    %1826 = vmatprep.subr.mxu0 0.0
    %1827 = vmatpush1.msra.mxu0 %v1281
    %1828 = vmatprep.subr.mxu0 0.0
    %1829 = vmatpush2.msra.mxu0 0.0
    %1830 = vmatprep.subr.mxu0 0.0
    %1831 = vmatpush2.msra.mxu0 0.0
    %1832 = vmatprep.subr.mxu0 0.0
    %1833 = vmatpush2.msra.mxu0 0.0
    %1834 = vmatprep.subr.mxu0 0.0
    %1835 = vmatpush2.msra.mxu0 0.0
    %1836 = vmatprep.subr.mxu0 0.0
    %1837 = vmatpush2.msra.mxu0 0.0
    %1838 = vmatprep.subr.mxu0 0.0
    %1839 = vmatpush2.msra.mxu0 0.0
    %1840 = vmatprep.subr.mxu0 0.0
    %1841 = vmatpush2.msra.mxu0 0.0
    %1842 = vmatprep.subr.mxu0 0.0
    %1843 = vmatpush2.msra.mxu0 0.0
    %1844 = vmatprep.subr.mxu0 0.0
    %1845 = vmatpush2.msra.mxu0 0.0
    %1846 = vmatprep.subr.mxu0 0.0
    %1847 = vmatpush2.msra.mxu0 0.0
    %1848 = vmatprep.subr.mxu0 0.0
    %1849 = vmatpush2.msra.mxu0 0.0
    %1850 = vmatprep.subr.mxu0 0.0
    %1851 = vmatpush2.msra.mxu0 0.0
    %1852 = vmatprep.subr.mxu0 0.0
    %1853 = vmatpush2.msra.mxu0 0.0
    %1854 = vmatprep.subr.mxu0 0.0
    %1855 = vmatpush2.msra.mxu0 0.0
    %1856 = vmatprep.subr.mxu0 0.0
    %1857 = vmatpush2.msra.mxu0 0.0
    %1858 = vmatprep.subr.mxu0 0.0
    %1859 = vmatpush2.msra.mxu0 0.0
    %1860 = vmatprep.mubr.f32.mxu0 0.0
    %1861 = vmatmul.mubr.f32.gmra.mxu0 %v1794
    %v1862 = vpop.f32.mrf.mxu0
    %v1863 = vadd.f32 0.0, %v1862
    %v1864 = vpop.f32.mrf.mxu0
    %1865 = vdwg.mxu0
    %v1867 = vrot.slane %v1863, 2
    %v1869 = vadd.f32 %v1452, %v1867
    %v1870 = vxor.u32 %v1869, 2147483648
    %v1871 = vmul.f32 %v1870, 1.442695
    %v1872 = vpow.pop %v1871
    %v1873 = vadd.f32 %v1872, 1.0
    %v1874 = vrcp.pop %v1873
    %v1875 = vmul.f32 1.0, %v1874
    %v1876 = vadd.f32 %v1863, %v1538
    %v1878 = vrot.slane %v1876, 2
    %1879 = vrot.lane.b32.xlu0 %v1878, 48
    %v1880 = vpop.permute.xlu0 %1879
    %v1882 = vmul.f32 %v1875, %v1880
    %1884 = vrot.lane.b32.xlu0 %v1882, 80
    %v1885 = vpop.permute.xlu0 %1884
    %v1887 = vadd.f32 %v1452, %v1885
    %v1888 = vtanh.pop %v1887
    %v1889 = vsub.f32 1.0, %v1875
    %1891 = vrot.lane.b32.xlu0 %v1888, 88
    %v1892 = vpop.permute.xlu0 %1891
    %v1894 = vmul.f32 %v1889, %v1892
    %v1895 = vrot.slane %v1784, 6
    %v1897 = vmul.f32 %v1875, %v1895
    %v1898 = vadd.f32 %v1894, %v1897
    %1900 = vrot.lane.b32.xlu0 %v1898, 88
    %v1901 = vpop.permute.xlu0 %1900
    %1903 = vst.msk [vmem:[#allocation3] sm:$0xc0] %vm821, %v1901
    %1904 = vst.msk [vmem:[#allocation3 + $0x2] sm:$0xc0] %vm823, %v1901
    %v1905 = vrot.slane %v1898, 6
    %1906 = vrot.lane.b32.xlu0 %v1905, 88
    %v1907 = vpop.permute.xlu0 %1906
    %v1908 = vsel %vm368, %v1907, 0
    %1910 = vmatprep.subr.mxu0 0.0
    %1911 = vmatpush1.msra.mxu0 0.0
    %1912 = vmatprep.subr.mxu0 0.0
    %1913 = vmatpush1.msra.mxu0 0.0
    %1914 = vmatprep.subr.mxu0 0.0
    %1915 = vmatpush1.msra.mxu0 0.0
    %1916 = vmatprep.subr.mxu0 0.0
    %1917 = vmatpush1.msra.mxu0 0.0
    %1918 = vmatprep.subr.mxu0 0.0
    %1919 = vmatpush1.msra.mxu0 0.0
    %1920 = vmatprep.subr.mxu0 0.0
    %1921 = vmatpush1.msra.mxu0 0.0
    %1922 = vmatprep.subr.mxu0 0.0
    %1923 = vmatpush1.msra.mxu0 0.0
    %1924 = vmatprep.subr.mxu0 0.0
    %1925 = vmatpush1.msra.mxu0 0.0
    %1926 = vmatprep.subr.mxu0 0.0
    %1927 = vmatpush1.msra.mxu0 0.0
    %1928 = vmatprep.subr.mxu0 0.0
    %1929 = vmatpush1.msra.mxu0 0.0
    %1930 = vmatprep.subr.mxu0 0.0
    %1931 = vmatpush1.msra.mxu0 0.0
    %1932 = vmatprep.subr.mxu0 0.0
    %1933 = vmatpush1.msra.mxu0 %v1285
    %1934 = vmatprep.subr.mxu0 0.0
    %1935 = vmatpush1.msra.mxu0 %v1284
    %1936 = vmatprep.subr.mxu0 0.0
    %1937 = vmatpush1.msra.mxu0 %v1283
    %1938 = vmatprep.subr.mxu0 0.0
    %1939 = vmatpush1.msra.mxu0 %v1282
    %1940 = vmatprep.subr.mxu0 0.0
    %1941 = vmatpush1.msra.mxu0 %v1281
    %1942 = vmatprep.subr.mxu0 0.0
    %1943 = vmatpush2.msra.mxu0 0.0
    %1944 = vmatprep.subr.mxu0 0.0
    %1945 = vmatpush2.msra.mxu0 0.0
    %1946 = vmatprep.subr.mxu0 0.0
    %1947 = vmatpush2.msra.mxu0 0.0
    %1948 = vmatprep.subr.mxu0 0.0
    %1949 = vmatpush2.msra.mxu0 0.0
    %1950 = vmatprep.subr.mxu0 0.0
    %1951 = vmatpush2.msra.mxu0 0.0
    %1952 = vmatprep.subr.mxu0 0.0
    %1953 = vmatpush2.msra.mxu0 0.0
    %1954 = vmatprep.subr.mxu0 0.0
    %1955 = vmatpush2.msra.mxu0 0.0
    %1956 = vmatprep.subr.mxu0 0.0
    %1957 = vmatpush2.msra.mxu0 0.0
    %1958 = vmatprep.subr.mxu0 0.0
    %1959 = vmatpush2.msra.mxu0 0.0
    %1960 = vmatprep.subr.mxu0 0.0
    %1961 = vmatpush2.msra.mxu0 0.0
    %1962 = vmatprep.subr.mxu0 0.0
    %1963 = vmatpush2.msra.mxu0 0.0
    %1964 = vmatprep.subr.mxu0 0.0
    %1965 = vmatpush2.msra.mxu0 0.0
    %1966 = vmatprep.subr.mxu0 0.0
    %1967 = vmatpush2.msra.mxu0 0.0
    %1968 = vmatprep.subr.mxu0 0.0
    %1969 = vmatpush2.msra.mxu0 0.0
    %1970 = vmatprep.subr.mxu0 0.0
    %1971 = vmatpush2.msra.mxu0 0.0
    %1972 = vmatprep.subr.mxu0 0.0
    %1973 = vmatpush2.msra.mxu0 0.0
    %1974 = vmatprep.mubr.f32.mxu0 0.0
    %1975 = vmatmul.mubr.f32.gmra.mxu0 %v1908
    %v1976 = vpop.f32.mrf.mxu0
    %v1977 = vadd.f32 0.0, %v1976
    %v1978 = vpop.f32.mrf.mxu0
    %1979 = vdwg.mxu0
    %v1980 = vadd.f32 %v1453, %v1977
    %v1981 = vxor.u32 %v1980, 2147483648
    %v1982 = vmul.f32 %v1981, 1.442695
    %v1983 = vpow.pop %v1982
    %v1984 = vadd.f32 %v1983, 1.0
    %v1985 = vrcp.pop %v1984
    %v1986 = vmul.f32 1.0, %v1985
    %v1987 = vadd.f32 %v1977, %v1538
    %1989 = vrot.lane.b32.xlu0 %v1987, 48
    %v1990 = vpop.permute.xlu0 %1989
    %v1992 = vmul.f32 %v1986, %v1990
    %1994 = vrot.lane.b32.xlu0 %v1992, 80
    %v1995 = vpop.permute.xlu0 %1994
    %v1997 = vadd.f32 %v1453, %v1995
    %v1998 = vtanh.pop %v1997
    %v1999 = vsub.f32 1.0, %v1986
    %2001 = vrot.lane.b32.xlu0 %v1998, 88
    %v2002 = vpop.permute.xlu0 %2001
    %v2004 = vmul.f32 %v1999, %v2002
    %v2006 = vmul.f32 %v1986, %v1905
    %v2007 = vadd.f32 %v2004, %v2006
    %2009 = vrot.lane.b32.xlu0 %v2007, 88
    %v2010 = vpop.permute.xlu0 %2009
    %2012 = vst.msk [vmem:[#allocation3 + $0x8] sm:$0x3] %vm476, %v2010
    %2013 = vst.msk [vmem:[#allocation3 + $0x6] sm:$0x3] %vm478, %v2010
    %v2014 = vsel %vm368, %v2010, 0
    %2016 = vmatprep.subr.mxu0 0.0
    %2017 = vmatpush1.msra.mxu0 0.0
    %2018 = vmatprep.subr.mxu0 0.0
    %2019 = vmatpush1.msra.mxu0 0.0
    %2020 = vmatprep.subr.mxu0 0.0
    %2021 = vmatpush1.msra.mxu0 0.0
    %2022 = vmatprep.subr.mxu0 0.0
    %2023 = vmatpush1.msra.mxu0 0.0
    %2024 = vmatprep.subr.mxu0 0.0
    %2025 = vmatpush1.msra.mxu0 0.0
    %2026 = vmatprep.subr.mxu0 0.0
    %2027 = vmatpush1.msra.mxu0 0.0
    %2028 = vmatprep.subr.mxu0 0.0
    %2029 = vmatpush1.msra.mxu0 0.0
    %2030 = vmatprep.subr.mxu0 0.0
    %2031 = vmatpush1.msra.mxu0 0.0
    %2032 = vmatprep.subr.mxu0 0.0
    %2033 = vmatpush1.msra.mxu0 0.0
    %2034 = vmatprep.subr.mxu0 0.0
    %2035 = vmatpush1.msra.mxu0 0.0
    %2036 = vmatprep.subr.mxu0 0.0
    %2037 = vmatpush1.msra.mxu0 0.0
    %2038 = vmatprep.subr.mxu0 0.0
    %2039 = vmatpush1.msra.mxu0 %v1285
    %2040 = vmatprep.subr.mxu0 0.0
    %2041 = vmatpush1.msra.mxu0 %v1284
    %2042 = vmatprep.subr.mxu0 0.0
    %2043 = vmatpush1.msra.mxu0 %v1283
    %2044 = vmatprep.subr.mxu0 0.0
    %2045 = vmatpush1.msra.mxu0 %v1282
    %2046 = vmatprep.subr.mxu0 0.0
    %2047 = vmatpush1.msra.mxu0 %v1281
    %2048 = vmatprep.subr.mxu0 0.0
    %2049 = vmatpush2.msra.mxu0 0.0
    %2050 = vmatprep.subr.mxu0 0.0
    %2051 = vmatpush2.msra.mxu0 0.0
    %2052 = vmatprep.subr.mxu0 0.0
    %2053 = vmatpush2.msra.mxu0 0.0
    %2054 = vmatprep.subr.mxu0 0.0
    %2055 = vmatpush2.msra.mxu0 0.0
    %2056 = vmatprep.subr.mxu0 0.0
    %2057 = vmatpush2.msra.mxu0 0.0
    %2058 = vmatprep.subr.mxu0 0.0
    %2059 = vmatpush2.msra.mxu0 0.0
    %2060 = vmatprep.subr.mxu0 0.0
    %2061 = vmatpush2.msra.mxu0 0.0
    %2062 = vmatprep.subr.mxu0 0.0
    %2063 = vmatpush2.msra.mxu0 0.0
    %2064 = vmatprep.subr.mxu0 0.0
    %2065 = vmatpush2.msra.mxu0 0.0
    %2066 = vmatprep.subr.mxu0 0.0
    %2067 = vmatpush2.msra.mxu0 0.0
    %2068 = vmatprep.subr.mxu0 0.0
    %2069 = vmatpush2.msra.mxu0 0.0
    %2070 = vmatprep.subr.mxu0 0.0
    %2071 = vmatpush2.msra.mxu0 0.0
    %2072 = vmatprep.subr.mxu0 0.0
    %2073 = vmatpush2.msra.mxu0 0.0
    %2074 = vmatprep.subr.mxu0 0.0
    %2075 = vmatpush2.msra.mxu0 0.0
    %2076 = vmatprep.subr.mxu0 0.0
    %2077 = vmatpush2.msra.mxu0 0.0
    %2078 = vmatprep.subr.mxu0 0.0
    %2079 = vmatpush2.msra.mxu0 0.0
    %2080 = vmatprep.mubr.f32.mxu0 0.0
    %2081 = vmatmul.mubr.f32.gmra.mxu0 %v2014
    %v2082 = vpop.f32.mrf.mxu0
    %v2083 = vadd.f32 0.0, %v2082
    %v2084 = vpop.f32.mrf.mxu0
    %2085 = vdwg.mxu0
    %v2087 = vrot.slane %v2083, 6
    %v2089 = vadd.f32 %v1453, %v2087
    %v2090 = vxor.u32 %v2089, 2147483648
    %v2091 = vmul.f32 %v2090, 1.442695
    %v2092 = vpow.pop %v2091
    %v2093 = vadd.f32 %v2092, 1.0
    %v2094 = vrcp.pop %v2093
    %v2095 = vmul.f32 1.0, %v2094
    %v2096 = vadd.f32 %v2083, %v1538
    %v2098 = vrot.slane %v2096, 6
    %2099 = vrot.lane.b32.xlu0 %v2098, 48
    %v2100 = vpop.permute.xlu0 %2099
    %v2102 = vmul.f32 %v2095, %v2100
    %2104 = vrot.lane.b32.xlu0 %v2102, 80
    %v2105 = vpop.permute.xlu0 %2104
    %v2107 = vadd.f32 %v1453, %v2105
    %v2108 = vtanh.pop %v2107
    %v2109 = vsub.f32 1.0, %v2095
    %2111 = vrot.lane.b32.xlu0 %v2108, 88
    %v2112 = vpop.permute.xlu0 %2111
    %v2114 = vmul.f32 %v2109, %v2112
    %v2115 = vrot.slane %v2007, 6
    %v2117 = vmul.f32 %v2095, %v2115
    %v2118 = vadd.f32 %v2114, %v2117
    %2120 = vrot.lane.b32.xlu0 %v2118, 88
    %v2121 = vpop.permute.xlu0 %2120
    %2123 = vst.msk [vmem:[#allocation3 + $0x8] sm:$0xc] %vm589, %v2121
    %2124 = vst.msk [vmem:[#allocation3 + $0x2] sm:$0xc] %vm591, %v2121
    %v2125 = vrot.slane %v2118, 2
    %2126 = vrot.lane.b32.xlu0 %v2125, 88
    %v2127 = vpop.permute.xlu0 %2126
    %v2128 = vsel %vm368, %v2127, 0
    %2130 = vmatprep.subr.mxu0 0.0
    %2131 = vmatpush1.msra.mxu0 0.0
    %2132 = vmatprep.subr.mxu0 0.0
    %2133 = vmatpush1.msra.mxu0 0.0
    %2134 = vmatprep.subr.mxu0 0.0
    %2135 = vmatpush1.msra.mxu0 0.0
    %2136 = vmatprep.subr.mxu0 0.0
    %2137 = vmatpush1.msra.mxu0 0.0
    %2138 = vmatprep.subr.mxu0 0.0
    %2139 = vmatpush1.msra.mxu0 0.0
    %2140 = vmatprep.subr.mxu0 0.0
    %2141 = vmatpush1.msra.mxu0 0.0
    %2142 = vmatprep.subr.mxu0 0.0
    %2143 = vmatpush1.msra.mxu0 0.0
    %2144 = vmatprep.subr.mxu0 0.0
    %2145 = vmatpush1.msra.mxu0 0.0
    %2146 = vmatprep.subr.mxu0 0.0
    %2147 = vmatpush1.msra.mxu0 0.0
    %2148 = vmatprep.subr.mxu0 0.0
    %2149 = vmatpush1.msra.mxu0 0.0
    %2150 = vmatprep.subr.mxu0 0.0
    %2151 = vmatpush1.msra.mxu0 0.0
    %2152 = vmatprep.subr.mxu0 0.0
    %2153 = vmatpush1.msra.mxu0 %v1285
    %2154 = vmatprep.subr.mxu0 0.0
    %2155 = vmatpush1.msra.mxu0 %v1284
    %2156 = vmatprep.subr.mxu0 0.0
    %2157 = vmatpush1.msra.mxu0 %v1283
    %2158 = vmatprep.subr.mxu0 0.0
    %2159 = vmatpush1.msra.mxu0 %v1282
    %2160 = vmatprep.subr.mxu0 0.0
    %2161 = vmatpush1.msra.mxu0 %v1281
    %2162 = vmatprep.subr.mxu0 0.0
    %2163 = vmatpush2.msra.mxu0 0.0
    %2164 = vmatprep.subr.mxu0 0.0
    %2165 = vmatpush2.msra.mxu0 0.0
    %2166 = vmatprep.subr.mxu0 0.0
    %2167 = vmatpush2.msra.mxu0 0.0
    %2168 = vmatprep.subr.mxu0 0.0
    %2169 = vmatpush2.msra.mxu0 0.0
    %2170 = vmatprep.subr.mxu0 0.0
    %2171 = vmatpush2.msra.mxu0 0.0
    %2172 = vmatprep.subr.mxu0 0.0
    %2173 = vmatpush2.msra.mxu0 0.0
    %2174 = vmatprep.subr.mxu0 0.0
    %2175 = vmatpush2.msra.mxu0 0.0
    %2176 = vmatprep.subr.mxu0 0.0
    %2177 = vmatpush2.msra.mxu0 0.0
    %2178 = vmatprep.subr.mxu0 0.0
    %2179 = vmatpush2.msra.mxu0 0.0
    %2180 = vmatprep.subr.mxu0 0.0
    %2181 = vmatpush2.msra.mxu0 0.0
    %2182 = vmatprep.subr.mxu0 0.0
    %2183 = vmatpush2.msra.mxu0 0.0
    %2184 = vmatprep.subr.mxu0 0.0
    %2185 = vmatpush2.msra.mxu0 0.0
    %2186 = vmatprep.subr.mxu0 0.0
    %2187 = vmatpush2.msra.mxu0 0.0
    %2188 = vmatprep.subr.mxu0 0.0
    %2189 = vmatpush2.msra.mxu0 0.0
    %2190 = vmatprep.subr.mxu0 0.0
    %2191 = vmatpush2.msra.mxu0 0.0
    %2192 = vmatprep.subr.mxu0 0.0
    %2193 = vmatpush2.msra.mxu0 0.0
    %2194 = vmatprep.mubr.f32.mxu0 0.0
    %2195 = vmatmul.mubr.f32.gmra.mxu0 %v2128
    %v2196 = vpop.f32.mrf.mxu0
    %v2197 = vadd.f32 0.0, %v2196
    %v2198 = vpop.f32.mrf.mxu0
    %2199 = vdwg.mxu0
    %v2201 = vrot.slane %v2197, 4
    %v2203 = vadd.f32 %v1453, %v2201
    %v2204 = vxor.u32 %v2203, 2147483648
    %v2205 = vmul.f32 %v2204, 1.442695
    %v2206 = vpow.pop %v2205
    %v2207 = vadd.f32 %v2206, 1.0
    %v2208 = vrcp.pop %v2207
    %v2209 = vmul.f32 1.0, %v2208
    %v2210 = vadd.f32 %v2197, %v1538
    %v2212 = vrot.slane %v2210, 4
    %2213 = vrot.lane.b32.xlu0 %v2212, 48
    %v2214 = vpop.permute.xlu0 %2213
    %v2216 = vmul.f32 %v2209, %v2214
    %2218 = vrot.lane.b32.xlu0 %v2216, 80
    %v2219 = vpop.permute.xlu0 %2218
    %v2221 = vadd.f32 %v1453, %v2219
    %v2222 = vtanh.pop %v2221
    %v2223 = vsub.f32 1.0, %v2209
    %2225 = vrot.lane.b32.xlu0 %v2222, 88
    %v2226 = vpop.permute.xlu0 %2225
    %v2228 = vmul.f32 %v2223, %v2226
    %v2229 = vrot.slane %v2118, 6
    %v2231 = vmul.f32 %v2209, %v2229
    %v2232 = vadd.f32 %v2228, %v2231
    %2234 = vrot.lane.b32.xlu0 %v2232, 88
    %v2235 = vpop.permute.xlu0 %2234
    %2237 = vst.msk [vmem:[#allocation3 + $0x8] sm:$0x30] %vm705, %v2235
    %2238 = vst.msk [vmem:[#allocation3 - $0x2] sm:$0x30] %vm707, %v2235
    %v2239 = vrot.slane %v2232, 4
    %2240 = vrot.lane.b32.xlu0 %v2239, 88
    %v2241 = vpop.permute.xlu0 %2240
    %v2242 = vsel %vm368, %v2241, 0
    %2244 = vmatprep.subr.mxu0 0.0
    %2245 = vmatpush1.msra.mxu0 0.0
    %2246 = vmatprep.subr.mxu0 0.0
    %2247 = vmatpush1.msra.mxu0 0.0
    %2248 = vmatprep.subr.mxu0 0.0
    %2249 = vmatpush1.msra.mxu0 0.0
    %2250 = vmatprep.subr.mxu0 0.0
    %2251 = vmatpush1.msra.mxu0 0.0
    %2252 = vmatprep.subr.mxu0 0.0
    %2253 = vmatpush1.msra.mxu0 0.0
    %2254 = vmatprep.subr.mxu0 0.0
    %2255 = vmatpush1.msra.mxu0 0.0
    %2256 = vmatprep.subr.mxu0 0.0
    %2257 = vmatpush1.msra.mxu0 0.0
    %2258 = vmatprep.subr.mxu0 0.0
    %2259 = vmatpush1.msra.mxu0 0.0
    %2260 = vmatprep.subr.mxu0 0.0
    %2261 = vmatpush1.msra.mxu0 0.0
    %2262 = vmatprep.subr.mxu0 0.0
    %2263 = vmatpush1.msra.mxu0 0.0
    %2264 = vmatprep.subr.mxu0 0.0
    %2265 = vmatpush1.msra.mxu0 0.0
    %2266 = vmatprep.subr.mxu0 0.0
    %2267 = vmatpush1.msra.mxu0 %v1285
    %2268 = vmatprep.subr.mxu0 0.0
    %2269 = vmatpush1.msra.mxu0 %v1284
    %2270 = vmatprep.subr.mxu0 0.0
    %2271 = vmatpush1.msra.mxu0 %v1283
    %2272 = vmatprep.subr.mxu0 0.0
    %2273 = vmatpush1.msra.mxu0 %v1282
    %2274 = vmatprep.subr.mxu0 0.0
    %2275 = vmatpush1.msra.mxu0 %v1281
    %2276 = vmatprep.subr.mxu0 0.0
    %2277 = vmatpush2.msra.mxu0 0.0
    %2278 = vmatprep.subr.mxu0 0.0
    %2279 = vmatpush2.msra.mxu0 0.0
    %2280 = vmatprep.subr.mxu0 0.0
    %2281 = vmatpush2.msra.mxu0 0.0
    %2282 = vmatprep.subr.mxu0 0.0
    %2283 = vmatpush2.msra.mxu0 0.0
    %2284 = vmatprep.subr.mxu0 0.0
    %2285 = vmatpush2.msra.mxu0 0.0
    %2286 = vmatprep.subr.mxu0 0.0
    %2287 = vmatpush2.msra.mxu0 0.0
    %2288 = vmatprep.subr.mxu0 0.0
    %2289 = vmatpush2.msra.mxu0 0.0
    %2290 = vmatprep.subr.mxu0 0.0
    %2291 = vmatpush2.msra.mxu0 0.0
    %2292 = vmatprep.subr.mxu0 0.0
    %2293 = vmatpush2.msra.mxu0 0.0
    %2294 = vmatprep.subr.mxu0 0.0
    %2295 = vmatpush2.msra.mxu0 0.0
    %2296 = vmatprep.subr.mxu0 0.0
    %2297 = vmatpush2.msra.mxu0 0.0
    %2298 = vmatprep.subr.mxu0 0.0
    %2299 = vmatpush2.msra.mxu0 0.0
    %2300 = vmatprep.subr.mxu0 0.0
    %2301 = vmatpush2.msra.mxu0 0.0
    %2302 = vmatprep.subr.mxu0 0.0
    %2303 = vmatpush2.msra.mxu0 0.0
    %2304 = vmatprep.subr.mxu0 0.0
    %2305 = vmatpush2.msra.mxu0 0.0
    %2306 = vmatprep.subr.mxu0 0.0
    %2307 = vmatpush2.msra.mxu0 0.0
    %2308 = vmatprep.mubr.f32.mxu0 0.0
    %2309 = vmatmul.mubr.f32.gmra.mxu0 %v2242
    %v2310 = vpop.f32.mrf.mxu0
    %v2311 = vadd.f32 0.0, %v2310
    %v2312 = vpop.f32.mrf.mxu0
    %2313 = vdwg.mxu0
    %v2315 = vrot.slane %v2311, 2
    %v2317 = vadd.f32 %v1453, %v2315
    %v2318 = vxor.u32 %v2317, 2147483648
    %v2319 = vmul.f32 %v2318, 1.442695
    %v2320 = vpow.pop %v2319
    %v2321 = vadd.f32 %v2320, 1.0
    %v2322 = vrcp.pop %v2321
    %v2323 = vmul.f32 1.0, %v2322
    %v2324 = vadd.f32 %v2311, %v1538
    %v2326 = vrot.slane %v2324, 2
    %2327 = vrot.lane.b32.xlu0 %v2326, 48
    %v2328 = vpop.permute.xlu0 %2327
    %v2330 = vmul.f32 %v2323, %v2328
    %2332 = vrot.lane.b32.xlu0 %v2330, 80
    %v2333 = vpop.permute.xlu0 %2332
    %v2335 = vadd.f32 %v1453, %v2333
    %v2336 = vtanh.pop %v2335
    %v2337 = vsub.f32 1.0, %v2323
    %2339 = vrot.lane.b32.xlu0 %v2336, 88
    %v2340 = vpop.permute.xlu0 %2339
    %v2342 = vmul.f32 %v2337, %v2340
    %v2343 = vrot.slane %v2232, 6
    %v2345 = vmul.f32 %v2323, %v2343
    %v2346 = vadd.f32 %v2342, %v2345
    %2348 = vrot.lane.b32.xlu0 %v2346, 88
    %v2349 = vpop.permute.xlu0 %2348
    %2351 = vst.msk [vmem:[#allocation3 + $0x8] sm:$0xc0] %vm821, %v2349
    %2352 = vst.msk [vmem:[#allocation3 - $0x6] sm:$0xc0] %vm823, %v2349
    %v2353 = vld [vmem:[#allocation3] sm:$0xff]
    %v2354 = vld [vmem:[#allocation3 + $0x8] sm:$0xff]
    %v2355 = vld [vmem:[%s14] sm:$0xff]
    %v2356 = vld [vmem:[%s14 + $0x8] sm:$0xff]
    %v2357 = vld [vmem:[%s14 + $0x10] sm:$0xff]
    %v2358 = vld [vmem:[%s14 + $0x18] sm:$0xff]
    %v2359 = vld [vmem:[%s14 + $0x20] sm:$0xff]
    %v2360 = vld [vmem:[#allocation12] sm:$0x1]
    %v2362 = vlaneseq
    %v2363 = vshrl.u32 %v2362, 7
    %v2364 = vsub.s32 0, %v2363
    %v2365 = vrot.slane %v2360, %v2364
    %v2368 = vsel %vm368, %v2353, 0
    %v2371 = vsel %vm368, %v2354, 0
    %2373 = vmatprep.subr.mxu0 0.0
    %2374 = vmatpush1.msra.mxu0 0.0
    %2375 = vmatprep.subr.mxu0 0.0
    %2376 = vmatpush1.msra.mxu0 0.0
    %2377 = vmatprep.subr.mxu0 0.0
    %2378 = vmatpush1.msra.mxu0 0.0
    %2379 = vmatprep.subr.mxu0 0.0
    %2380 = vmatpush1.msra.mxu0 0.0
    %2381 = vmatprep.subr.mxu0 0.0
    %2382 = vmatpush1.msra.mxu0 0.0
    %2383 = vmatprep.subr.mxu0 0.0
    %2384 = vmatpush1.msra.mxu0 0.0
    %2385 = vmatprep.subr.mxu0 0.0
    %2386 = vmatpush1.msra.mxu0 0.0
    %2387 = vmatprep.subr.mxu0 0.0
    %2388 = vmatpush1.msra.mxu0 0.0
    %2389 = vmatprep.subr.mxu0 0.0
    %2390 = vmatpush1.msra.mxu0 0.0
    %2391 = vmatprep.subr.mxu0 0.0
    %2392 = vmatpush1.msra.mxu0 0.0
    %2393 = vmatprep.subr.mxu0 0.0
    %2394 = vmatpush1.msra.mxu0 0.0
    %2395 = vmatprep.subr.mxu0 0.0
    %2396 = vmatpush1.msra.mxu0 %v2359
    %2397 = vmatprep.subr.mxu0 0.0
    %2398 = vmatpush1.msra.mxu0 %v2358
    %2399 = vmatprep.subr.mxu0 0.0
    %2400 = vmatpush1.msra.mxu0 %v2357
    %2401 = vmatprep.subr.mxu0 0.0
    %2402 = vmatpush1.msra.mxu0 %v2356
    %2403 = vmatprep.subr.mxu0 0.0
    %2404 = vmatpush1.msra.mxu0 %v2355
    %2405 = vmatprep.subr.mxu0 0.0
    %2406 = vmatpush2.msra.mxu0 0.0
    %2407 = vmatprep.subr.mxu0 0.0
    %2408 = vmatpush2.msra.mxu0 0.0
    %2409 = vmatprep.subr.mxu0 0.0
    %2410 = vmatpush2.msra.mxu0 0.0
    %2411 = vmatprep.subr.mxu0 0.0
    %2412 = vmatpush2.msra.mxu0 0.0
    %2413 = vmatprep.subr.mxu0 0.0
    %2414 = vmatpush2.msra.mxu0 0.0
    %2415 = vmatprep.subr.mxu0 0.0
    %2416 = vmatpush2.msra.mxu0 0.0
    %2417 = vmatprep.subr.mxu0 0.0
    %2418 = vmatpush2.msra.mxu0 0.0
    %2419 = vmatprep.subr.mxu0 0.0
    %2420 = vmatpush2.msra.mxu0 0.0
    %2421 = vmatprep.subr.mxu0 0.0
    %2422 = vmatpush2.msra.mxu0 0.0
    %2423 = vmatprep.subr.mxu0 0.0
    %2424 = vmatpush2.msra.mxu0 0.0
    %2425 = vmatprep.subr.mxu0 0.0
    %2426 = vmatpush2.msra.mxu0 0.0
    %2427 = vmatprep.subr.mxu0 0.0
    %2428 = vmatpush2.msra.mxu0 0.0
    %2429 = vmatprep.subr.mxu0 0.0
    %2430 = vmatpush2.msra.mxu0 0.0
    %2431 = vmatprep.subr.mxu0 0.0
    %2432 = vmatpush2.msra.mxu0 0.0
    %2433 = vmatprep.subr.mxu0 0.0
    %2434 = vmatpush2.msra.mxu0 0.0
    %2435 = vmatprep.subr.mxu0 0.0
    %2436 = vmatpush2.msra.mxu0 0.0
    %2437 = vmatprep.mubr.f32.mxu0 0.0
    %2438 = vmatmul.mubr.f32.gmra.mxu0 %v2368
    %v2439 = vpop.f32.mrf.mxu0
    %v2440 = vadd.f32 %v2365, %v2439
    %v2441 = vpop.f32.mrf.mxu0
    %2442 = vmatprep.mubr.f32.mxu0 0.0
    %2443 = vmatmul.mubr.f32.gmra.mxu0 %v2371
    %v2444 = vpop.f32.mrf.mxu0
    %v2445 = vadd.f32 %v2365, %v2444
    %v2446 = vpop.f32.mrf.mxu0
    %2447 = vdwg.mxu0
    %2450 = vrot.lane.b32.xlu0 %v2440, 88
    %v2451 = vpop.permute.xlu0 %2450
    %2452 = vrot.lane.b32.xlu0 %v2445, 88
    %v2453 = vpop.permute.xlu0 %2452
    %v2454 = vsel %vm368, %v2440, 0
    %v2456 = vsel %vm368, %v2445, 0
    %v2458 = vsel %vm368, %v2451, 0
    %v2460 = vsel %vm368, %v2453, 0
    %2462 = vmatprep.subr.mxu0 0.0
    %2463 = vmatpush1.xpose.msra.mxu0 0.0
    %2464 = vmatprep.subr.mxu0 0.0
    %2465 = vmatpush1.xpose.msra.mxu0 0.0
    %2466 = vmatprep.subr.mxu0 0.0
    %2467 = vmatpush1.xpose.msra.mxu0 0.0
    %2468 = vmatprep.subr.mxu0 0.0
    %2469 = vmatpush1.xpose.msra.mxu0 0.0
    %2470 = vmatprep.subr.mxu0 0.0
    %2471 = vmatpush1.xpose.msra.mxu0 0.0
    %2472 = vmatprep.subr.mxu0 0.0
    %2473 = vmatpush1.xpose.msra.mxu0 0.0
    %2474 = vmatprep.subr.mxu0 0.0
    %2475 = vmatpush1.xpose.msra.mxu0 0.0
    %2476 = vmatprep.subr.mxu0 0.0
    %2477 = vmatpush1.xpose.msra.mxu0 0.0
    %2478 = vmatprep.subr.mxu0 0.0
    %2479 = vmatpush1.xpose.msra.mxu0 0.0
    %2480 = vmatprep.subr.mxu0 0.0
    %2481 = vmatpush1.xpose.msra.mxu0 0.0
    %2482 = vmatprep.subr.mxu0 0.0
    %2483 = vmatpush1.xpose.msra.mxu0 0.0
    %2484 = vmatprep.subr.mxu0 0.0
    %2485 = vmatpush1.xpose.msra.mxu0 0.0
    %2486 = vmatprep.subr.mxu0 0.0
    %2487 = vmatpush1.xpose.msra.mxu0 0.0
    %2488 = vmatprep.subr.mxu0 0.0
    %2489 = vmatpush1.xpose.msra.mxu0 0.0
    %2490 = vmatprep.subr.mxu0 0.0
    %2491 = vmatpush1.xpose.msra.mxu0 %v2460
    %2492 = vmatprep.subr.mxu0 0.0
    %2493 = vmatpush1.xpose.msra.mxu0 %v2458
    %2494 = vmatprep.subr.mxu0 0.0
    %2495 = vmatpush2.xpose.msra.mxu0 0.0
    %2496 = vmatprep.subr.mxu0 0.0
    %2497 = vmatpush2.xpose.msra.mxu0 0.0
    %2498 = vmatprep.subr.mxu0 0.0
    %2499 = vmatpush2.xpose.msra.mxu0 0.0
    %2500 = vmatprep.subr.mxu0 0.0
    %2501 = vmatpush2.xpose.msra.mxu0 0.0
    %2502 = vmatprep.subr.mxu0 0.0
    %2503 = vmatpush2.xpose.msra.mxu0 0.0
    %2504 = vmatprep.subr.mxu0 0.0
    %2505 = vmatpush2.xpose.msra.mxu0 0.0
    %2506 = vmatprep.subr.mxu0 0.0
    %2507 = vmatpush2.xpose.msra.mxu0 0.0
    %2508 = vmatprep.subr.mxu0 0.0
    %2509 = vmatpush2.xpose.msra.mxu0 0.0
    %2510 = vmatprep.subr.mxu0 0.0
    %2511 = vmatpush2.xpose.msra.mxu0 0.0
    %2512 = vmatprep.subr.mxu0 0.0
    %2513 = vmatpush2.xpose.msra.mxu0 0.0
    %2514 = vmatprep.subr.mxu0 0.0
    %2515 = vmatpush2.xpose.msra.mxu0 0.0
    %2516 = vmatprep.subr.mxu0 0.0
    %2517 = vmatpush2.xpose.msra.mxu0 0.0
    %2518 = vmatprep.subr.mxu0 0.0
    %2519 = vmatpush2.xpose.msra.mxu0 0.0
    %2520 = vmatprep.subr.mxu0 0.0
    %2521 = vmatpush2.xpose.msra.mxu0 0.0
    %2522 = vmatprep.subr.mxu0 0.0
    %2523 = vmatpush2.xpose.msra.mxu0 0.0
    %2524 = vmatprep.subr.mxu0 0.0
    %2525 = vmatpush2.xpose.msra.mxu0 0.0
    %2526 = vmatprep.mubr.f32.mxu0 0.0
    %2527 = vmatmul.mubr.f32.gmra.mxu0 %v2454
    %v2528 = vpop.f32.mrf.mxu0
    %v2529 = vadd.f32 0.0, %v2528
    %v2530 = vpop.f32.mrf.mxu0
    %2531 = vmatprep.mubr.f32.mxu0 0.0
    %2532 = vmatmul.mubr.f32.gmra.mxu0 %v2456
    %v2533 = vpop.f32.mrf.mxu0
    %v2534 = vadd.f32 0.0, %v2533
    %v2535 = vpop.f32.mrf.mxu0
    %2536 = vdwg.mxu0
    %v2537 = vmul.f32 %v2529, 0.15811388
    %v2538 = vmul.f32 %v2534, 0.15811388
    %v2539 = vld [vmem:[%s4] sm:$0xff]
    %v2540 = vld [vmem:[%s4 + $0x8] sm:$0xff]
    %v2541 = vadd.f32 %v2537, %v2539
    %v2542 = vadd.f32 %v2538, %v2540
    %v2543 = vsel %vm274, %v2541, -inf
    %2544 = vmax.xlane.f32.xlu0 %v2543
    %v2545 = vpop.xlane.xlu0 %2544
    %v2546 = vsel %vm274, %v2542, -inf
    %2547 = vmax.xlane.f32.xlu0 %v2546
    %v2548 = vpop.xlane.xlu0 %2547
    %v2549 = vsub.f32 %v2541, %v2545
    %v2550 = vsub.f32 %v2542, %v2548
    %v2551 = vmul.f32 %v2549, 1.442695
    %v2552 = vpow.pop %v2551
    %v2553 = vmul.f32 %v2550, 1.442695
    %v2554 = vpow.pop %v2553
    %v2555 = vsel %vm274, %v2552, 0.0
    %2556 = vadd.xlane.f32.xlu0 %v2555
    %v2557 = vpop.xlane.xlu0 %2556
    %v2558 = vsel %vm274, %v2554, 0.0
    %2559 = vadd.xlane.f32.xlu0 %v2558
    %v2560 = vpop.xlane.xlu0 %2559
    %v2561 = vrcp.pop %v2557
    %v2562 = vrcp.pop %v2560
    %v2563 = vmul.f32 %v2552, %v2561
    %v2564 = vmul.f32 %v2554, %v2562
    %v2565 = vld [vmem:[%s5] sm:$0x3]
    %v2567 = vsel %vm274, %v2565, 0
    %2569 = vmatprep.subr.mxu0 0.0
    %2570 = vmatpush1.msra.mxu0 0.0
    %2571 = vmatprep.subr.mxu0 0.0
    %2572 = vmatpush1.msra.mxu0 0.0
    %2573 = vmatprep.subr.mxu0 0.0
    %2574 = vmatpush1.msra.mxu0 0.0
    %2575 = vmatprep.subr.mxu0 0.0
    %2576 = vmatpush1.msra.mxu0 0.0
    %2577 = vmatprep.subr.mxu0 0.0
    %2578 = vmatpush1.msra.mxu0 0.0
    %2579 = vmatprep.subr.mxu0 0.0
    %2580 = vmatpush1.msra.mxu0 0.0
    %2581 = vmatprep.subr.mxu0 0.0
    %2582 = vmatpush1.msra.mxu0 0.0
    %2583 = vmatprep.subr.mxu0 0.0
    %2584 = vmatpush1.msra.mxu0 0.0
    %2585 = vmatprep.subr.mxu0 0.0
    %2586 = vmatpush1.msra.mxu0 0.0
    %2587 = vmatprep.subr.mxu0 0.0
    %2588 = vmatpush1.msra.mxu0 0.0
    %2589 = vmatprep.subr.mxu0 0.0
    %2590 = vmatpush1.msra.mxu0 0.0
    %2591 = vmatprep.subr.mxu0 0.0
    %2592 = vmatpush1.msra.mxu0 0.0
    %2593 = vmatprep.subr.mxu0 0.0
    %2594 = vmatpush1.msra.mxu0 0.0
    %2595 = vmatprep.subr.mxu0 0.0
    %2596 = vmatpush1.msra.mxu0 0.0
    %2597 = vmatprep.subr.mxu0 0.0
    %2598 = vmatpush1.msra.mxu0 %v2564
    %2599 = vmatprep.subr.mxu0 0.0
    %2600 = vmatpush1.msra.mxu0 %v2563
    %2601 = vmatprep.subr.mxu0 0.0
    %2602 = vmatpush2.msra.mxu0 0.0
    %2603 = vmatprep.subr.mxu0 0.0
    %2604 = vmatpush2.msra.mxu0 0.0
    %2605 = vmatprep.subr.mxu0 0.0
    %2606 = vmatpush2.msra.mxu0 0.0
    %2607 = vmatprep.subr.mxu0 0.0
    %2608 = vmatpush2.msra.mxu0 0.0
    %2609 = vmatprep.subr.mxu0 0.0
    %2610 = vmatpush2.msra.mxu0 0.0
    %2611 = vmatprep.subr.mxu0 0.0
    %2612 = vmatpush2.msra.mxu0 0.0
    %2613 = vmatprep.subr.mxu0 0.0
    %2614 = vmatpush2.msra.mxu0 0.0
    %2615 = vmatprep.subr.mxu0 0.0
    %2616 = vmatpush2.msra.mxu0 0.0
    %2617 = vmatprep.subr.mxu0 0.0
    %2618 = vmatpush2.msra.mxu0 0.0
    %2619 = vmatprep.subr.mxu0 0.0
    %2620 = vmatpush2.msra.mxu0 0.0
    %2621 = vmatprep.subr.mxu0 0.0
    %2622 = vmatpush2.msra.mxu0 0.0
    %2623 = vmatprep.subr.mxu0 0.0
    %2624 = vmatpush2.msra.mxu0 0.0
    %2625 = vmatprep.subr.mxu0 0.0
    %2626 = vmatpush2.msra.mxu0 0.0
    %2627 = vmatprep.subr.mxu0 0.0
    %2628 = vmatpush2.msra.mxu0 0.0
    %2629 = vmatprep.subr.mxu0 0.0
    %2630 = vmatpush2.msra.mxu0 0.0
    %2631 = vmatprep.subr.mxu0 0.0
    %2632 = vmatpush2.msra.mxu0 0.0
    %2633 = vmatprep.mubr.f32.mxu0 0.0
    %2634 = vmatmul.mubr.f32.gmra.mxu0 %v2567
    %v2635 = vpop.f32.mrf.mxu0
    %v2636 = vadd.f32 0.0, %v2635
    %v2637 = vpop.f32.mrf.mxu0
    %2638 = vdwg.mxu0
    %2639 = vrot.lane.b32.xlu0 %v2440, 48
    %v2640 = vpop.permute.xlu0 %2639
    %2641 = vrot.lane.b32.xlu0 %v2445, 48
    %v2642 = vpop.permute.xlu0 %2641
    %v2646 = vsel %vm274, %v2636, 0
    %2648 = vmatprep.subr.mxu0 0.0
    %2649 = vmatpush1.msra.mxu0 0.0
    %2650 = vmatprep.subr.mxu0 0.0
    %2651 = vmatpush1.msra.mxu0 0.0
    %2652 = vmatprep.subr.mxu0 0.0
    %2653 = vmatpush1.msra.mxu0 0.0
    %2654 = vmatprep.subr.mxu0 0.0
    %2655 = vmatpush1.msra.mxu0 0.0
    %2656 = vmatprep.subr.mxu0 0.0
    %2657 = vmatpush1.msra.mxu0 0.0
    %2658 = vmatprep.subr.mxu0 0.0
    %2659 = vmatpush1.msra.mxu0 0.0
    %2660 = vmatprep.subr.mxu0 0.0
    %2661 = vmatpush1.msra.mxu0 0.0
    %2662 = vmatprep.subr.mxu0 0.0
    %2663 = vmatpush1.msra.mxu0 0.0
    %2664 = vmatprep.subr.mxu0 0.0
    %2665 = vmatpush1.msra.mxu0 0.0
    %2666 = vmatprep.subr.mxu0 0.0
    %2667 = vmatpush1.msra.mxu0 0.0
    %2668 = vmatprep.subr.mxu0 0.0
    %2669 = vmatpush1.msra.mxu0 0.0
    %2670 = vmatprep.subr.mxu0 0.0
    %2671 = vmatpush1.msra.mxu0 0.0
    %2672 = vmatprep.subr.mxu0 0.0
    %2673 = vmatpush1.msra.mxu0 0.0
    %2674 = vmatprep.subr.mxu0 0.0
    %2675 = vmatpush1.msra.mxu0 0.0
    %2676 = vmatprep.subr.mxu0 0.0
    %2677 = vmatpush1.msra.mxu0 %v2642
    %2678 = vmatprep.subr.mxu0 0.0
    %2679 = vmatpush1.msra.mxu0 %v2640
    %2680 = vmatprep.subr.mxu0 0.0
    %2681 = vmatpush2.msra.mxu0 0.0
    %2682 = vmatprep.subr.mxu0 0.0
    %2683 = vmatpush2.msra.mxu0 0.0
    %2684 = vmatprep.subr.mxu0 0.0
    %2685 = vmatpush2.msra.mxu0 0.0
    %2686 = vmatprep.subr.mxu0 0.0
    %2687 = vmatpush2.msra.mxu0 0.0
    %2688 = vmatprep.subr.mxu0 0.0
    %2689 = vmatpush2.msra.mxu0 0.0
    %2690 = vmatprep.subr.mxu0 0.0
    %2691 = vmatpush2.msra.mxu0 0.0
    %2692 = vmatprep.subr.mxu0 0.0
    %2693 = vmatpush2.msra.mxu0 0.0
    %2694 = vmatprep.subr.mxu0 0.0
    %2695 = vmatpush2.msra.mxu0 0.0
    %2696 = vmatprep.subr.mxu0 0.0
    %2697 = vmatpush2.msra.mxu0 0.0
    %2698 = vmatprep.subr.mxu0 0.0
    %2699 = vmatpush2.msra.mxu0 0.0
    %2700 = vmatprep.subr.mxu0 0.0
    %2701 = vmatpush2.msra.mxu0 0.0
    %2702 = vmatprep.subr.mxu0 0.0
    %2703 = vmatpush2.msra.mxu0 0.0
    %2704 = vmatprep.subr.mxu0 0.0
    %2705 = vmatpush2.msra.mxu0 0.0
    %2706 = vmatprep.subr.mxu0 0.0
    %2707 = vmatpush2.msra.mxu0 0.0
    %2708 = vmatprep.subr.mxu0 0.0
    %2709 = vmatpush2.msra.mxu0 0.0
    %2710 = vmatprep.subr.mxu0 0.0
    %2711 = vmatpush2.msra.mxu0 0.0
    %2712 = vmatprep.mubr.f32.mxu0 0.0
    %2713 = vmatmul.mubr.f32.gmra.mxu0 %v2646
    %v2714 = vpop.f32.mrf.mxu0
    %v2715 = vadd.f32 0.0, %v2714
    %v2716 = vpop.f32.mrf.mxu0
    %2717 = vdwg.mxu0
    %v2718 = vld [vmem:[#allocation13] sm:$0xff]
    %v2719 = vld [vmem:[#allocation13 + $0x8] sm:$0xff]
    %v2720 = vld [vmem:[#allocation13 + $0x10] sm:$0xff]
    %v2721 = vld [vmem:[#allocation13 + $0x18] sm:$0xff]
    %v2722 = vld [vmem:[#allocation13 + $0x20] sm:$0xff]
    %v2723 = vld [vmem:[%s1] sm:$0x3]
    %v2724 = vld [vmem:[#allocation15] sm:$0xf]
    %v2726 = vsel %vm188, %v2723, 0
    %v2729 = vsel %vm195, %v2724, 0
    %2731 = vmatprep.subr.mxu0 0.0
    %2732 = vmatpush1.msra.mxu0 0.0
    %2733 = vmatprep.subr.mxu0 0.0
    %2734 = vmatpush1.msra.mxu0 0.0
    %2735 = vmatprep.subr.mxu0 0.0
    %2736 = vmatpush1.msra.mxu0 0.0
    %2737 = vmatprep.subr.mxu0 0.0
    %2738 = vmatpush1.msra.mxu0 0.0
    %2739 = vmatprep.subr.mxu0 0.0
    %2740 = vmatpush1.msra.mxu0 0.0
    %2741 = vmatprep.subr.mxu0 0.0
    %2742 = vmatpush1.msra.mxu0 0.0
    %2743 = vmatprep.subr.mxu0 0.0
    %2744 = vmatpush1.msra.mxu0 0.0
    %2745 = vmatprep.subr.mxu0 0.0
    %2746 = vmatpush1.msra.mxu0 0.0
    %2747 = vmatprep.subr.mxu0 0.0
    %2748 = vmatpush1.msra.mxu0 0.0
    %2749 = vmatprep.subr.mxu0 0.0
    %2750 = vmatpush1.msra.mxu0 0.0
    %2751 = vmatprep.subr.mxu0 0.0
    %2752 = vmatpush1.msra.mxu0 0.0
    %2753 = vmatprep.subr.mxu0 0.0
    %2754 = vmatpush1.msra.mxu0 0.0
    %2755 = vmatprep.subr.mxu0 0.0
    %2756 = vmatpush1.msra.mxu0 0.0
    %2757 = vmatprep.subr.mxu0 0.0
    %2758 = vmatpush1.msra.mxu0 0.0
    %2759 = vmatprep.subr.mxu0 0.0
    %2760 = vmatpush1.msra.mxu0 0.0
    %2761 = vmatprep.subr.mxu0 0.0
    %2762 = vmatpush1.msra.mxu0 %v2729
    %2763 = vmatprep.subr.mxu0 0.0
    %2764 = vmatpush2.msra.mxu0 0.0
    %2765 = vmatprep.subr.mxu0 0.0
    %2766 = vmatpush2.msra.mxu0 0.0
    %2767 = vmatprep.subr.mxu0 0.0
    %2768 = vmatpush2.msra.mxu0 0.0
    %2769 = vmatprep.subr.mxu0 0.0
    %2770 = vmatpush2.msra.mxu0 0.0
    %2771 = vmatprep.subr.mxu0 0.0
    %2772 = vmatpush2.msra.mxu0 0.0
    %2773 = vmatprep.subr.mxu0 0.0
    %2774 = vmatpush2.msra.mxu0 0.0
    %2775 = vmatprep.subr.mxu0 0.0
    %2776 = vmatpush2.msra.mxu0 0.0
    %2777 = vmatprep.subr.mxu0 0.0
    %2778 = vmatpush2.msra.mxu0 0.0
    %2779 = vmatprep.subr.mxu0 0.0
    %2780 = vmatpush2.msra.mxu0 0.0
    %2781 = vmatprep.subr.mxu0 0.0
    %2782 = vmatpush2.msra.mxu0 0.0
    %2783 = vmatprep.subr.mxu0 0.0
    %2784 = vmatpush2.msra.mxu0 0.0
    %2785 = vmatprep.subr.mxu0 0.0
    %2786 = vmatpush2.msra.mxu0 0.0
    %2787 = vmatprep.subr.mxu0 0.0
    %2788 = vmatpush2.msra.mxu0 0.0
    %2789 = vmatprep.subr.mxu0 0.0
    %2790 = vmatpush2.msra.mxu0 0.0
    %2791 = vmatprep.subr.mxu0 0.0
    %2792 = vmatpush2.msra.mxu0 0.0
    %2793 = vmatprep.subr.mxu0 0.0
    %2794 = vmatpush2.msra.mxu0 0.0
    %2795 = vmatprep.mubr.f32.mxu0 0.0
    %2796 = vmatmul.mubr.f32.gmra.mxu0 %v2726
    %v2797 = vpop.f32.mrf.mxu0
    %v2798 = vadd.f32 0.0, %v2797
    %v2799 = vpop.f32.mrf.mxu0
    %2800 = vdwg.mxu0
    %v2802 = vsel %vm368, %v2715, 0
    %2804 = vmatprep.subr.mxu0 0.0
    %2805 = vmatpush1.msra.mxu0 0.0
    %2806 = vmatprep.subr.mxu0 0.0
    %2807 = vmatpush1.msra.mxu0 0.0
    %2808 = vmatprep.subr.mxu0 0.0
    %2809 = vmatpush1.msra.mxu0 0.0
    %2810 = vmatprep.subr.mxu0 0.0
    %2811 = vmatpush1.msra.mxu0 0.0
    %2812 = vmatprep.subr.mxu0 0.0
    %2813 = vmatpush1.msra.mxu0 0.0
    %2814 = vmatprep.subr.mxu0 0.0
    %2815 = vmatpush1.msra.mxu0 0.0
    %2816 = vmatprep.subr.mxu0 0.0
    %2817 = vmatpush1.msra.mxu0 0.0
    %2818 = vmatprep.subr.mxu0 0.0
    %2819 = vmatpush1.msra.mxu0 0.0
    %2820 = vmatprep.subr.mxu0 0.0
    %2821 = vmatpush1.msra.mxu0 0.0
    %2822 = vmatprep.subr.mxu0 0.0
    %2823 = vmatpush1.msra.mxu0 0.0
    %2824 = vmatprep.subr.mxu0 0.0
    %2825 = vmatpush1.msra.mxu0 0.0
    %2826 = vmatprep.subr.mxu0 0.0
    %2827 = vmatpush1.msra.mxu0 %v2722
    %2828 = vmatprep.subr.mxu0 0.0
    %2829 = vmatpush1.msra.mxu0 %v2721
    %2830 = vmatprep.subr.mxu0 0.0
    %2831 = vmatpush1.msra.mxu0 %v2720
    %2832 = vmatprep.subr.mxu0 0.0
    %2833 = vmatpush1.msra.mxu0 %v2719
    %2834 = vmatprep.subr.mxu0 0.0
    %2835 = vmatpush1.msra.mxu0 %v2718
    %2836 = vmatprep.subr.mxu0 0.0
    %2837 = vmatpush2.msra.mxu0 0.0
    %2838 = vmatprep.subr.mxu0 0.0
    %2839 = vmatpush2.msra.mxu0 0.0
    %2840 = vmatprep.subr.mxu0 0.0
    %2841 = vmatpush2.msra.mxu0 0.0
    %2842 = vmatprep.subr.mxu0 0.0
    %2843 = vmatpush2.msra.mxu0 0.0
    %2844 = vmatprep.subr.mxu0 0.0
    %2845 = vmatpush2.msra.mxu0 0.0
    %2846 = vmatprep.subr.mxu0 0.0
    %2847 = vmatpush2.msra.mxu0 0.0
    %2848 = vmatprep.subr.mxu0 0.0
    %2849 = vmatpush2.msra.mxu0 0.0
    %2850 = vmatprep.subr.mxu0 0.0
    %2851 = vmatpush2.msra.mxu0 0.0
    %2852 = vmatprep.subr.mxu0 0.0
    %2853 = vmatpush2.msra.mxu0 0.0
    %2854 = vmatprep.subr.mxu0 0.0
    %2855 = vmatpush2.msra.mxu0 0.0
    %2856 = vmatprep.subr.mxu0 0.0
    %2857 = vmatpush2.msra.mxu0 0.0
    %2858 = vmatprep.subr.mxu0 0.0
    %2859 = vmatpush2.msra.mxu0 0.0
    %2860 = vmatprep.subr.mxu0 0.0
    %2861 = vmatpush2.msra.mxu0 0.0
    %2862 = vmatprep.subr.mxu0 0.0
    %2863 = vmatpush2.msra.mxu0 0.0
    %2864 = vmatprep.subr.mxu0 0.0
    %2865 = vmatpush2.msra.mxu0 0.0
    %2866 = vmatprep.subr.mxu0 0.0
    %2867 = vmatpush2.msra.mxu0 0.0
    %2868 = vmatprep.mubr.f32.mxu0 0.0
    %2869 = vmatmul.mubr.f32.gmra.mxu0 %v2802
    %v2870 = vpop.f32.mrf.mxu0
    %v2871 = vadd.f32 %v2798, %v2870
    %v2872 = vpop.f32.mrf.mxu0
    %2873 = vdwg.mxu0
    %v2874 = vld [vmem:[%s18] sm:$0x1]
    %v2876 = vlaneseq
    %v2877 = vshrl.u32 %v2876, 7
    %v2878 = vsub.s32 0, %v2877
    %v2879 = vrot.slane %v2874, %v2878
    %v2881 = vadd.f32 %v2871, %v2879
    %v2882 = vtanh.pop %v2881
    %v2883 = vld [vmem:[%s19] sm:$0xff]
    %v2884 = vld [vmem:[%s19 + $0x8] sm:$0xff]
    %v2885 = vld [vmem:[%s19 + $0x10] sm:$0xff]
    %v2886 = vld [vmem:[%s19 + $0x18] sm:$0xff]
    %v2887 = vld [vmem:[%s19 + $0x20] sm:$0xff]
    %v2888 = vld [vmem:[%s19 + $0x28] sm:$0xff]
    %v2889 = vld [vmem:[%s19 + $0x30] sm:$0x3]
    %v2890 = vld [vmem:[%s20] sm:$0x1]
    %v2892 = vlaneseq
    %v2893 = vshrl.u32 %v2892, 7
    %v2894 = vsub.s32 0, %v2893
    %v2895 = vrot.slane %v2890, %v2894
    %vm2897 = vcmask 408576
    %v2899 = vsel %vm2897, %v2882, 0
    %vm2901 = vcmask 1041408
    %v2903 = vsel %vm2901, %v2889, 0
    %2905 = vmatprep.subr.mxu0 0.0
    %2906 = vmatpush1.msra.mxu0 0.0
    %2907 = vmatprep.subr.mxu0 0.0
    %2908 = vmatpush1.msra.mxu0 0.0
    %2909 = vmatprep.subr.mxu0 0.0
    %2910 = vmatpush1.msra.mxu0 0.0
    %2911 = vmatprep.subr.mxu0 0.0
    %2912 = vmatpush1.msra.mxu0 0.0
    %2913 = vmatprep.subr.mxu0 0.0
    %2914 = vmatpush1.msra.mxu0 0.0
    %2915 = vmatprep.subr.mxu0 0.0
    %2916 = vmatpush1.msra.mxu0 0.0
    %2917 = vmatprep.subr.mxu0 0.0
    %2918 = vmatpush1.msra.mxu0 0.0
    %2919 = vmatprep.subr.mxu0 0.0
    %2920 = vmatpush1.msra.mxu0 0.0
    %2921 = vmatprep.subr.mxu0 0.0
    %2922 = vmatpush1.msra.mxu0 0.0
    %2923 = vmatprep.subr.mxu0 0.0
    %2924 = vmatpush1.msra.mxu0 %v2903
    %2925 = vmatprep.subr.mxu0 0.0
    %2926 = vmatpush1.msra.mxu0 %v2888
    %2927 = vmatprep.subr.mxu0 0.0
    %2928 = vmatpush1.msra.mxu0 %v2887
    %2929 = vmatprep.subr.mxu0 0.0
    %2930 = vmatpush1.msra.mxu0 %v2886
    %2931 = vmatprep.subr.mxu0 0.0
    %2932 = vmatpush1.msra.mxu0 %v2885
    %2933 = vmatprep.subr.mxu0 0.0
    %2934 = vmatpush1.msra.mxu0 %v2884
    %2935 = vmatprep.subr.mxu0 0.0
    %2936 = vmatpush1.msra.mxu0 %v2883
    %2937 = vmatprep.subr.mxu0 0.0
    %2938 = vmatpush2.msra.mxu0 0.0
    %2939 = vmatprep.subr.mxu0 0.0
    %2940 = vmatpush2.msra.mxu0 0.0
    %2941 = vmatprep.subr.mxu0 0.0
    %2942 = vmatpush2.msra.mxu0 0.0
    %2943 = vmatprep.subr.mxu0 0.0
    %2944 = vmatpush2.msra.mxu0 0.0
    %2945 = vmatprep.subr.mxu0 0.0
    %2946 = vmatpush2.msra.mxu0 0.0
    %2947 = vmatprep.subr.mxu0 0.0
    %2948 = vmatpush2.msra.mxu0 0.0
    %2949 = vmatprep.subr.mxu0 0.0
    %2950 = vmatpush2.msra.mxu0 0.0
    %2951 = vmatprep.subr.mxu0 0.0
    %2952 = vmatpush2.msra.mxu0 0.0
    %2953 = vmatprep.subr.mxu0 0.0
    %2954 = vmatpush2.msra.mxu0 0.0
    %2955 = vmatprep.subr.mxu0 0.0
    %2956 = vmatpush2.msra.mxu0 0.0
    %2957 = vmatprep.subr.mxu0 0.0
    %2958 = vmatpush2.msra.mxu0 0.0
    %2959 = vmatprep.subr.mxu0 0.0
    %2960 = vmatpush2.msra.mxu0 0.0
    %2961 = vmatprep.subr.mxu0 0.0
    %2962 = vmatpush2.msra.mxu0 0.0
    %2963 = vmatprep.subr.mxu0 0.0
    %2964 = vmatpush2.msra.mxu0 0.0
    %2965 = vmatprep.subr.mxu0 0.0
    %2966 = vmatpush2.msra.mxu0 0.0
    %2967 = vmatprep.subr.mxu0 0.0
    %2968 = vmatpush2.msra.mxu0 0.0
    %2969 = vmatprep.mubr.f32.mxu0 0.0
    %2970 = vmatmul.mubr.f32.gmra.mxu0 %v2899
    %v2971 = vpop.f32.mrf.mxu0
    %v2972 = vadd.f32 %v2895, %v2971
    %v2973 = vpop.f32.mrf.mxu0
    %2974 = vdwg.mxu0
    %v2975 = vmax.f32 %v2972, 0.0
    %v2976 = vld [vmem:[%s21] sm:$0xff]
    %v2977 = vld [vmem:[%s21 + $0x8] sm:$0xff]
    %v2978 = vld [vmem:[%s21 + $0x10] sm:$0xf]
    %v2979 = vld [vmem:[%s22] sm:$0x1]
    %v2981 = vlaneseq
    %v2982 = vshrl.u32 %v2981, 7
    %v2983 = vsub.s32 0, %v2982
    %v2984 = vrot.slane %v2979, %v2983
    %vm2986 = vcmask 162816
    %v2988 = vsel %vm2986, %v2975, 0
    %v2991 = vsel %vm195, %v2978, 0
    %2993 = vmatprep.subr.mxu0 0.0
    %2994 = vmatpush1.msra.mxu0 0.0
    %2995 = vmatprep.subr.mxu0 0.0
    %2996 = vmatpush1.msra.mxu0 0.0
    %2997 = vmatprep.subr.mxu0 0.0
    %2998 = vmatpush1.msra.mxu0 0.0
    %2999 = vmatprep.subr.mxu0 0.0
    %3000 = vmatpush1.msra.mxu0 0.0
    %3001 = vmatprep.subr.mxu0 0.0
    %3002 = vmatpush1.msra.mxu0 0.0
    %3003 = vmatprep.subr.mxu0 0.0
    %3004 = vmatpush1.msra.mxu0 0.0
    %3005 = vmatprep.subr.mxu0 0.0
    %3006 = vmatpush1.msra.mxu0 0.0
    %3007 = vmatprep.subr.mxu0 0.0
    %3008 = vmatpush1.msra.mxu0 0.0
    %3009 = vmatprep.subr.mxu0 0.0
    %3010 = vmatpush1.msra.mxu0 0.0
    %3011 = vmatprep.subr.mxu0 0.0
    %3012 = vmatpush1.msra.mxu0 0.0
    %3013 = vmatprep.subr.mxu0 0.0
    %3014 = vmatpush1.msra.mxu0 0.0
    %3015 = vmatprep.subr.mxu0 0.0
    %3016 = vmatpush1.msra.mxu0 0.0
    %3017 = vmatprep.subr.mxu0 0.0
    %3018 = vmatpush1.msra.mxu0 0.0
    %3019 = vmatprep.subr.mxu0 0.0
    %3020 = vmatpush1.msra.mxu0 %v2991
    %3021 = vmatprep.subr.mxu0 0.0
    %3022 = vmatpush1.msra.mxu0 %v2977
    %3023 = vmatprep.subr.mxu0 0.0
    %3024 = vmatpush1.msra.mxu0 %v2976
    %3025 = vmatprep.subr.mxu0 0.0
    %3026 = vmatpush2.msra.mxu0 0.0
    %3027 = vmatprep.subr.mxu0 0.0
    %3028 = vmatpush2.msra.mxu0 0.0
    %3029 = vmatprep.subr.mxu0 0.0
    %3030 = vmatpush2.msra.mxu0 0.0
    %3031 = vmatprep.subr.mxu0 0.0
    %3032 = vmatpush2.msra.mxu0 0.0
    %3033 = vmatprep.subr.mxu0 0.0
    %3034 = vmatpush2.msra.mxu0 0.0
    %3035 = vmatprep.subr.mxu0 0.0
    %3036 = vmatpush2.msra.mxu0 0.0
    %3037 = vmatprep.subr.mxu0 0.0
    %3038 = vmatpush2.msra.mxu0 0.0
    %3039 = vmatprep.subr.mxu0 0.0
    %3040 = vmatpush2.msra.mxu0 0.0
    %3041 = vmatprep.subr.mxu0 0.0
    %3042 = vmatpush2.msra.mxu0 0.0
    %3043 = vmatprep.subr.mxu0 0.0
    %3044 = vmatpush2.msra.mxu0 0.0
    %3045 = vmatprep.subr.mxu0 0.0
    %3046 = vmatpush2.msra.mxu0 0.0
    %3047 = vmatprep.subr.mxu0 0.0
    %3048 = vmatpush2.msra.mxu0 0.0
    %3049 = vmatprep.subr.mxu0 0.0
    %3050 = vmatpush2.msra.mxu0 0.0
    %3051 = vmatprep.subr.mxu0 0.0
    %3052 = vmatpush2.msra.mxu0 0.0
    %3053 = vmatprep.subr.mxu0 0.0
    %3054 = vmatpush2.msra.mxu0 0.0
    %3055 = vmatprep.subr.mxu0 0.0
    %3056 = vmatpush2.msra.mxu0 0.0
    %3057 = vmatprep.mubr.f32.mxu0 0.0
    %3058 = vmatmul.mubr.f32.gmra.mxu0 %v2988
    %v3059 = vpop.f32.mrf.mxu0
    %v3060 = vadd.f32 %v2984, %v3059
    %v3061 = vpop.f32.mrf.mxu0
    %3062 = vdwg.mxu0
    %v3063 = vld [vmem:[%s23] sm:$0x1]
    %v3064 = vld [vmem:[%s24] sm:$0x1]
    %v3065 = vsub.f32 %v3064, %v3063
    %v3066 = vxor.u32 %v3060, 2147483648
    %v3067 = vmul.f32 %v3066, 1.442695
    %v3068 = vpow.pop %v3067
    %v3069 = vadd.f32 %v3068, 1.0
    %v3070 = vrcp.pop %v3069
    %v3071 = vmul.f32 1.0, %v3070
    %v3073 = vlaneseq
    %v3074 = vshrl.u32 %v3073, 7
    %v3075 = vsub.s32 0, %v3074
    %v3076 = vrot.slane %v3065, %v3075
    %v3078 = vmul.f32 %v3076, %v3071
    %v3080 = vlaneseq
    %v3081 = vshrl.u32 %v3080, 7
    %v3082 = vsub.s32 0, %v3081
    %v3083 = vrot.slane %v3063, %v3082
    %v3085 = vadd.f32 %v3083, %v3078
    %vm3086 = vcmask 17408
    %3087 = vst.msk [vmem:[#allocation16] sm:$0x3] %vm3086, %v3085
    // Predicated region
    $region130: #{param_model_forward.1} parent=1 // pred_check
      _
    $region131: #{param_model_forward.1} parent=1 // pred_check_branch
      %3089 = sbr.rel (0) target = $region133
    $region132: #{param_model_forward.1} parent=1 // pred_region
      %s3091 = ssub.s32 32, 32
      %3092 = vsyncadd [#allocation6], %s3091
      %s3094 = sshll.u32 [#allocation16], 4
      %s3095 = int_to_ptr.vmem [resolvable:$true] %s3094
      %3097 = dma.vmem_to_hbm [thread:$0]  %s3095, 32, %s25, [#allocation6]
    $region133: #{param_model_forward.1} parent=1 // pred_fallthru
      _
    // Predicated region
    $region134: #{param_model_forward.1} parent=1 // pred_check
      _
    $region135: #{param_model_forward.1} parent=1 // pred_check_branch
      %3099 = sbr.rel (0) target = $region137
    $region136: #{param_model_forward.1} parent=1 // pred_region
      %3100 = dma.done [#allocation6], 32
    $region137: #{param_model_forward.1} parent=1 // pred_fallthru
      _
    %3101 = vsyncpa [#allocation5], 1
    %3102 = vsyncpa [#allocation8], 1
    %3103 = vsyncpa [#allocation11], 1
    %3104 = vsyncpa [#allocation14], 1
    %3105 = vsyncpa [#allocation6], 1

</llo_original>
